<compile_context>
chip_gen: v6e
topology: v6e:2x2x1
jax: 0.10.0
libtpu: 0.0.40
codegen_flags: <defaults>
</compile_context>

<pallas_src>
import jax
import jax.numpy as jnp
import numpy as np
from jax import lax
from jax.experimental import pallas as pl
from jax.experimental.pallas import tpu as pltpu

K1_PAD = 128          # conv1 contraction 5*5*3 = 75  -> 128
K2_PAD = 896          # conv2 contraction 5*5*32 = 800 -> 896
FC_K_PAD = 2432       # fc contraction 7*7*48 = 2352 -> 2432
CO_PAD = 128          # all output channels padded to 128 lanes


def _round_up(x, m):
    return (x + m - 1) // m * m


def _pick_tile_m(m, max_tile=1024):
    """Tile for the M axis: multiple of 8, <= max_tile, dividing padded M."""
    if m <= max_tile:
        return _round_up(m, 8)
    t = max_tile - (max_tile % 8)
    while t >= 8:
        if m % t == 0:
            return t
        t -= 8
    return max_tile   # fall back: caller pads M up to a multiple of max_tile


# ----------------------------- Pallas kernels -------------------------------

def _gemm_bias_relu_kernel(x_ref, w_ref, b_ref, o_ref):
    # o = relu(x @ w + b); bf16 operands, f32 accumulation on the MXU.
    acc = jnp.dot(x_ref[...], w_ref[...], preferred_element_type=jnp.float32)
    acc = acc + b_ref[...]
    o_ref[...] = jnp.maximum(acc, 0.0).astype(o_ref.dtype)


def gemm_bias_relu(x, w, b, *, out_dtype=jnp.bfloat16, max_tile=1024):
    m, k = x.shape
    k2, co = w.shape
    assert k == k2 and k % 128 == 0 and co % 128 == 0

    tm = _pick_tile_m(m, max_tile)
    m_pad = _round_up(m, tm)
    if m_pad != m:
        x = jnp.pad(x, ((0, m_pad - m), (0, 0)))

    flops = 2 * m_pad * k * co
    bytes_accessed = (m_pad * k + k * co) * x.dtype.itemsize \
        + m_pad * co * jnp.dtype(out_dtype).itemsize + co * 4

    out = pl.pallas_call(
        _gemm_bias_relu_kernel,
        out_shape=jax.ShapeDtypeStruct((m_pad, co), out_dtype),
        grid=(m_pad // tm,),
        in_specs=[
            pl.BlockSpec((tm, k), lambda i: (i, 0)),      # patch tile (streamed)
            pl.BlockSpec((k, co), lambda i: (0, 0)),      # weights (resident)
            pl.BlockSpec((1, co), lambda i: (0, 0)),      # bias (resident)
        ],
        out_specs=pl.BlockSpec((tm, co), lambda i: (i, 0)),
        compiler_params=pltpu.CompilerParams(
            dimension_semantics=("parallel",),
            vmem_limit_bytes=32 * 1024 * 1024,
        ),
        cost_estimate=pl.CostEstimate(flops=flops, transcendentals=0,
                                      bytes_accessed=bytes_accessed),
    )(x, w, b)
    return out[:m] if m_pad != m else out


def _maxpool2x2_kernel(x_ref, o_ref):
    # x_ref: (1, H/2, 2, W/2, 2*CP) view of the conv GEMM output,
    # o_ref: (1, H/2, W/2, C_real)
    cp = x_ref.shape[-1] // 2
    v = jnp.max(x_ref[...], axis=(0, 2))                    # max over row-phase
    m = jnp.maximum(v[..., :cp], v[..., cp:])                # max over col-phase
    o_ref[0] = m[..., : o_ref.shape[-1]].astype(o_ref.dtype)


def maxpool2x2_of_gemm(h, n, hh, ww, c_real):
    """2x2/2 max-pool applied directly to the (N*H*W, 128) conv-GEMM output."""
    cp = h.shape[-1]
    assert h.shape[0] == n * hh * ww and hh % 2 == 0 and ww % 2 == 0
    xr = h.reshape(n, hh // 2, 2, ww // 2, 2 * cp)           # free reshape
    return pl.pallas_call(
        _maxpool2x2_kernel,
        out_shape=jax.ShapeDtypeStruct((n, hh // 2, ww // 2, c_real), h.dtype),
        grid=(n,),
        in_specs=[pl.BlockSpec((1, hh // 2, 2, ww // 2, 2 * cp),
                               lambda i: (i, 0, 0, 0, 0))],
        out_specs=pl.BlockSpec((1, hh // 2, ww // 2, c_real),
                               lambda i: (i, 0, 0, 0)),
        compiler_params=pltpu.CompilerParams(
            dimension_semantics=("parallel",),
            vmem_limit_bytes=16 * 1024 * 1024,
        ),
    )(xr)


# ------------------------------- JAX glue -----------------------------------

def im2col_same_5x5(x_nhwc, k_pad):
    """5x5 SAME patches in (KH, KW, Cin) column order (no activation transpose)."""
    n, h, w, c = x_nhwc.shape
    xp = jnp.pad(x_nhwc, ((0, 0), (2, 2), (2, 2), (0, 0)))
    cols = jnp.concatenate(
        [xp[:, i:i + h, j:j + w, :] for i in range(5) for j in range(5)], axis=-1)
    patches = cols.reshape(n * h * w, 25 * c)
    if k_pad > 25 * c:
        patches = jnp.pad(patches, ((0, 0), (0, k_pad - 25 * c)))
    return patches


def init_params(z_dim=32):
    keys = jax.random.split(jax.random.PRNGKey(42), 6)
    return {
        "conv1_w": 0.05 * jax.random.normal(keys[0], (32, 3, 5, 5), jnp.float32),
        "conv1_b": 0.01 * jax.random.normal(keys[1], (32,), jnp.float32),
        "conv2_w": 0.05 * jax.random.normal(keys[2], (48, 32, 5, 5), jnp.float32),
        "conv2_b": 0.01 * jax.random.normal(keys[3], (48,), jnp.float32),
        "fc_w":    0.02 * jax.random.normal(keys[4], (z_dim, 7 * 7 * 48), jnp.float32),
        "fc_b":    0.01 * jax.random.normal(keys[5], (z_dim,), jnp.float32),
    }


def prepare_params(p):
    """One-time weight permutation + padding (trace-time / host-side, tiny)."""
    def conv_w(w, k_pad):
        o, i, kh, kw = w.shape
        w2 = jnp.transpose(w, (2, 3, 1, 0)).reshape(kh * kw * i, o)   # (K, O), (KH,KW,Cin) rows
        w2 = jnp.pad(w2, ((0, k_pad - kh * kw * i), (0, CO_PAD - o)))
        return w2.astype(jnp.bfloat16)

    def bias(b):
        return jnp.pad(b, (0, CO_PAD - b.shape[0])).reshape(1, CO_PAD).astype(jnp.float32)

    z, kf = p["fc_w"].shape                                           # (z_dim, 2352)
    # permute fc columns from NCHW (c,h,w) to NHWC (h,w,c) flat order once
    fcw = p["fc_w"].reshape(z, 48, 7, 7).transpose(0, 2, 3, 1).reshape(z, kf).T
    fcw = jnp.pad(fcw, ((0, FC_K_PAD - kf), (0, CO_PAD - z))).astype(jnp.bfloat16)

    return {
        "w1": conv_w(p["conv1_w"], K1_PAD), "b1": bias(p["conv1_b"]),
        "w2": conv_w(p["conv2_w"], K2_PAD), "b2": bias(p["conv2_b"]),
        "wf": fcw,                          "bf": bias(p["fc_b"]),
    }


def shared_encoder_forward(x, pp, z_dim=32):
    """x: (N, C, 28, 28) NCHW (C broadcastable to 3); returns (N, z_dim) f32."""
    n = x.shape[0]
    x = jnp.broadcast_to(x, (n, 3, 28, 28)).astype(jnp.float32)       # x.expand(...)
    x = jnp.transpose(x, (0, 2, 3, 1)).astype(jnp.bfloat16)           # NHWC, bf16

    # conv1: 3 -> 32 (padded to 128 lanes), 5x5 SAME, fused bias+ReLU, then pool
    p1 = im2col_same_5x5(x, K1_PAD)                                   # (n*784, 128)
    h1 = gemm_bias_relu(p1, pp["w1"], pp["b1"])                       # (n*784, 128) bf16
    h1 = maxpool2x2_of_gemm(h1, n, 28, 28, 32)                        # (n,14,14,32)

    # conv2: 32 -> 48 (padded to 128 lanes)
    p2 = im2col_same_5x5(h1, K2_PAD)                                  # (n*196, 896)
    h2 = gemm_bias_relu(p2, pp["w2"], pp["b2"])                       # (n*196, 128) bf16
    h2 = maxpool2x2_of_gemm(h2, n, 14, 14, 48)                        # (n,7,7,48)

    # fc: flatten in NHWC order (fc weight columns were permuted to match)
    flat = h2.reshape(n, 7 * 7 * 48)
    flat = jnp.pad(flat, ((0, 0), (0, FC_K_PAD - 7 * 7 * 48)))
    out = gemm_bias_relu(flat, pp["wf"], pp["bf"], out_dtype=jnp.float32)
    return out[:, :z_dim]


# ----------------------- pure-JAX f32 reference (check) ----------------------

def reference_forward(x, params):
    n = x.shape[0]
    x = jnp.broadcast_to(x, (n, 3, 28, 28)).astype(jnp.float32)
    dn = ("NCHW", "OIHW", "NCHW")
    h = lax.conv_general_dilated(x, params["conv1_w"], (1, 1),
                                 ((2, 2), (2, 2)), dimension_numbers=dn)
    h = jax.nn.relu(h + params["conv1_b"][None, :, None, None])
    h = lax.reduce_window(h, -jnp.inf, lax.max, (1, 1, 2, 2), (1, 1, 2, 2), "VALID")
    h = lax.conv_general_dilated(h, params["conv2_w"], (1, 1),
                                 ((2, 2), (2, 2)), dimension_numbers=dn)
    h = jax.nn.relu(h + params["conv2_b"][None, :, None, None])
    h = lax.reduce_window(h, -jnp.inf, lax.max, (1, 1, 2, 2), (1, 1, 2, 2), "VALID")
    flat = h.reshape(n, -1)
    return jax.nn.relu(flat @ params["fc_w"].T + params["fc_b"])


if __name__ == "__main__":
    N, z_dim = 2, 32
    params = init_params(z_dim)
    prepped = prepare_params(params)
    x = jax.random.normal(jax.random.PRNGKey(0), (N, 1, 28, 28), jnp.float32)

    fwd = jax.jit(lambda xx: shared_encoder_forward(xx, prepped, z_dim))
    out = jax.block_until_ready(fwd(x))
    ref = jax.block_until_ready(reference_forward(x, params))

    assert out.shape == (N, z_dim)
    # bf16 MXU operands with f32 accumulation -> compare at bf16-level tolerance
    np.testing.assert_allclose(np.asarray(out), np.asarray(ref), rtol=2e-2, atol=2e-2)
    print("KERNEL_OK")
</pallas_src>

<mosaic_0001>
module attributes {stable_mosaic.version = 11 : i64} {
  func.func @_gemm_bias_relu_kernel(%arg0: i32, %arg1: memref<784x128xbf16, #tpu.memory_space<vmem>>, %arg2: memref<128x128xbf16, #tpu.memory_space<vmem>>, %arg3: memref<1x128xf32, #tpu.memory_space<vmem>>, %arg4: memref<784x128xbf16, #tpu.memory_space<vmem>>) attributes {dimension_semantics = [#tpu.dimension_semantics<parallel>], iteration_bounds = array<i64: 2>, scalar_prefetch = 0 : i64, scratch_operands = 0 : i64, tpu.core_type = #tpu.core_type<tc>, window_params = [{transform_indices = @transform_0, window_bounds = array<i64: 784, 128>}, {pipeline_mode = #tpu.pipeline_mode<synchronous>, transform_indices = @transform_1, window_bounds = array<i64: 128, 128>}, {pipeline_mode = #tpu.pipeline_mode<synchronous>, transform_indices = @transform_2, window_bounds = array<i64: 1, 128>}, {transform_indices = @transform_3, window_bounds = array<i64: 784, 128>}]} {
    %c0 = arith.constant 0 : index
    %c0_0 = arith.constant 0 : index
    %0 = vector.load %arg1[%c0, %c0_0] : memref<784x128xbf16, #tpu.memory_space<vmem>>, vector<784x128xbf16>
    %c0_1 = arith.constant 0 : index
    %c0_2 = arith.constant 0 : index
    %1 = vector.load %arg2[%c0_1, %c0_2] : memref<128x128xbf16, #tpu.memory_space<vmem>>, vector<128x128xbf16>
    %cst = arith.constant dense<0.000000e+00> : vector<784x128xf32>
    %2 = tpu.matmul %0, %1, %cst {dimension_numbers = #tpu.dot_dimension_numbers<[1], [0], [0], [1], [0, 0, 1, 1], [], []>} : vector<784x128xbf16>, vector<128x128xbf16>, vector<784x128xf32> -> vector<784x128xf32>
    %c0_3 = arith.constant 0 : index
    %c0_4 = arith.constant 0 : index
    %3 = vector.load %arg3[%c0_3, %c0_4] : memref<1x128xf32, #tpu.memory_space<vmem>>, vector<1x128xf32>
    %4 = vector.broadcast %3 : vector<1x128xf32> to vector<784x128xf32>
    %5 = arith.addf %2, %4 : vector<784x128xf32>
    %cst_5 = arith.constant 0.000000e+00 : f32
    %6 = vector.broadcast %cst_5 : f32 to vector<784x128xf32>
    %7 = arith.maximumf %5, %6 : vector<784x128xf32>
    %8 = arith.truncf %7 : vector<784x128xf32> to vector<784x128xbf16>
    %c0_6 = arith.constant 0 : index
    %c0_7 = arith.constant 0 : index
    %9 = vector.load %arg4[%c0_6, %c0_7] : memref<784x128xbf16, #tpu.memory_space<vmem>>, vector<784x128xbf16>
    tpu.vector_store %arg4[%c0_6, %c0_7], %8 {strides = array<i32>} : memref<784x128xbf16, #tpu.memory_space<vmem>>, vector<784x128xbf16>,
    return
  }
  func.func @transform_0(%arg0: i32) -> (i32, i32) {
    %c0_i32 = arith.constant 0 : i32
    %c0_i32_0 = arith.constant 0 : i32
    return %arg0, %c0_i32 : i32, i32
  }
  func.func @transform_1(%arg0: i32) -> (i32, i32) {
    %c0_i32 = arith.constant 0 : i32
    %c0_i32_0 = arith.constant 0 : i32
    %c0_i32_1 = arith.constant 0 : i32
    return %c0_i32, %c0_i32_0 : i32, i32
  }
  func.func @transform_2(%arg0: i32) -> (i32, i32) {
    %c0_i32 = arith.constant 0 : i32
    %c0_i32_0 = arith.constant 0 : i32
    %c0_i32_1 = arith.constant 0 : i32
    return %c0_i32, %c0_i32_0 : i32, i32
  }
  func.func @transform_3(%arg0: i32) -> (i32, i32) {
    %c0_i32 = arith.constant 0 : i32
    %c0_i32_0 = arith.constant 0 : i32
    return %arg0, %c0_i32 : i32, i32
  }
}

module attributes {stable_mosaic.version = 11 : i64} {
  func.func @_maxpool2x2_kernel(%arg0: i32, %arg1: memref<1x14x2x14x256xbf16, #tpu.memory_space<vmem>>, %arg2: memref<1x14x14x32xbf16, #tpu.memory_space<vmem>>) attributes {dimension_semantics = [#tpu.dimension_semantics<parallel>], iteration_bounds = array<i64: 2>, scalar_prefetch = 0 : i64, scratch_operands = 0 : i64, tpu.core_type = #tpu.core_type<tc>, window_params = [{transform_indices = @transform_0, window_bounds = array<i64: 1, 14, 2, 14, 256>}, {transform_indices = @transform_1, window_bounds = array<i64: 1, 14, 14, 32>}]} {
    %c0 = arith.constant 0 : index
    %c0_0 = arith.constant 0 : index
    %c0_1 = arith.constant 0 : index
    %c0_2 = arith.constant 0 : index
    %c0_3 = arith.constant 0 : index
    %0 = vector.load %arg1[%c0, %c0_0, %c0_1, %c0_2, %c0_3] : memref<1x14x2x14x256xbf16, #tpu.memory_space<vmem>>, vector<1x14x2x14x256xbf16>
    %cst = arith.constant dense<0xFF80> : vector<14x14x256xbf16>
    %1 = vector.multi_reduction <maximumf>, %0, %cst [0, 2] : vector<1x14x2x14x256xbf16> to vector<14x14x256xbf16>
    %2 = vector.extract_strided_slice %1 {offsets = [0, 0, 0], sizes = [14, 14, 128], strides = [1, 1, 1]} : vector<14x14x256xbf16> to vector<14x14x128xbf16>
    %3 = vector.extract_strided_slice %1 {offsets = [0, 0, 128], sizes = [14, 14, 128], strides = [1, 1, 1]} : vector<14x14x256xbf16> to vector<14x14x128xbf16>
    %4 = arith.maximumf %2, %3 : vector<14x14x128xbf16>
    %5 = vector.extract_strided_slice %4 {offsets = [0, 0, 0], sizes = [14, 14, 32], strides = [1, 1, 1]} : vector<14x14x128xbf16> to vector<14x14x32xbf16>
    %c0_4 = arith.constant 0 : index
    %c0_5 = arith.constant 0 : index
    %c0_6 = arith.constant 0 : index
    %c0_7 = arith.constant 0 : index
    %6 = vector.load %arg2[%c0_4, %c0_5, %c0_6, %c0_7] : memref<1x14x14x32xbf16, #tpu.memory_space<vmem>>, vector<1x14x14x32xbf16>
    %7 = vector.shape_cast %6 : vector<1x14x14x32xbf16> to vector<14x14x32xbf16>
    %8 = vector.shape_cast %5 : vector<14x14x32xbf16> to vector<1x14x14x32xbf16>
    tpu.vector_store %arg2[%c0_4, %c0_5, %c0_6, %c0_7], %8 {strides = array<i32>} : memref<1x14x14x32xbf16, #tpu.memory_space<vmem>>, vector<1x14x14x32xbf16>,
    return
  }
  func.func @transform_0(%arg0: i32) -> (i32, i32, i32, i32, i32) {
    %c0_i32 = arith.constant 0 : i32
    %c0_i32_0 = arith.constant 0 : i32
    %c0_i32_1 = arith.constant 0 : i32
    %c0_i32_2 = arith.constant 0 : i32
    %c0_i32_3 = arith.constant 0 : i32
    return %arg0, %c0_i32, %c0_i32_0, %c0_i32_1, %c0_i32_2 : i32, i32, i32, i32, i32
  }
  func.func @transform_1(%arg0: i32) -> (i32, i32, i32, i32) {
    %c0_i32 = arith.constant 0 : i32
    %c0_i32_0 = arith.constant 0 : i32
    %c0_i32_1 = arith.constant 0 : i32
    %c0_i32_2 = arith.constant 0 : i32
    return %arg0, %c0_i32, %c0_i32_0, %c0_i32_1 : i32, i32, i32, i32
  }
}

module attributes {stable_mosaic.version = 11 : i64} {
  func.func @_gemm_bias_relu_kernel(%arg0: i32, %arg1: memref<392x896xbf16, #tpu.memory_space<vmem>>, %arg2: memref<896x128xbf16, #tpu.memory_space<vmem>>, %arg3: memref<1x128xf32, #tpu.memory_space<vmem>>, %arg4: memref<392x128xbf16, #tpu.memory_space<vmem>>) attributes {dimension_semantics = [#tpu.dimension_semantics<parallel>], iteration_bounds = array<i64: 1>, scalar_prefetch = 0 : i64, scratch_operands = 0 : i64, tpu.core_type = #tpu.core_type<tc>, window_params = [{transform_indices = @transform_0, window_bounds = array<i64: 392, 896>}, {pipeline_mode = #tpu.pipeline_mode<synchronous>, transform_indices = @transform_1, window_bounds = array<i64: 896, 128>}, {pipeline_mode = #tpu.pipeline_mode<synchronous>, transform_indices = @transform_2, window_bounds = array<i64: 1, 128>}, {transform_indices = @transform_3, window_bounds = array<i64: 392, 128>}]} {
    %c0 = arith.constant 0 : index
    %c0_0 = arith.constant 0 : index
    %0 = vector.load %arg1[%c0, %c0_0] : memref<392x896xbf16, #tpu.memory_space<vmem>>, vector<392x896xbf16>
    %c0_1 = arith.constant 0 : index
    %c0_2 = arith.constant 0 : index
    %1 = vector.load %arg2[%c0_1, %c0_2] : memref<896x128xbf16, #tpu.memory_space<vmem>>, vector<896x128xbf16>
    %cst = arith.constant dense<0.000000e+00> : vector<392x128xf32>
    %2 = tpu.matmul %0, %1, %cst {dimension_numbers = #tpu.dot_dimension_numbers<[1], [0], [0], [1], [0, 0, 1, 1], [], []>} : vector<392x896xbf16>, vector<896x128xbf16>, vector<392x128xf32> -> vector<392x128xf32>
    %c0_3 = arith.constant 0 : index
    %c0_4 = arith.constant 0 : index
    %3 = vector.load %arg3[%c0_3, %c0_4] : memref<1x128xf32, #tpu.memory_space<vmem>>, vector<1x128xf32>
    %4 = vector.broadcast %3 : vector<1x128xf32> to vector<392x128xf32>
    %5 = arith.addf %2, %4 : vector<392x128xf32>
    %cst_5 = arith.constant 0.000000e+00 : f32
    %6 = vector.broadcast %cst_5 : f32 to vector<392x128xf32>
    %7 = arith.maximumf %5, %6 : vector<392x128xf32>
    %8 = arith.truncf %7 : vector<392x128xf32> to vector<392x128xbf16>
    %c0_6 = arith.constant 0 : index
    %c0_7 = arith.constant 0 : index
    %9 = vector.load %arg4[%c0_6, %c0_7] : memref<392x128xbf16, #tpu.memory_space<vmem>>, vector<392x128xbf16>
    tpu.vector_store %arg4[%c0_6, %c0_7], %8 {strides = array<i32>} : memref<392x128xbf16, #tpu.memory_space<vmem>>, vector<392x128xbf16>,
    return
  }
  func.func @transform_0(%arg0: i32) -> (i32, i32) {
    %c0_i32 = arith.constant 0 : i32
    %c0_i32_0 = arith.constant 0 : i32
    return %arg0, %c0_i32 : i32, i32
  }
  func.func @transform_1(%arg0: i32) -> (i32, i32) {
    %c0_i32 = arith.constant 0 : i32
    %c0_i32_0 = arith.constant 0 : i32
    %c0_i32_1 = arith.constant 0 : i32
    return %c0_i32, %c0_i32_0 : i32, i32
  }
  func.func @transform_2(%arg0: i32) -> (i32, i32) {
    %c0_i32 = arith.constant 0 : i32
    %c0_i32_0 = arith.constant 0 : i32
    %c0_i32_1 = arith.constant 0 : i32
    return %c0_i32, %c0_i32_0 : i32, i32
  }
  func.func @transform_3(%arg0: i32) -> (i32, i32) {
    %c0_i32 = arith.constant 0 : i32
    %c0_i32_0 = arith.constant 0 : i32
    return %arg0, %c0_i32 : i32, i32
  }
}

module attributes {stable_mosaic.version = 11 : i64} {
  func.func @_maxpool2x2_kernel(%arg0: i32, %arg1: memref<1x7x2x7x256xbf16, #tpu.memory_space<vmem>>, %arg2: memref<1x7x7x48xbf16, #tpu.memory_space<vmem>>) attributes {dimension_semantics = [#tpu.dimension_semantics<parallel>], iteration_bounds = array<i64: 2>, scalar_prefetch = 0 : i64, scratch_operands = 0 : i64, tpu.core_type = #tpu.core_type<tc>, window_params = [{transform_indices = @transform_0, window_bounds = array<i64: 1, 7, 2, 7, 256>}, {transform_indices = @transform_1, window_bounds = array<i64: 1, 7, 7, 48>}]} {
    %c0 = arith.constant 0 : index
    %c0_0 = arith.constant 0 : index
    %c0_1 = arith.constant 0 : index
    %c0_2 = arith.constant 0 : index
    %c0_3 = arith.constant 0 : index
    %0 = vector.load %arg1[%c0, %c0_0, %c0_1, %c0_2, %c0_3] : memref<1x7x2x7x256xbf16, #tpu.memory_space<vmem>>, vector<1x7x2x7x256xbf16>
    %cst = arith.constant dense<0xFF80> : vector<7x7x256xbf16>
    %1 = vector.multi_reduction <maximumf>, %0, %cst [0, 2] : vector<1x7x2x7x256xbf16> to vector<7x7x256xbf16>
    %2 = vector.extract_strided_slice %1 {offsets = [0, 0, 0], sizes = [7, 7, 128], strides = [1, 1, 1]} : vector<7x7x256xbf16> to vector<7x7x128xbf16>
    %3 = vector.extract_strided_slice %1 {offsets = [0, 0, 128], sizes = [7, 7, 128], strides = [1, 1, 1]} : vector<7x7x256xbf16> to vector<7x7x128xbf16>
    %4 = arith.maximumf %2, %3 : vector<7x7x128xbf16>
    %5 = vector.extract_strided_slice %4 {offsets = [0, 0, 0], sizes = [7, 7, 48], strides = [1, 1, 1]} : vector<7x7x128xbf16> to vector<7x7x48xbf16>
    %c0_4 = arith.constant 0 : index
    %c0_5 = arith.constant 0 : index
    %c0_6 = arith.constant 0 : index
    %c0_7 = arith.constant 0 : index
    %6 = vector.load %arg2[%c0_4, %c0_5, %c0_6, %c0_7] : memref<1x7x7x48xbf16, #tpu.memory_space<vmem>>, vector<1x7x7x48xbf16>
    %7 = vector.shape_cast %6 : vector<1x7x7x48xbf16> to vector<7x7x48xbf16>
    %8 = vector.shape_cast %5 : vector<7x7x48xbf16> to vector<1x7x7x48xbf16>
    tpu.vector_store %arg2[%c0_4, %c0_5, %c0_6, %c0_7], %8 {strides = array<i32>} : memref<1x7x7x48xbf16, #tpu.memory_space<vmem>>, vector<1x7x7x48xbf16>,
    return
  }
  func.func @transform_0(%arg0: i32) -> (i32, i32, i32, i32, i32) {
    %c0_i32 = arith.constant 0 : i32
    %c0_i32_0 = arith.constant 0 : i32
    %c0_i32_1 = arith.constant 0 : i32
    %c0_i32_2 = arith.constant 0 : i32
    %c0_i32_3 = arith.constant 0 : i32
    return %arg0, %c0_i32, %c0_i32_0, %c0_i32_1, %c0_i32_2 : i32, i32, i32, i32, i32
  }
  func.func @transform_1(%arg0: i32) -> (i32, i32, i32, i32) {
    %c0_i32 = arith.constant 0 : i32
    %c0_i32_0 = arith.constant 0 : i32
    %c0_i32_1 = arith.constant 0 : i32
    %c0_i32_2 = arith.constant 0 : i32
    return %arg0, %c0_i32, %c0_i32_0, %c0_i32_1 : i32, i32, i32, i32
  }
}

module attributes {stable_mosaic.version = 11 : i64} {
  func.func @_gemm_bias_relu_kernel(%arg0: i32, %arg1: memref<8x2432xbf16, #tpu.memory_space<vmem>>, %arg2: memref<2432x128xbf16, #tpu.memory_space<vmem>>, %arg3: memref<1x128xf32, #tpu.memory_space<vmem>>, %arg4: memref<8x128xf32, #tpu.memory_space<vmem>>) attributes {dimension_semantics = [#tpu.dimension_semantics<parallel>], iteration_bounds = array<i64: 1>, scalar_prefetch = 0 : i64, scratch_operands = 0 : i64, tpu.core_type = #tpu.core_type<tc>, window_params = [{transform_indices = @transform_0, window_bounds = array<i64: 8, 2432>}, {pipeline_mode = #tpu.pipeline_mode<synchronous>, transform_indices = @transform_1, window_bounds = array<i64: 2432, 128>}, {pipeline_mode = #tpu.pipeline_mode<synchronous>, transform_indices = @transform_2, window_bounds = array<i64: 1, 128>}, {transform_indices = @transform_3, window_bounds = array<i64: 8, 128>}]} {
    %c0 = arith.constant 0 : index
    %c0_0 = arith.constant 0 : index
    %0 = vector.load %arg1[%c0, %c0_0] : memref<8x2432xbf16, #tpu.memory_space<vmem>>, vector<8x2432xbf16>
    %c0_1 = arith.constant 0 : index
    %c0_2 = arith.constant 0 : index
    %1 = vector.load %arg2[%c0_1, %c0_2] : memref<2432x128xbf16, #tpu.memory_space<vmem>>, vector<2432x128xbf16>
    %cst = arith.constant dense<0.000000e+00> : vector<8x128xf32>
    %2 = tpu.matmul %0, %1, %cst {dimension_numbers = #tpu.dot_dimension_numbers<[1], [0], [0], [1], [0, 0, 1, 1], [], []>} : vector<8x2432xbf16>, vector<2432x128xbf16>, vector<8x128xf32> -> vector<8x128xf32>
    %c0_3 = arith.constant 0 : index
    %c0_4 = arith.constant 0 : index
    %3 = vector.load %arg3[%c0_3, %c0_4] : memref<1x128xf32, #tpu.memory_space<vmem>>, vector<1x128xf32>
    %4 = vector.broadcast %3 : vector<1x128xf32> to vector<8x128xf32>
    %5 = arith.addf %2, %4 : vector<8x128xf32>
    %cst_5 = arith.constant 0.000000e+00 : f32
    %6 = vector.broadcast %cst_5 : f32 to vector<8x128xf32>
    %7 = arith.maximumf %5, %6 : vector<8x128xf32>
    %c0_6 = arith.constant 0 : index
    %c0_7 = arith.constant 0 : index
    %8 = vector.load %arg4[%c0_6, %c0_7] : memref<8x128xf32, #tpu.memory_space<vmem>>, vector<8x128xf32>
    tpu.vector_store %arg4[%c0_6, %c0_7], %7 {strides = array<i32>} : memref<8x128xf32, #tpu.memory_space<vmem>>, vector<8x128xf32>,
    return
  }
  func.func @transform_0(%arg0: i32) -> (i32, i32) {
    %c0_i32 = arith.constant 0 : i32
    %c0_i32_0 = arith.constant 0 : i32
    return %arg0, %c0_i32 : i32, i32
  }
  func.func @transform_1(%arg0: i32) -> (i32, i32) {
    %c0_i32 = arith.constant 0 : i32
    %c0_i32_0 = arith.constant 0 : i32
    %c0_i32_1 = arith.constant 0 : i32
    return %c0_i32, %c0_i32_0 : i32, i32
  }
  func.func @transform_2(%arg0: i32) -> (i32, i32) {
    %c0_i32 = arith.constant 0 : i32
    %c0_i32_0 = arith.constant 0 : i32
    %c0_i32_1 = arith.constant 0 : i32
    return %c0_i32, %c0_i32_0 : i32, i32
  }
  func.func @transform_3(%arg0: i32) -> (i32, i32) {
    %c0_i32 = arith.constant 0 : i32
    %c0_i32_0 = arith.constant 0 : i32
    return %arg0, %c0_i32 : i32, i32
  }
}

</mosaic_0001>

<llo_original>
// kernel: _lambda_.5
$region0: #{_lambda_.5}
  #allocation0 [shape = 'u32[]', space=smem, size = 0x4, offset = 0x4, fixed_abs, tag = 'smem constant byte address 0x4 - core index']
  #allocation1 [shape = 'u32[144,128]{1,0:T(1,128)}', space=vmem, size = 0x12000, scoped, tag = 'internal scratch']
  %s0 = inlined_call_operand.vmem [shape: bf16[1568,128], index: 0, kind: input, shape index: {}]
  %s1 = inlined_call_operand.vmem [shape: bf16[128,128], index: 1, kind: input, shape index: {}]
  %s2 = inlined_call_operand.vmem [shape: f32[1,128], index: 2, kind: input, shape index: {}]
  %s3 = inlined_call_operand.vmem [shape: bf16[1568,128], index: 3, kind: output, shape index: {}]
  %s4 = sld [smem:[#allocation0]]
  $region45: #{_lambda_.5} parent=0
    _
  %s6 = ssub.s32 1, %s4
  %s7 = scalar_select 0, %s6, %s4
  loop: start=0, step=1, limit=4
  $region2: #{_lambda_.5} parent=0 // loop_pre_header
    _
  $region3: #{_lambda_.5} parent=0 // loop_header
    %s9 = sphi 0, %s13
    %p10 = scmp.ge.s32.totalorder %s9, 4
    %s19 = sphi 0, %s21
    %s22 = sphi 0, %s19
    %s23 = sphi 0, %s22
    %s39 = sphi 0, %s23
    %s43 = sphi 0, %s43
    %s45 = sphi 0, %s43
    %s46 = sphi 0, %s45
    %s60 = sphi 0, %s46
    %s64 = sphi 0, %s64
    %s66 = sphi 0, %s64
    %s67 = sphi 0, %s66
    %s81 = sphi 0, %s67
    %s87 = sphi 0, %s89
    %s90 = sphi 0, %s87
    %s91 = sphi 0, %s90
    %s107 = sphi 0, %s91
  $region4: #{_lambda_.5} parent=0 // loop_header_branch
    %12 = sbr.rel (%p10) target = $region8
  $region5: #{_lambda_.5} parent=0 // loop_body
    %s14 = ssub.s32 %s9, 1
    %s15 = ssub.s32 %s9, 2
    %s16 = sadd.s32 %s9, 1
    %s17 = ssub.s32 %s9, %s16
    %p18 = scmp.eq.s32.totalorder %s17, 0
    %s20 = sadd.s32 %s19, 1
    %s21 = scalar_select %p18, %s19, %s20
    %p24 = pneg %p18
    %p25 = scmp.eq.s32.totalorder %s9, 1
    %p26 = por %p24, %p25
    %p27 = scmp.ne.s32.totalorder %s19, %s22
    %p28 = scmp.eq.s32.totalorder %s9, 0
    %p29 = por %p27, %p28
    %p30 = scmp.ne.s32.totalorder %s19, %s22
    %p31 = scmp.eq.s32.totalorder %s14, 1
    %p32 = por %p30, %p31
    %p33 = scmp.ne.s32.totalorder %s22, %s23
    %p34 = scmp.eq.s32.totalorder %s14, 0
    %p35 = por %p33, %p34
    %p36 = scmp.ne.s32.totalorder %s22, %s23
    %p37 = scmp.eq.s32.totalorder %s15, 1
    %p38 = por %p36, %p37
    %p40 = scmp.ne.s32.totalorder %s23, %s39
    %p41 = scmp.eq.s32.totalorder %s15, 0
    %p42 = por %p40, %p41
    %s44 = sadd.s32 %s43, 1
    %p47 = scmp.eq.s32.totalorder %s9, 1
    %p48 = scmp.ne.s32.totalorder %s43, %s45
    %p49 = scmp.eq.s32.totalorder %s9, 0
    %p50 = por %p48, %p49
    %p51 = scmp.ne.s32.totalorder %s43, %s45
    %p52 = scmp.eq.s32.totalorder %s14, 1
    %p53 = por %p51, %p52
    %p54 = scmp.ne.s32.totalorder %s45, %s46
    %p55 = scmp.eq.s32.totalorder %s14, 0
    %p56 = por %p54, %p55
    %p57 = scmp.ne.s32.totalorder %s45, %s46
    %p58 = scmp.eq.s32.totalorder %s15, 1
    %p59 = por %p57, %p58
    %p61 = scmp.ne.s32.totalorder %s46, %s60
    %p62 = scmp.eq.s32.totalorder %s15, 0
    %p63 = por %p61, %p62
    %s65 = sadd.s32 %s64, 1
    %p68 = scmp.eq.s32.totalorder %s9, 1
    %p69 = scmp.ne.s32.totalorder %s64, %s66
    %p70 = scmp.eq.s32.totalorder %s9, 0
    %p71 = por %p69, %p70
    %p72 = scmp.ne.s32.totalorder %s64, %s66
    %p73 = scmp.eq.s32.totalorder %s14, 1
    %p74 = por %p72, %p73
    %p75 = scmp.ne.s32.totalorder %s66, %s67
    %p76 = scmp.eq.s32.totalorder %s14, 0
    %p77 = por %p75, %p76
    %p78 = scmp.ne.s32.totalorder %s66, %s67
    %p79 = scmp.eq.s32.totalorder %s15, 1
    %p80 = por %p78, %p79
    %p82 = scmp.ne.s32.totalorder %s67, %s81
    %p83 = scmp.eq.s32.totalorder %s15, 0
    %p84 = por %p82, %p83
    %s85 = ssub.s32 %s9, %s16
    %p86 = scmp.eq.s32.totalorder %s85, 0
    %s88 = sadd.s32 %s87, 1
    %s89 = scalar_select %p86, %s87, %s88
    %p92 = pneg %p86
    %p93 = scmp.eq.s32.totalorder %s9, 1
    %p94 = por %p92, %p93
    %p95 = scmp.ne.s32.totalorder %s87, %s90
    %p96 = scmp.eq.s32.totalorder %s9, 0
    %p97 = por %p95, %p96
    %p98 = scmp.ne.s32.totalorder %s87, %s90
    %p99 = scmp.eq.s32.totalorder %s14, 1
    %p100 = por %p98, %p99
    %p101 = scmp.ne.s32.totalorder %s90, %s91
    %p102 = scmp.eq.s32.totalorder %s14, 0
    %p103 = por %p101, %p102
    %p104 = scmp.ne.s32.totalorder %s90, %s91
    %p105 = scmp.eq.s32.totalorder %s15, 1
    %p106 = por %p104, %p105
    %p108 = scmp.ne.s32.totalorder %s91, %s107
    %p109 = scmp.eq.s32.totalorder %s15, 0
    %p110 = por %p108, %p109
    %p111 = scmp.le.s32.totalorder 1, %s9
    %p112 = scmp.lt.s32.totalorder %s9, 3
    %p113 = pnand %p111, %p112
    %p114 = pneg %p113
    // Predicated region
    $region9: #{_lambda_.5} parent=5 // pred_check
      _
    $region10: #{_lambda_.5} parent=5 // pred_check_branch
      %116 = sbr.rel (%p113) target = $region12
    $region11: #{_lambda_.5} parent=5 // pred_region
      %s117 = ssub.s32 %s9, 1
      // Predicated region
      $region13: #{_lambda_.5} parent=11 // pred_check
        %p118 = pneg %p56
      $region14: #{_lambda_.5} parent=11 // pred_check_branch
        %120 = sbr.rel (%p118) target = $region16
      $region15: #{_lambda_.5} parent=11 // pred_region
        _
      $region16: #{_lambda_.5} parent=11 // pred_fallthru
        _
      // Predicated region
      $region17: #{_lambda_.5} parent=11 // pred_check
        %p121 = pneg %p77
      $region18: #{_lambda_.5} parent=11 // pred_check_branch
        %123 = sbr.rel (%p121) target = $region20
      $region19: #{_lambda_.5} parent=11 // pred_region
        _
      $region20: #{_lambda_.5} parent=11 // pred_fallthru
        _
    $region12: #{_lambda_.5} parent=5 // pred_fallthru
      _
    %p124 = scmp.lt.s32.totalorder %s9, 2
    // Predicated region
    $region21: #{_lambda_.5} parent=5 // pred_check
      %p125 = pneg %p124
    $region22: #{_lambda_.5} parent=5 // pred_check_branch
      %127 = sbr.rel (%p125) target = $region24
    $region23: #{_lambda_.5} parent=5 // pred_region
      // Predicated region
      $region25: #{_lambda_.5} parent=23 // pred_check
        %p128 = pneg %p29
      $region26: #{_lambda_.5} parent=23 // pred_check_branch
        %130 = sbr.rel (%p128) target = $region28
      $region27: #{_lambda_.5} parent=23 // pred_region
        %s131 = smul.u32 98, %s9
        %p132 = scmp.lt.s32.totalorder %s131, 195
        %s133 = scalar_select %p132, %s131, 195
        %s134 = smul.addr %s133, 4
        %s135 = scalar_lea.vmem %s0, %s134
        %s136 = smul.u32 98, %s9
      $region28: #{_lambda_.5} parent=23 // pred_fallthru
        _
    $region24: #{_lambda_.5} parent=5 // pred_fallthru
      _
    %p137 = scmp.le.s32.totalorder 1, %s9
    %p138 = scmp.lt.s32.totalorder %s9, 3
    %p139 = pnand %p137, %p138
    %p140 = pneg %p139
    // Predicated region
    $region29: #{_lambda_.5} parent=5 // pred_check
      _
    $region30: #{_lambda_.5} parent=5 // pred_check_branch
      %142 = sbr.rel (%p139) target = $region32
    $region31: #{_lambda_.5} parent=5 // pred_region
      %s143 = ssub.s32 %s9, 1
      %s144 = smul.u32 98, %s14
      %p145 = scmp.lt.s32.totalorder %s144, 195
      %s146 = scalar_select %p145, %s144, 195
      %s147 = smul.addr %s146, 4
      %s148 = scalar_lea.vmem %s0, %s147
      %p149 = pneg %p35
      %p150 = pneg %p32
      %p151 = pneg %p56
      %p152 = pneg %p53
      %p153 = pneg %p77
      %p154 = pneg %p74
      %p155 = pneg %p103
      %p156 = pneg %p100
      %s157 = smul.u32 98, %s14
      %p158 = scmp.lt.s32.totalorder %s157, 195
      %s159 = scalar_select %p158, %s157, 195
      %s160 = smul.addr %s159, 4
      %s161 = scalar_lea.vmem %s3, %s160
      %s162 = smul.u32 98, %s14
      %p163 = scmp.lt.s32.totalorder %s162, 195
      %s164 = scalar_select %p163, %s162, 195
      %s165 = smul.addr %s164, 4
      %s166 = scalar_lea.vmem %s0, %s165
      %s167 = smul.u32 98, %s14
      %s168 = smul.u32 98, %s14
      %p169 = scmp.lt.s32.totalorder %s168, 195
      %s170 = scalar_select %p169, %s168, 195
      %s171 = smul.addr %s170, 4
      %s172 = scalar_lea.vmem %s3, %s171
      %s173 = smul.u32 98, %s14
      %v175 = vld [vmem:[%s166] sm:$0xf]
      %v176 = vld [vmem:[%s166 + $0x4] sm:$0xf]
      %v177 = vld [vmem:[%s166 + $0x8] sm:$0xf]
      %v178 = vld [vmem:[%s166 + $0xc] sm:$0xf]
      %v179 = vld [vmem:[%s166 + $0x10] sm:$0xf]
      %v180 = vld [vmem:[%s166 + $0x14] sm:$0xf]
      %v181 = vld [vmem:[%s166 + $0x18] sm:$0xf]
      %v182 = vld [vmem:[%s166 + $0x1c] sm:$0xf]
      %v183 = vld [vmem:[%s166 + $0x20] sm:$0xf]
      %v184 = vld [vmem:[%s166 + $0x24] sm:$0xf]
      %v185 = vld [vmem:[%s166 + $0x28] sm:$0xf]
      %v186 = vld [vmem:[%s166 + $0x2c] sm:$0xf]
      %v187 = vld [vmem:[%s166 + $0x30] sm:$0xf]
      %v188 = vld [vmem:[%s166 + $0x34] sm:$0xf]
      %v189 = vld [vmem:[%s166 + $0x38] sm:$0xf]
      %v190 = vld [vmem:[%s166 + $0x3c] sm:$0xf]
      %v191 = vld [vmem:[%s166 + $0x40] sm:$0xf]
      %v192 = vld [vmem:[%s166 + $0x44] sm:$0xf]
      %v193 = vld [vmem:[%s166 + $0x48] sm:$0xf]
      %v194 = vld [vmem:[%s166 + $0x4c] sm:$0xf]
      %v195 = vld [vmem:[%s166 + $0x50] sm:$0xf]
      %v196 = vld [vmem:[%s166 + $0x54] sm:$0xf]
      %v197 = vld [vmem:[%s166 + $0x58] sm:$0xf]
      %v198 = vld [vmem:[%s166 + $0x5c] sm:$0xf]
      %v199 = vld [vmem:[%s166 + $0x60] sm:$0xf]
      %v200 = vld [vmem:[%s166 + $0x64] sm:$0xf]
      %v201 = vld [vmem:[%s166 + $0x68] sm:$0xf]
      %v202 = vld [vmem:[%s166 + $0x6c] sm:$0xf]
      %v203 = vld [vmem:[%s166 + $0x70] sm:$0xf]
      %v204 = vld [vmem:[%s166 + $0x74] sm:$0xf]
      %v205 = vld [vmem:[%s166 + $0x78] sm:$0xf]
      %v206 = vld [vmem:[%s166 + $0x7c] sm:$0xf]
      %v207 = vld [vmem:[%s166 + $0x80] sm:$0xf]
      %v208 = vld [vmem:[%s166 + $0x84] sm:$0xf]
      %v209 = vld [vmem:[%s166 + $0x88] sm:$0xf]
      %v210 = vld [vmem:[%s166 + $0x8c] sm:$0xf]
      %v211 = vld [vmem:[%s166 + $0x90] sm:$0xf]
      %v212 = vld [vmem:[%s166 + $0x94] sm:$0xf]
      %v213 = vld [vmem:[%s166 + $0x98] sm:$0xf]
      %v214 = vld [vmem:[%s166 + $0x9c] sm:$0xf]
      %v215 = vld [vmem:[%s166 + $0xa0] sm:$0xf]
      %v216 = vld [vmem:[%s166 + $0xa4] sm:$0xf]
      %v217 = vld [vmem:[%s166 + $0xa8] sm:$0xf]
      %v218 = vld [vmem:[%s166 + $0xac] sm:$0xf]
      %v219 = vld [vmem:[%s166 + $0xb0] sm:$0xf]
      %v220 = vld [vmem:[%s166 + $0xb4] sm:$0xf]
      %v221 = vld [vmem:[%s166 + $0xb8] sm:$0xf]
      %v222 = vld [vmem:[%s166 + $0xbc] sm:$0xf]
      %v223 = vld [vmem:[%s166 + $0xc0] sm:$0xf]
      %v224 = vld [vmem:[%s166 + $0xc4] sm:$0xf]
      %v225 = vld [vmem:[%s166 + $0xc8] sm:$0xf]
      %v226 = vld [vmem:[%s166 + $0xcc] sm:$0xf]
      %v227 = vld [vmem:[%s166 + $0xd0] sm:$0xf]
      %v228 = vld [vmem:[%s166 + $0xd4] sm:$0xf]
      %v229 = vld [vmem:[%s166 + $0xd8] sm:$0xf]
      %v230 = vld [vmem:[%s166 + $0xdc] sm:$0xf]
      %v231 = vld [vmem:[%s166 + $0xe0] sm:$0xf]
      %v232 = vld [vmem:[%s166 + $0xe4] sm:$0xf]
      %v233 = vld [vmem:[%s166 + $0xe8] sm:$0xf]
      %v234 = vld [vmem:[%s166 + $0xec] sm:$0xf]
      %v235 = vld [vmem:[%s166 + $0xf0] sm:$0xf]
      %v236 = vld [vmem:[%s166 + $0xf4] sm:$0xf]
      %v237 = vld [vmem:[%s166 + $0xf8] sm:$0xf]
      %v238 = vld [vmem:[%s166 + $0xfc] sm:$0xf]
      %v239 = vld [vmem:[%s166 + $0x100] sm:$0xf]
      %v240 = vld [vmem:[%s166 + $0x104] sm:$0xf]
      %v241 = vld [vmem:[%s166 + $0x108] sm:$0xf]
      %v242 = vld [vmem:[%s166 + $0x10c] sm:$0xf]
      %v243 = vld [vmem:[%s166 + $0x110] sm:$0xf]
      %v244 = vld [vmem:[%s166 + $0x114] sm:$0xf]
      %v245 = vld [vmem:[%s166 + $0x118] sm:$0xf]
      %v246 = vld [vmem:[%s166 + $0x11c] sm:$0xf]
      %v247 = vld [vmem:[%s166 + $0x120] sm:$0xf]
      %v248 = vld [vmem:[%s166 + $0x124] sm:$0xf]
      %v249 = vld [vmem:[%s166 + $0x128] sm:$0xf]
      %v250 = vld [vmem:[%s166 + $0x12c] sm:$0xf]
      %v251 = vld [vmem:[%s166 + $0x130] sm:$0xf]
      %v252 = vld [vmem:[%s166 + $0x134] sm:$0xf]
      %v253 = vld [vmem:[%s166 + $0x138] sm:$0xf]
      %v254 = vld [vmem:[%s166 + $0x13c] sm:$0xf]
      %v255 = vld [vmem:[%s166 + $0x140] sm:$0xf]
      %v256 = vld [vmem:[%s166 + $0x144] sm:$0xf]
      %v257 = vld [vmem:[%s166 + $0x148] sm:$0xf]
      %v258 = vld [vmem:[%s166 + $0x14c] sm:$0xf]
      %v259 = vld [vmem:[%s166 + $0x150] sm:$0xf]
      %v260 = vld [vmem:[%s166 + $0x154] sm:$0xf]
      %v261 = vld [vmem:[%s166 + $0x158] sm:$0xf]
      %v262 = vld [vmem:[%s166 + $0x15c] sm:$0xf]
      %v263 = vld [vmem:[%s166 + $0x160] sm:$0xf]
      %v264 = vld [vmem:[%s166 + $0x164] sm:$0xf]
      %v265 = vld [vmem:[%s166 + $0x168] sm:$0xf]
      %v266 = vld [vmem:[%s166 + $0x16c] sm:$0xf]
      %v267 = vld [vmem:[%s166 + $0x170] sm:$0xf]
      %v268 = vld [vmem:[%s166 + $0x174] sm:$0xf]
      %v269 = vld [vmem:[%s166 + $0x178] sm:$0xf]
      %v270 = vld [vmem:[%s166 + $0x17c] sm:$0xf]
      %v271 = vld [vmem:[%s166 + $0x180] sm:$0xf]
      %v272 = vld [vmem:[%s166 + $0x184] sm:$0xf]
      %v273 = vld [vmem:[%s1] sm:$0xf]
      %v274 = vld [vmem:[%s1 + $0x4] sm:$0xf]
      %v275 = vld [vmem:[%s1 + $0x8] sm:$0xf]
      %v276 = vld [vmem:[%s1 + $0xc] sm:$0xf]
      %v277 = vld [vmem:[%s1 + $0x10] sm:$0xf]
      %v278 = vld [vmem:[%s1 + $0x14] sm:$0xf]
      %v279 = vld [vmem:[%s1 + $0x18] sm:$0xf]
      %v280 = vld [vmem:[%s1 + $0x1c] sm:$0xf]
      %v281 = vld [vmem:[%s1 + $0x20] sm:$0xf]
      %v282 = vld [vmem:[%s1 + $0x24] sm:$0xf]
      %v283 = vld [vmem:[%s1 + $0x28] sm:$0xf]
      %v284 = vld [vmem:[%s1 + $0x2c] sm:$0xf]
      %v285 = vld [vmem:[%s1 + $0x30] sm:$0xf]
      %v286 = vld [vmem:[%s1 + $0x34] sm:$0xf]
      %v287 = vld [vmem:[%s1 + $0x38] sm:$0xf]
      %v288 = vld [vmem:[%s1 + $0x3c] sm:$0xf]
      %v289 = vld [vmem:[%s2] sm:$0x1]
      %v291 = vlaneseq
      %v292 = vshrl.u32 %v291, 7
      %v293 = vsub.s32 0, %v292
      %v294 = vrot.slane %v289, %v293
      %v394 = vunpack.c.l.b16 %v175
      %v395 = vunpack.c.l.b16 %v176
      %v396 = vunpack.c.l.b16 %v177
      %v397 = vunpack.c.l.b16 %v178
      %v398 = vunpack.c.l.b16 %v179
      %v399 = vunpack.c.l.b16 %v180
      %v400 = vunpack.c.l.b16 %v181
      %v401 = vunpack.c.l.b16 %v182
      %v402 = vunpack.c.l.b16 %v183
      %v403 = vunpack.c.l.b16 %v184
      %v404 = vunpack.c.l.b16 %v185
      %v405 = vunpack.c.l.b16 %v186
      %v406 = vunpack.c.l.b16 %v187
      %v407 = vunpack.c.l.b16 %v188
      %v408 = vunpack.c.l.b16 %v189
      %v409 = vunpack.c.l.b16 %v190
      %v410 = vunpack.c.l.b16 %v191
      %v411 = vunpack.c.l.b16 %v192
      %v412 = vunpack.c.l.b16 %v193
      %v413 = vunpack.c.l.b16 %v194
      %v414 = vunpack.c.l.b16 %v195
      %v415 = vunpack.c.l.b16 %v196
      %v416 = vunpack.c.l.b16 %v197
      %v417 = vunpack.c.l.b16 %v198
      %v418 = vunpack.c.l.b16 %v199
      %v419 = vunpack.c.l.b16 %v200
      %v420 = vunpack.c.l.b16 %v201
      %v421 = vunpack.c.l.b16 %v202
      %v422 = vunpack.c.l.b16 %v203
      %v423 = vunpack.c.l.b16 %v204
      %v424 = vunpack.c.l.b16 %v205
      %v425 = vunpack.c.l.b16 %v206
      %v426 = vunpack.c.l.b16 %v207
      %v427 = vunpack.c.l.b16 %v208
      %v428 = vunpack.c.l.b16 %v209
      %v429 = vunpack.c.l.b16 %v210
      %v430 = vunpack.c.l.b16 %v211
      %v431 = vunpack.c.l.b16 %v212
      %v432 = vunpack.c.l.b16 %v213
      %v433 = vunpack.c.l.b16 %v214
      %v434 = vunpack.c.l.b16 %v215
      %v435 = vunpack.c.l.b16 %v216
      %v436 = vunpack.c.l.b16 %v217
      %v437 = vunpack.c.l.b16 %v218
      %v438 = vunpack.c.l.b16 %v219
      %v439 = vunpack.c.l.b16 %v220
      %v440 = vunpack.c.l.b16 %v221
      %v441 = vunpack.c.l.b16 %v222
      %v442 = vunpack.c.l.b16 %v223
      %v443 = vunpack.c.l.b16 %v224
      %v444 = vunpack.c.l.b16 %v225
      %v445 = vunpack.c.l.b16 %v226
      %v446 = vunpack.c.l.b16 %v227
      %v447 = vunpack.c.l.b16 %v228
      %v448 = vunpack.c.l.b16 %v229
      %v449 = vunpack.c.l.b16 %v230
      %v450 = vunpack.c.l.b16 %v231
      %v451 = vunpack.c.l.b16 %v232
      %v452 = vunpack.c.l.b16 %v233
      %v453 = vunpack.c.l.b16 %v234
      %v454 = vunpack.c.l.b16 %v235
      %v455 = vunpack.c.l.b16 %v236
      %v456 = vunpack.c.l.b16 %v237
      %v457 = vunpack.c.l.b16 %v238
      %v458 = vunpack.c.l.b16 %v239
      %v459 = vunpack.c.l.b16 %v240
      %v460 = vunpack.c.l.b16 %v241
      %v461 = vunpack.c.l.b16 %v242
      %v462 = vunpack.c.l.b16 %v243
      %v463 = vunpack.c.l.b16 %v244
      %v464 = vunpack.c.l.b16 %v245
      %v465 = vunpack.c.l.b16 %v246
      %v466 = vunpack.c.l.b16 %v247
      %v467 = vunpack.c.l.b16 %v248
      %v468 = vunpack.c.l.b16 %v249
      %v469 = vunpack.c.l.b16 %v250
      %v470 = vunpack.c.l.b16 %v251
      %v471 = vunpack.c.l.b16 %v252
      %v472 = vunpack.c.l.b16 %v253
      %v473 = vunpack.c.l.b16 %v254
      %v474 = vunpack.c.l.b16 %v255
      %v475 = vunpack.c.l.b16 %v256
      %v476 = vunpack.c.l.b16 %v257
      %v477 = vunpack.c.l.b16 %v258
      %v478 = vunpack.c.l.b16 %v259
      %v479 = vunpack.c.l.b16 %v260
      %v480 = vunpack.c.l.b16 %v261
      %v481 = vunpack.c.l.b16 %v262
      %v482 = vunpack.c.l.b16 %v263
      %v483 = vunpack.c.l.b16 %v264
      %v484 = vunpack.c.l.b16 %v265
      %v485 = vunpack.c.l.b16 %v266
      %v486 = vunpack.c.l.b16 %v267
      %v487 = vunpack.c.l.b16 %v268
      %v488 = vunpack.c.l.b16 %v269
      %v489 = vunpack.c.l.b16 %v270
      %v490 = vunpack.c.l.b16 %v271
      %v491 = vunpack.c.l.b16 %v272
      %v492 = vpack.c.b16 %v395, %v394
      %v493 = vpack.c.b16 %v397, %v396
      %v494 = vpack.c.b16 %v399, %v398
      %v495 = vpack.c.b16 %v401, %v400
      %v496 = vpack.c.b16 %v403, %v402
      %v497 = vpack.c.b16 %v405, %v404
      %v498 = vpack.c.b16 %v407, %v406
      %v499 = vpack.c.b16 %v409, %v408
      %v500 = vpack.c.b16 %v411, %v410
      %v501 = vpack.c.b16 %v413, %v412
      %v502 = vpack.c.b16 %v415, %v414
      %v503 = vpack.c.b16 %v417, %v416
      %v504 = vpack.c.b16 %v419, %v418
      %v505 = vpack.c.b16 %v421, %v420
      %v506 = vpack.c.b16 %v423, %v422
      %v507 = vpack.c.b16 %v425, %v424
      %v508 = vpack.c.b16 %v427, %v426
      %v509 = vpack.c.b16 %v429, %v428
      %v510 = vpack.c.b16 %v431, %v430
      %v511 = vpack.c.b16 %v433, %v432
      %v512 = vpack.c.b16 %v435, %v434
      %v513 = vpack.c.b16 %v437, %v436
      %v514 = vpack.c.b16 %v439, %v438
      %v515 = vpack.c.b16 %v441, %v440
      %v516 = vpack.c.b16 %v443, %v442
      %v517 = vpack.c.b16 %v445, %v444
      %v518 = vpack.c.b16 %v447, %v446
      %v519 = vpack.c.b16 %v449, %v448
      %v520 = vpack.c.b16 %v451, %v450
      %v521 = vpack.c.b16 %v453, %v452
      %v522 = vpack.c.b16 %v455, %v454
      %v523 = vpack.c.b16 %v457, %v456
      %v524 = vpack.c.b16 %v459, %v458
      %v525 = vpack.c.b16 %v461, %v460
      %v526 = vpack.c.b16 %v463, %v462
      %v527 = vpack.c.b16 %v465, %v464
      %v528 = vpack.c.b16 %v467, %v466
      %v529 = vpack.c.b16 %v469, %v468
      %v530 = vpack.c.b16 %v471, %v470
      %v531 = vpack.c.b16 %v473, %v472
      %v532 = vpack.c.b16 %v475, %v474
      %v533 = vpack.c.b16 %v477, %v476
      %v534 = vpack.c.b16 %v479, %v478
      %v535 = vpack.c.b16 %v481, %v480
      %v536 = vpack.c.b16 %v483, %v482
      %v537 = vpack.c.b16 %v485, %v484
      %v538 = vpack.c.b16 %v487, %v486
      %v539 = vpack.c.b16 %v489, %v488
      %v540 = vpack.c.b16 %v491, %v490
      %v606 = vunpack.c.l.b16 %v273
      %v607 = vunpack.c.l.b16 %v274
      %v608 = vunpack.c.l.b16 %v275
      %v609 = vunpack.c.l.b16 %v276
      %v610 = vunpack.c.l.b16 %v277
      %v611 = vunpack.c.l.b16 %v278
      %v612 = vunpack.c.l.b16 %v279
      %v613 = vunpack.c.l.b16 %v280
      %v614 = vunpack.c.l.b16 %v281
      %v615 = vunpack.c.l.b16 %v282
      %v616 = vunpack.c.l.b16 %v283
      %v617 = vunpack.c.l.b16 %v284
      %v618 = vunpack.c.l.b16 %v285
      %v619 = vunpack.c.l.b16 %v286
      %v620 = vunpack.c.l.b16 %v287
      %v621 = vunpack.c.l.b16 %v288
      %v622 = vpack.c.b16 %v607, %v606
      %v623 = vpack.c.b16 %v609, %v608
      %v624 = vpack.c.b16 %v611, %v610
      %v625 = vpack.c.b16 %v613, %v612
      %v626 = vpack.c.b16 %v615, %v614
      %v627 = vpack.c.b16 %v617, %v616
      %v628 = vpack.c.b16 %v619, %v618
      %v629 = vpack.c.b16 %v621, %v620
      %638 = vmatprep.subr.bf16.mxu0 0
      %639 = vmatpush1.bf16.msra.mxu0 %v629
      %640 = vmatprep.subr.bf16.mxu0 0
      %641 = vmatpush1.bf16.msra.mxu0 %v628
      %642 = vmatprep.subr.bf16.mxu0 0
      %643 = vmatpush1.bf16.msra.mxu0 %v627
      %644 = vmatprep.subr.bf16.mxu0 0
      %645 = vmatpush1.bf16.msra.mxu0 %v626
      %646 = vmatprep.subr.bf16.mxu0 0
      %647 = vmatpush1.bf16.msra.mxu0 %v625
      %648 = vmatprep.subr.bf16.mxu0 0
      %649 = vmatpush1.bf16.msra.mxu0 %v624
      %650 = vmatprep.subr.bf16.mxu0 0
      %651 = vmatpush1.bf16.msra.mxu0 %v623
      %652 = vmatprep.subr.bf16.mxu0 0
      %653 = vmatpush1.bf16.msra.mxu0 %v622
      %654 = vmatprep.subr.bf16.mxu0 0
      %655 = vmatpush2.bf16.msra.mxu0 0
      %656 = vmatprep.subr.bf16.mxu0 0
      %657 = vmatpush2.bf16.msra.mxu0 0
      %658 = vmatprep.subr.bf16.mxu0 0
      %659 = vmatpush2.bf16.msra.mxu0 0
      %660 = vmatprep.subr.bf16.mxu0 0
      %661 = vmatpush2.bf16.msra.mxu0 0
      %662 = vmatprep.subr.bf16.mxu0 0
      %663 = vmatpush2.bf16.msra.mxu0 0
      %664 = vmatprep.subr.bf16.mxu0 0
      %665 = vmatpush2.bf16.msra.mxu0 0
      %666 = vmatprep.subr.bf16.mxu0 0
      %667 = vmatpush2.bf16.msra.mxu0 0
      %668 = vmatprep.subr.bf16.mxu0 0
      %669 = vmatpush2.bf16.msra.mxu0 0
      %670 = vmatprep.mubr.bf16.mxu0 0
      %671 = vmatmul.mubr.bf16.gmra.mxu0 %v492
      %v672 = vpop.f32.mrf.mxu0
      %v673 = vadd.f32 %v294, %v672
      %v674 = vpop.f32.mrf.mxu0
      %v675 = vpop.f32.mrf.mxu0
      %v676 = vadd.f32 %v294, %v675
      %v677 = vpop.f32.mrf.mxu0
      %678 = vmatprep.mubr.bf16.mxu0 0
      %679 = vmatmul.mubr.bf16.gmra.mxu0 %v493
      %v680 = vpop.f32.mrf.mxu0
      %v681 = vadd.f32 %v294, %v680
      %v682 = vpop.f32.mrf.mxu0
      %v683 = vpop.f32.mrf.mxu0
      %v684 = vadd.f32 %v294, %v683
      %v685 = vpop.f32.mrf.mxu0
      %686 = vmatprep.mubr.bf16.mxu0 0
      %687 = vmatmul.mubr.bf16.gmra.mxu0 %v494
      %v688 = vpop.f32.mrf.mxu0
      %v689 = vadd.f32 %v294, %v688
      %v690 = vpop.f32.mrf.mxu0
      %v691 = vpop.f32.mrf.mxu0
      %v692 = vadd.f32 %v294, %v691
      %v693 = vpop.f32.mrf.mxu0
      %694 = vmatprep.mubr.bf16.mxu0 0
      %695 = vmatmul.mubr.bf16.gmra.mxu0 %v495
      %v696 = vpop.f32.mrf.mxu0
      %v697 = vadd.f32 %v294, %v696
      %v698 = vpop.f32.mrf.mxu0
      %v699 = vpop.f32.mrf.mxu0
      %v700 = vadd.f32 %v294, %v699
      %v701 = vpop.f32.mrf.mxu0
      %702 = vmatprep.mubr.bf16.mxu0 0
      %703 = vmatmul.mubr.bf16.gmra.mxu0 %v496
      %v704 = vpop.f32.mrf.mxu0
      %v705 = vadd.f32 %v294, %v704
      %v706 = vpop.f32.mrf.mxu0
      %v707 = vpop.f32.mrf.mxu0
      %v708 = vadd.f32 %v294, %v707
      %v709 = vpop.f32.mrf.mxu0
      %710 = vmatprep.mubr.bf16.mxu0 0
      %711 = vmatmul.mubr.bf16.gmra.mxu0 %v497
      %v712 = vpop.f32.mrf.mxu0
      %v713 = vadd.f32 %v294, %v712
      %v714 = vpop.f32.mrf.mxu0
      %v715 = vpop.f32.mrf.mxu0
      %v716 = vadd.f32 %v294, %v715
      %v717 = vpop.f32.mrf.mxu0
      %718 = vmatprep.mubr.bf16.mxu0 0
      %719 = vmatmul.mubr.bf16.gmra.mxu0 %v498
      %v720 = vpop.f32.mrf.mxu0
      %v721 = vadd.f32 %v294, %v720
      %v722 = vpop.f32.mrf.mxu0
      %v723 = vpop.f32.mrf.mxu0
      %v724 = vadd.f32 %v294, %v723
      %v725 = vpop.f32.mrf.mxu0
      %726 = vmatprep.mubr.bf16.mxu0 0
      %727 = vmatmul.mubr.bf16.gmra.mxu0 %v499
      %v728 = vpop.f32.mrf.mxu0
      %v729 = vadd.f32 %v294, %v728
      %v730 = vpop.f32.mrf.mxu0
      %v731 = vpop.f32.mrf.mxu0
      %v732 = vadd.f32 %v294, %v731
      %v733 = vpop.f32.mrf.mxu0
      %734 = vmatprep.mubr.bf16.mxu0 0
      %735 = vmatmul.mubr.bf16.gmra.mxu0 %v500
      %v736 = vpop.f32.mrf.mxu0
      %v737 = vadd.f32 %v294, %v736
      %v738 = vpop.f32.mrf.mxu0
      %v739 = vpop.f32.mrf.mxu0
      %v740 = vadd.f32 %v294, %v739
      %v741 = vpop.f32.mrf.mxu0
      %742 = vmatprep.mubr.bf16.mxu0 0
      %743 = vmatmul.mubr.bf16.gmra.mxu0 %v501
      %v744 = vpop.f32.mrf.mxu0
      %v745 = vadd.f32 %v294, %v744
      %v746 = vpop.f32.mrf.mxu0
      %v747 = vpop.f32.mrf.mxu0
      %v748 = vadd.f32 %v294, %v747
      %v749 = vpop.f32.mrf.mxu0
      %750 = vmatprep.mubr.bf16.mxu0 0
      %751 = vmatmul.mubr.bf16.gmra.mxu0 %v502
      %v752 = vpop.f32.mrf.mxu0
      %v753 = vadd.f32 %v294, %v752
      %v754 = vpop.f32.mrf.mxu0
      %v755 = vpop.f32.mrf.mxu0
      %v756 = vadd.f32 %v294, %v755
      %v757 = vpop.f32.mrf.mxu0
      %758 = vmatprep.mubr.bf16.mxu0 0
      %759 = vmatmul.mubr.bf16.gmra.mxu0 %v503
      %v760 = vpop.f32.mrf.mxu0
      %v761 = vadd.f32 %v294, %v760
      %v762 = vpop.f32.mrf.mxu0
      %v763 = vpop.f32.mrf.mxu0
      %v764 = vadd.f32 %v294, %v763
      %v765 = vpop.f32.mrf.mxu0
      %766 = vmatprep.mubr.bf16.mxu0 0
      %767 = vmatmul.mubr.bf16.gmra.mxu0 %v504
      %v768 = vpop.f32.mrf.mxu0
      %v769 = vadd.f32 %v294, %v768
      %v770 = vpop.f32.mrf.mxu0
      %v771 = vpop.f32.mrf.mxu0
      %v772 = vadd.f32 %v294, %v771
      %v773 = vpop.f32.mrf.mxu0
      %774 = vmatprep.mubr.bf16.mxu0 0
      %775 = vmatmul.mubr.bf16.gmra.mxu0 %v505
      %v776 = vpop.f32.mrf.mxu0
      %v777 = vadd.f32 %v294, %v776
      %v778 = vpop.f32.mrf.mxu0
      %v779 = vpop.f32.mrf.mxu0
      %v780 = vadd.f32 %v294, %v779
      %v781 = vpop.f32.mrf.mxu0
      %782 = vmatprep.mubr.bf16.mxu0 0
      %783 = vmatmul.mubr.bf16.gmra.mxu0 %v506
      %v784 = vpop.f32.mrf.mxu0
      %v785 = vadd.f32 %v294, %v784
      %v786 = vpop.f32.mrf.mxu0
      %v787 = vpop.f32.mrf.mxu0
      %v788 = vadd.f32 %v294, %v787
      %v789 = vpop.f32.mrf.mxu0
      %790 = vmatprep.mubr.bf16.mxu0 0
      %791 = vmatmul.mubr.bf16.gmra.mxu0 %v507
      %v792 = vpop.f32.mrf.mxu0
      %v793 = vadd.f32 %v294, %v792
      %v794 = vpop.f32.mrf.mxu0
      %v795 = vpop.f32.mrf.mxu0
      %v796 = vadd.f32 %v294, %v795
      %v797 = vpop.f32.mrf.mxu0
      %798 = vmatprep.mubr.bf16.mxu0 0
      %799 = vmatmul.mubr.bf16.gmra.mxu0 %v508
      %v800 = vpop.f32.mrf.mxu0
      %v801 = vadd.f32 %v294, %v800
      %v802 = vpop.f32.mrf.mxu0
      %v803 = vpop.f32.mrf.mxu0
      %v804 = vadd.f32 %v294, %v803
      %v805 = vpop.f32.mrf.mxu0
      %806 = vmatprep.mubr.bf16.mxu0 0
      %807 = vmatmul.mubr.bf16.gmra.mxu0 %v509
      %v808 = vpop.f32.mrf.mxu0
      %v809 = vadd.f32 %v294, %v808
      %v810 = vpop.f32.mrf.mxu0
      %v811 = vpop.f32.mrf.mxu0
      %v812 = vadd.f32 %v294, %v811
      %v813 = vpop.f32.mrf.mxu0
      %814 = vmatprep.mubr.bf16.mxu0 0
      %815 = vmatmul.mubr.bf16.gmra.mxu0 %v510
      %v816 = vpop.f32.mrf.mxu0
      %v817 = vadd.f32 %v294, %v816
      %v818 = vpop.f32.mrf.mxu0
      %v819 = vpop.f32.mrf.mxu0
      %v820 = vadd.f32 %v294, %v819
      %v821 = vpop.f32.mrf.mxu0
      %822 = vmatprep.mubr.bf16.mxu0 0
      %823 = vmatmul.mubr.bf16.gmra.mxu0 %v511
      %v824 = vpop.f32.mrf.mxu0
      %v825 = vadd.f32 %v294, %v824
      %v826 = vpop.f32.mrf.mxu0
      %v827 = vpop.f32.mrf.mxu0
      %v828 = vadd.f32 %v294, %v827
      %v829 = vpop.f32.mrf.mxu0
      %830 = vmatprep.mubr.bf16.mxu0 0
      %831 = vmatmul.mubr.bf16.gmra.mxu0 %v512
      %v832 = vpop.f32.mrf.mxu0
      %v833 = vadd.f32 %v294, %v832
      %v834 = vpop.f32.mrf.mxu0
      %v835 = vpop.f32.mrf.mxu0
      %v836 = vadd.f32 %v294, %v835
      %v837 = vpop.f32.mrf.mxu0
      %838 = vmatprep.mubr.bf16.mxu0 0
      %839 = vmatmul.mubr.bf16.gmra.mxu0 %v513
      %v840 = vpop.f32.mrf.mxu0
      %v841 = vadd.f32 %v294, %v840
      %v842 = vpop.f32.mrf.mxu0
      %v843 = vpop.f32.mrf.mxu0
      %v844 = vadd.f32 %v294, %v843
      %v845 = vpop.f32.mrf.mxu0
      %846 = vmatprep.mubr.bf16.mxu0 0
      %847 = vmatmul.mubr.bf16.gmra.mxu0 %v514
      %v848 = vpop.f32.mrf.mxu0
      %v849 = vadd.f32 %v294, %v848
      %v850 = vpop.f32.mrf.mxu0
      %v851 = vpop.f32.mrf.mxu0
      %v852 = vadd.f32 %v294, %v851
      %v853 = vpop.f32.mrf.mxu0
      %854 = vmatprep.mubr.bf16.mxu0 0
      %855 = vmatmul.mubr.bf16.gmra.mxu0 %v515
      %v856 = vpop.f32.mrf.mxu0
      %v857 = vadd.f32 %v294, %v856
      %v858 = vpop.f32.mrf.mxu0
      %v859 = vpop.f32.mrf.mxu0
      %v860 = vadd.f32 %v294, %v859
      %v861 = vpop.f32.mrf.mxu0
      %862 = vmatprep.mubr.bf16.mxu0 0
      %863 = vmatmul.mubr.bf16.gmra.mxu0 %v516
      %v864 = vpop.f32.mrf.mxu0
      %v865 = vadd.f32 %v294, %v864
      %v866 = vpop.f32.mrf.mxu0
      %v867 = vpop.f32.mrf.mxu0
      %v868 = vadd.f32 %v294, %v867
      %v869 = vpop.f32.mrf.mxu0
      %870 = vmatprep.mubr.bf16.mxu0 0
      %871 = vmatmul.mubr.bf16.gmra.mxu0 %v517
      %v872 = vpop.f32.mrf.mxu0
      %v873 = vadd.f32 %v294, %v872
      %v874 = vpop.f32.mrf.mxu0
      %v875 = vpop.f32.mrf.mxu0
      %v876 = vadd.f32 %v294, %v875
      %v877 = vpop.f32.mrf.mxu0
      %878 = vmatprep.mubr.bf16.mxu0 0
      %879 = vmatmul.mubr.bf16.gmra.mxu0 %v518
      %v880 = vpop.f32.mrf.mxu0
      %v881 = vadd.f32 %v294, %v880
      %v882 = vpop.f32.mrf.mxu0
      %v883 = vpop.f32.mrf.mxu0
      %v884 = vadd.f32 %v294, %v883
      %v885 = vpop.f32.mrf.mxu0
      %886 = vmatprep.mubr.bf16.mxu0 0
      %887 = vmatmul.mubr.bf16.gmra.mxu0 %v519
      %v888 = vpop.f32.mrf.mxu0
      %v889 = vadd.f32 %v294, %v888
      %v890 = vpop.f32.mrf.mxu0
      %v891 = vpop.f32.mrf.mxu0
      %v892 = vadd.f32 %v294, %v891
      %v893 = vpop.f32.mrf.mxu0
      %894 = vmatprep.mubr.bf16.mxu0 0
      %895 = vmatmul.mubr.bf16.gmra.mxu0 %v520
      %v896 = vpop.f32.mrf.mxu0
      %v897 = vadd.f32 %v294, %v896
      %v898 = vpop.f32.mrf.mxu0
      %v899 = vpop.f32.mrf.mxu0
      %v900 = vadd.f32 %v294, %v899
      %v901 = vpop.f32.mrf.mxu0
      %902 = vmatprep.mubr.bf16.mxu0 0
      %903 = vmatmul.mubr.bf16.gmra.mxu0 %v521
      %v904 = vpop.f32.mrf.mxu0
      %v905 = vadd.f32 %v294, %v904
      %v906 = vpop.f32.mrf.mxu0
      %v907 = vpop.f32.mrf.mxu0
      %v908 = vadd.f32 %v294, %v907
      %v909 = vpop.f32.mrf.mxu0
      %910 = vmatprep.mubr.bf16.mxu0 0
      %911 = vmatmul.mubr.bf16.gmra.mxu0 %v522
      %v912 = vpop.f32.mrf.mxu0
      %v913 = vadd.f32 %v294, %v912
      %v914 = vpop.f32.mrf.mxu0
      %v915 = vpop.f32.mrf.mxu0
      %v916 = vadd.f32 %v294, %v915
      %v917 = vpop.f32.mrf.mxu0
      %918 = vmatprep.mubr.bf16.mxu0 0
      %919 = vmatmul.mubr.bf16.gmra.mxu0 %v523
      %v920 = vpop.f32.mrf.mxu0
      %v921 = vadd.f32 %v294, %v920
      %v922 = vpop.f32.mrf.mxu0
      %v923 = vpop.f32.mrf.mxu0
      %v924 = vadd.f32 %v294, %v923
      %v925 = vpop.f32.mrf.mxu0
      %926 = vmatprep.mubr.bf16.mxu0 0
      %927 = vmatmul.mubr.bf16.gmra.mxu0 %v524
      %v928 = vpop.f32.mrf.mxu0
      %v929 = vadd.f32 %v294, %v928
      %v930 = vpop.f32.mrf.mxu0
      %v931 = vpop.f32.mrf.mxu0
      %v932 = vadd.f32 %v294, %v931
      %v933 = vpop.f32.mrf.mxu0
      %934 = vmatprep.mubr.bf16.mxu0 0
      %935 = vmatmul.mubr.bf16.gmra.mxu0 %v525
      %v936 = vpop.f32.mrf.mxu0
      %v937 = vadd.f32 %v294, %v936
      %v938 = vpop.f32.mrf.mxu0
      %v939 = vpop.f32.mrf.mxu0
      %v940 = vadd.f32 %v294, %v939
      %v941 = vpop.f32.mrf.mxu0
      %942 = vmatprep.mubr.bf16.mxu0 0
      %943 = vmatmul.mubr.bf16.gmra.mxu0 %v526
      %v944 = vpop.f32.mrf.mxu0
      %v945 = vadd.f32 %v294, %v944
      %v946 = vpop.f32.mrf.mxu0
      %v947 = vpop.f32.mrf.mxu0
      %v948 = vadd.f32 %v294, %v947
      %v949 = vpop.f32.mrf.mxu0
      %950 = vmatprep.mubr.bf16.mxu0 0
      %951 = vmatmul.mubr.bf16.gmra.mxu0 %v527
      %v952 = vpop.f32.mrf.mxu0
      %v953 = vadd.f32 %v294, %v952
      %v954 = vpop.f32.mrf.mxu0
      %v955 = vpop.f32.mrf.mxu0
      %v956 = vadd.f32 %v294, %v955
      %v957 = vpop.f32.mrf.mxu0
      %958 = vmatprep.mubr.bf16.mxu0 0
      %959 = vmatmul.mubr.bf16.gmra.mxu0 %v528
      %v960 = vpop.f32.mrf.mxu0
      %v961 = vadd.f32 %v294, %v960
      %v962 = vpop.f32.mrf.mxu0
      %v963 = vpop.f32.mrf.mxu0
      %v964 = vadd.f32 %v294, %v963
      %v965 = vpop.f32.mrf.mxu0
      %966 = vmatprep.mubr.bf16.mxu0 0
      %967 = vmatmul.mubr.bf16.gmra.mxu0 %v529
      %v968 = vpop.f32.mrf.mxu0
      %v969 = vadd.f32 %v294, %v968
      %v970 = vpop.f32.mrf.mxu0
      %v971 = vpop.f32.mrf.mxu0
      %v972 = vadd.f32 %v294, %v971
      %v973 = vpop.f32.mrf.mxu0
      %974 = vmatprep.mubr.bf16.mxu0 0
      %975 = vmatmul.mubr.bf16.gmra.mxu0 %v530
      %v976 = vpop.f32.mrf.mxu0
      %v977 = vadd.f32 %v294, %v976
      %v978 = vpop.f32.mrf.mxu0
      %v979 = vpop.f32.mrf.mxu0
      %v980 = vadd.f32 %v294, %v979
      %v981 = vpop.f32.mrf.mxu0
      %982 = vmatprep.mubr.bf16.mxu0 0
      %983 = vmatmul.mubr.bf16.gmra.mxu0 %v531
      %v984 = vpop.f32.mrf.mxu0
      %v985 = vadd.f32 %v294, %v984
      %v986 = vpop.f32.mrf.mxu0
      %v987 = vpop.f32.mrf.mxu0
      %v988 = vadd.f32 %v294, %v987
      %v989 = vpop.f32.mrf.mxu0
      %990 = vmatprep.mubr.bf16.mxu0 0
      %991 = vmatmul.mubr.bf16.gmra.mxu0 %v532
      %v992 = vpop.f32.mrf.mxu0
      %v993 = vadd.f32 %v294, %v992
      %v994 = vpop.f32.mrf.mxu0
      %v995 = vpop.f32.mrf.mxu0
      %v996 = vadd.f32 %v294, %v995
      %v997 = vpop.f32.mrf.mxu0
      %998 = vmatprep.mubr.bf16.mxu0 0
      %999 = vmatmul.mubr.bf16.gmra.mxu0 %v533
      %v1000 = vpop.f32.mrf.mxu0
      %v1001 = vadd.f32 %v294, %v1000
      %v1002 = vpop.f32.mrf.mxu0
      %v1003 = vpop.f32.mrf.mxu0
      %v1004 = vadd.f32 %v294, %v1003
      %v1005 = vpop.f32.mrf.mxu0
      %1006 = vmatprep.mubr.bf16.mxu0 0
      %1007 = vmatmul.mubr.bf16.gmra.mxu0 %v534
      %v1008 = vpop.f32.mrf.mxu0
      %v1009 = vadd.f32 %v294, %v1008
      %v1010 = vpop.f32.mrf.mxu0
      %v1011 = vpop.f32.mrf.mxu0
      %v1012 = vadd.f32 %v294, %v1011
      %v1013 = vpop.f32.mrf.mxu0
      %1014 = vmatprep.mubr.bf16.mxu0 0
      %1015 = vmatmul.mubr.bf16.gmra.mxu0 %v535
      %v1016 = vpop.f32.mrf.mxu0
      %v1017 = vadd.f32 %v294, %v1016
      %v1018 = vpop.f32.mrf.mxu0
      %v1019 = vpop.f32.mrf.mxu0
      %v1020 = vadd.f32 %v294, %v1019
      %v1021 = vpop.f32.mrf.mxu0
      %1022 = vmatprep.mubr.bf16.mxu0 0
      %1023 = vmatmul.mubr.bf16.gmra.mxu0 %v536
      %v1024 = vpop.f32.mrf.mxu0
      %v1025 = vadd.f32 %v294, %v1024
      %v1026 = vpop.f32.mrf.mxu0
      %v1027 = vpop.f32.mrf.mxu0
      %v1028 = vadd.f32 %v294, %v1027
      %v1029 = vpop.f32.mrf.mxu0
      %1030 = vmatprep.mubr.bf16.mxu0 0
      %1031 = vmatmul.mubr.bf16.gmra.mxu0 %v537
      %v1032 = vpop.f32.mrf.mxu0
      %v1033 = vadd.f32 %v294, %v1032
      %v1034 = vpop.f32.mrf.mxu0
      %v1035 = vpop.f32.mrf.mxu0
      %v1036 = vadd.f32 %v294, %v1035
      %v1037 = vpop.f32.mrf.mxu0
      %1038 = vmatprep.mubr.bf16.mxu0 0
      %1039 = vmatmul.mubr.bf16.gmra.mxu0 %v538
      %v1040 = vpop.f32.mrf.mxu0
      %v1041 = vadd.f32 %v294, %v1040
      %v1042 = vpop.f32.mrf.mxu0
      %v1043 = vpop.f32.mrf.mxu0
      %v1044 = vadd.f32 %v294, %v1043
      %v1045 = vpop.f32.mrf.mxu0
      %1046 = vmatprep.mubr.bf16.mxu0 0
      %1047 = vmatmul.mubr.bf16.gmra.mxu0 %v539
      %v1048 = vpop.f32.mrf.mxu0
      %v1049 = vadd.f32 %v294, %v1048
      %v1050 = vpop.f32.mrf.mxu0
      %v1051 = vpop.f32.mrf.mxu0
      %v1052 = vadd.f32 %v294, %v1051
      %v1053 = vpop.f32.mrf.mxu0
      %1054 = vmatprep.mubr.bf16.mxu0 0
      %1055 = vmatmul.mubr.bf16.gmra.mxu0 %v540
      %v1056 = vpop.f32.mrf.mxu0
      %v1057 = vadd.f32 %v294, %v1056
      %v1058 = vpop.f32.mrf.mxu0
      %v1059 = vpop.f32.mrf.mxu0
      %v1060 = vadd.f32 %v294, %v1059
      %v1061 = vpop.f32.mrf.mxu0
      %1062 = vdwg.mxu0
      %v1063 = vmax.f32 %v673, 0.0
      %v1064 = vmax.f32 %v676, 0.0
      %v1065 = vmax.f32 %v681, 0.0
      %v1066 = vmax.f32 %v684, 0.0
      %v1067 = vmax.f32 %v689, 0.0
      %v1068 = vmax.f32 %v692, 0.0
      %v1069 = vmax.f32 %v697, 0.0
      %v1070 = vmax.f32 %v700, 0.0
      %v1071 = vmax.f32 %v705, 0.0
      %v1072 = vmax.f32 %v708, 0.0
      %v1073 = vmax.f32 %v713, 0.0
      %v1074 = vmax.f32 %v716, 0.0
      %v1075 = vmax.f32 %v721, 0.0
      %v1076 = vmax.f32 %v724, 0.0
      %v1077 = vmax.f32 %v729, 0.0
      %v1078 = vmax.f32 %v732, 0.0
      %v1079 = vmax.f32 %v737, 0.0
      %v1080 = vmax.f32 %v740, 0.0
      %v1081 = vmax.f32 %v745, 0.0
      %v1082 = vmax.f32 %v748, 0.0
      %v1083 = vmax.f32 %v753, 0.0
      %v1084 = vmax.f32 %v756, 0.0
      %v1085 = vmax.f32 %v761, 0.0
      %v1086 = vmax.f32 %v764, 0.0
      %v1087 = vmax.f32 %v769, 0.0
      %v1088 = vmax.f32 %v772, 0.0
      %v1089 = vmax.f32 %v777, 0.0
      %v1090 = vmax.f32 %v780, 0.0
      %v1091 = vmax.f32 %v785, 0.0
      %v1092 = vmax.f32 %v788, 0.0
      %v1093 = vmax.f32 %v793, 0.0
      %v1094 = vmax.f32 %v796, 0.0
      %v1095 = vmax.f32 %v801, 0.0
      %v1096 = vmax.f32 %v804, 0.0
      %v1097 = vmax.f32 %v809, 0.0
      %v1098 = vmax.f32 %v812, 0.0
      %v1099 = vmax.f32 %v817, 0.0
      %v1100 = vmax.f32 %v820, 0.0
      %v1101 = vmax.f32 %v825, 0.0
      %v1102 = vmax.f32 %v828, 0.0
      %v1103 = vmax.f32 %v833, 0.0
      %v1104 = vmax.f32 %v836, 0.0
      %v1105 = vmax.f32 %v841, 0.0
      %v1106 = vmax.f32 %v844, 0.0
      %v1107 = vmax.f32 %v849, 0.0
      %v1108 = vmax.f32 %v852, 0.0
      %v1109 = vmax.f32 %v857, 0.0
      %v1110 = vmax.f32 %v860, 0.0
      %v1111 = vmax.f32 %v865, 0.0
      %v1112 = vmax.f32 %v868, 0.0
      %v1113 = vmax.f32 %v873, 0.0
      %v1114 = vmax.f32 %v876, 0.0
      %v1115 = vmax.f32 %v881, 0.0
      %v1116 = vmax.f32 %v884, 0.0
      %v1117 = vmax.f32 %v889, 0.0
      %v1118 = vmax.f32 %v892, 0.0
      %v1119 = vmax.f32 %v897, 0.0
      %v1120 = vmax.f32 %v900, 0.0
      %v1121 = vmax.f32 %v905, 0.0
      %v1122 = vmax.f32 %v908, 0.0
      %v1123 = vmax.f32 %v913, 0.0
      %v1124 = vmax.f32 %v916, 0.0
      %v1125 = vmax.f32 %v921, 0.0
      %v1126 = vmax.f32 %v924, 0.0
      %v1127 = vmax.f32 %v929, 0.0
      %v1128 = vmax.f32 %v932, 0.0
      %v1129 = vmax.f32 %v937, 0.0
      %v1130 = vmax.f32 %v940, 0.0
      %v1131 = vmax.f32 %v945, 0.0
      %v1132 = vmax.f32 %v948, 0.0
      %v1133 = vmax.f32 %v953, 0.0
      %v1134 = vmax.f32 %v956, 0.0
      %v1135 = vmax.f32 %v961, 0.0
      %v1136 = vmax.f32 %v964, 0.0
      %v1137 = vmax.f32 %v969, 0.0
      %v1138 = vmax.f32 %v972, 0.0
      %v1139 = vmax.f32 %v977, 0.0
      %v1140 = vmax.f32 %v980, 0.0
      %v1141 = vmax.f32 %v985, 0.0
      %v1142 = vmax.f32 %v988, 0.0
      %v1143 = vmax.f32 %v993, 0.0
      %v1144 = vmax.f32 %v996, 0.0
      %v1145 = vmax.f32 %v1001, 0.0
      %v1146 = vmax.f32 %v1004, 0.0
      %v1147 = vmax.f32 %v1009, 0.0
      %v1148 = vmax.f32 %v1012, 0.0
      %v1149 = vmax.f32 %v1017, 0.0
      %v1150 = vmax.f32 %v1020, 0.0
      %v1151 = vmax.f32 %v1025, 0.0
      %v1152 = vmax.f32 %v1028, 0.0
      %v1153 = vmax.f32 %v1033, 0.0
      %v1154 = vmax.f32 %v1036, 0.0
      %v1155 = vmax.f32 %v1041, 0.0
      %v1156 = vmax.f32 %v1044, 0.0
      %v1157 = vmax.f32 %v1049, 0.0
      %v1158 = vmax.f32 %v1052, 0.0
      %v1159 = vmax.f32 %v1057, 0.0
      %v1160 = vmax.f32 %v1060, 0.0
      %v1161 = vpack.c.bf16 %v1064, %v1063
      %v1162 = vpack.c.bf16 %v1066, %v1065
      %v1163 = vpack.c.bf16 %v1068, %v1067
      %v1164 = vpack.c.bf16 %v1070, %v1069
      %v1165 = vpack.c.bf16 %v1072, %v1071
      %v1166 = vpack.c.bf16 %v1074, %v1073
      %v1167 = vpack.c.bf16 %v1076, %v1075
      %v1168 = vpack.c.bf16 %v1078, %v1077
      %v1169 = vpack.c.bf16 %v1080, %v1079
      %v1170 = vpack.c.bf16 %v1082, %v1081
      %v1171 = vpack.c.bf16 %v1084, %v1083
      %v1172 = vpack.c.bf16 %v1086, %v1085
      %v1173 = vpack.c.bf16 %v1088, %v1087
      %v1174 = vpack.c.bf16 %v1090, %v1089
      %v1175 = vpack.c.bf16 %v1092, %v1091
      %v1176 = vpack.c.bf16 %v1094, %v1093
      %v1177 = vpack.c.bf16 %v1096, %v1095
      %v1178 = vpack.c.bf16 %v1098, %v1097
      %v1179 = vpack.c.bf16 %v1100, %v1099
      %v1180 = vpack.c.bf16 %v1102, %v1101
      %v1181 = vpack.c.bf16 %v1104, %v1103
      %v1182 = vpack.c.bf16 %v1106, %v1105
      %v1183 = vpack.c.bf16 %v1108, %v1107
      %v1184 = vpack.c.bf16 %v1110, %v1109
      %v1185 = vpack.c.bf16 %v1112, %v1111
      %v1186 = vpack.c.bf16 %v1114, %v1113
      %v1187 = vpack.c.bf16 %v1116, %v1115
      %v1188 = vpack.c.bf16 %v1118, %v1117
      %v1189 = vpack.c.bf16 %v1120, %v1119
      %v1190 = vpack.c.bf16 %v1122, %v1121
      %v1191 = vpack.c.bf16 %v1124, %v1123
      %v1192 = vpack.c.bf16 %v1126, %v1125
      %v1193 = vpack.c.bf16 %v1128, %v1127
      %v1194 = vpack.c.bf16 %v1130, %v1129
      %v1195 = vpack.c.bf16 %v1132, %v1131
      %v1196 = vpack.c.bf16 %v1134, %v1133
      %v1197 = vpack.c.bf16 %v1136, %v1135
      %v1198 = vpack.c.bf16 %v1138, %v1137
      %v1199 = vpack.c.bf16 %v1140, %v1139
      %v1200 = vpack.c.bf16 %v1142, %v1141
      %v1201 = vpack.c.bf16 %v1144, %v1143
      %v1202 = vpack.c.bf16 %v1146, %v1145
      %v1203 = vpack.c.bf16 %v1148, %v1147
      %v1204 = vpack.c.bf16 %v1150, %v1149
      %v1205 = vpack.c.bf16 %v1152, %v1151
      %v1206 = vpack.c.bf16 %v1154, %v1153
      %v1207 = vpack.c.bf16 %v1156, %v1155
      %v1208 = vpack.c.bf16 %v1158, %v1157
      %v1209 = vpack.c.bf16 %v1160, %v1159
      %v1259 = vunpack.c.l.b16 %v1161
      %v1260 = vunpack.c.h.b16 %v1161
      %v1261 = vunpack.c.l.b16 %v1162
      %v1262 = vunpack.c.h.b16 %v1162
      %v1263 = vunpack.c.l.b16 %v1163
      %v1264 = vunpack.c.h.b16 %v1163
      %v1265 = vunpack.c.l.b16 %v1164
      %v1266 = vunpack.c.h.b16 %v1164
      %v1267 = vunpack.c.l.b16 %v1165
      %v1268 = vunpack.c.h.b16 %v1165
      %v1269 = vunpack.c.l.b16 %v1166
      %v1270 = vunpack.c.h.b16 %v1166
      %v1271 = vunpack.c.l.b16 %v1167
      %v1272 = vunpack.c.h.b16 %v1167
      %v1273 = vunpack.c.l.b16 %v1168
      %v1274 = vunpack.c.h.b16 %v1168
      %v1275 = vunpack.c.l.b16 %v1169
      %v1276 = vunpack.c.h.b16 %v1169
      %v1277 = vunpack.c.l.b16 %v1170
      %v1278 = vunpack.c.h.b16 %v1170
      %v1279 = vunpack.c.l.b16 %v1171
      %v1280 = vunpack.c.h.b16 %v1171
      %v1281 = vunpack.c.l.b16 %v1172
      %v1282 = vunpack.c.h.b16 %v1172
      %v1283 = vunpack.c.l.b16 %v1173
      %v1284 = vunpack.c.h.b16 %v1173
      %v1285 = vunpack.c.l.b16 %v1174
      %v1286 = vunpack.c.h.b16 %v1174
      %v1287 = vunpack.c.l.b16 %v1175
      %v1288 = vunpack.c.h.b16 %v1175
      %v1289 = vunpack.c.l.b16 %v1176
      %v1290 = vunpack.c.h.b16 %v1176
      %v1291 = vunpack.c.l.b16 %v1177
      %v1292 = vunpack.c.h.b16 %v1177
      %v1293 = vunpack.c.l.b16 %v1178
      %v1294 = vunpack.c.h.b16 %v1178
      %v1295 = vunpack.c.l.b16 %v1179
      %v1296 = vunpack.c.h.b16 %v1179
      %v1297 = vunpack.c.l.b16 %v1180
      %v1298 = vunpack.c.h.b16 %v1180
      %v1299 = vunpack.c.l.b16 %v1181
      %v1300 = vunpack.c.h.b16 %v1181
      %v1301 = vunpack.c.l.b16 %v1182
      %v1302 = vunpack.c.h.b16 %v1182
      %v1303 = vunpack.c.l.b16 %v1183
      %v1304 = vunpack.c.h.b16 %v1183
      %v1305 = vunpack.c.l.b16 %v1184
      %v1306 = vunpack.c.h.b16 %v1184
      %v1307 = vunpack.c.l.b16 %v1185
      %v1308 = vunpack.c.h.b16 %v1185
      %v1309 = vunpack.c.l.b16 %v1186
      %v1310 = vunpack.c.h.b16 %v1186
      %v1311 = vunpack.c.l.b16 %v1187
      %v1312 = vunpack.c.h.b16 %v1187
      %v1313 = vunpack.c.l.b16 %v1188
      %v1314 = vunpack.c.h.b16 %v1188
      %v1315 = vunpack.c.l.b16 %v1189
      %v1316 = vunpack.c.h.b16 %v1189
      %v1317 = vunpack.c.l.b16 %v1190
      %v1318 = vunpack.c.h.b16 %v1190
      %v1319 = vunpack.c.l.b16 %v1191
      %v1320 = vunpack.c.h.b16 %v1191
      %v1321 = vunpack.c.l.b16 %v1192
      %v1322 = vunpack.c.h.b16 %v1192
      %v1323 = vunpack.c.l.b16 %v1193
      %v1324 = vunpack.c.h.b16 %v1193
      %v1325 = vunpack.c.l.b16 %v1194
      %v1326 = vunpack.c.h.b16 %v1194
      %v1327 = vunpack.c.l.b16 %v1195
      %v1328 = vunpack.c.h.b16 %v1195
      %v1329 = vunpack.c.l.b16 %v1196
      %v1330 = vunpack.c.h.b16 %v1196
      %v1331 = vunpack.c.l.b16 %v1197
      %v1332 = vunpack.c.h.b16 %v1197
      %v1333 = vunpack.c.l.b16 %v1198
      %v1334 = vunpack.c.h.b16 %v1198
      %v1335 = vunpack.c.l.b16 %v1199
      %v1336 = vunpack.c.h.b16 %v1199
      %v1337 = vunpack.c.l.b16 %v1200
      %v1338 = vunpack.c.h.b16 %v1200
      %v1339 = vunpack.c.l.b16 %v1201
      %v1340 = vunpack.c.h.b16 %v1201
      %v1341 = vunpack.c.l.b16 %v1202
      %v1342 = vunpack.c.h.b16 %v1202
      %v1343 = vunpack.c.l.b16 %v1203
      %v1344 = vunpack.c.h.b16 %v1203
      %v1345 = vunpack.c.l.b16 %v1204
      %v1346 = vunpack.c.h.b16 %v1204
      %v1347 = vunpack.c.l.b16 %v1205
      %v1348 = vunpack.c.h.b16 %v1205
      %v1349 = vunpack.c.l.b16 %v1206
      %v1350 = vunpack.c.h.b16 %v1206
      %v1351 = vunpack.c.l.b16 %v1207
      %v1352 = vunpack.c.h.b16 %v1207
      %v1353 = vunpack.c.l.b16 %v1208
      %v1354 = vunpack.c.h.b16 %v1208
      %v1355 = vunpack.c.l.b16 %v1209
      %v1356 = vunpack.c.h.b16 %v1209
      %v1357 = vpack.c.b16 %v1259, %v1259
      %v1358 = vpack.c.b16 %v1260, %v1260
      %v1359 = vpack.c.b16 %v1261, %v1261
      %v1360 = vpack.c.b16 %v1262, %v1262
      %v1361 = vpack.c.b16 %v1263, %v1263
      %v1362 = vpack.c.b16 %v1264, %v1264
      %v1363 = vpack.c.b16 %v1265, %v1265
      %v1364 = vpack.c.b16 %v1266, %v1266
      %v1365 = vpack.c.b16 %v1267, %v1267
      %v1366 = vpack.c.b16 %v1268, %v1268
      %v1367 = vpack.c.b16 %v1269, %v1269
      %v1368 = vpack.c.b16 %v1270, %v1270
      %v1369 = vpack.c.b16 %v1271, %v1271
      %v1370 = vpack.c.b16 %v1272, %v1272
      %v1371 = vpack.c.b16 %v1273, %v1273
      %v1372 = vpack.c.b16 %v1274, %v1274
      %v1373 = vpack.c.b16 %v1275, %v1275
      %v1374 = vpack.c.b16 %v1276, %v1276
      %v1375 = vpack.c.b16 %v1277, %v1277
      %v1376 = vpack.c.b16 %v1278, %v1278
      %v1377 = vpack.c.b16 %v1279, %v1279
      %v1378 = vpack.c.b16 %v1280, %v1280
      %v1379 = vpack.c.b16 %v1281, %v1281
      %v1380 = vpack.c.b16 %v1282, %v1282
      %v1381 = vpack.c.b16 %v1283, %v1283
      %v1382 = vpack.c.b16 %v1284, %v1284
      %v1383 = vpack.c.b16 %v1285, %v1285
      %v1384 = vpack.c.b16 %v1286, %v1286
      %v1385 = vpack.c.b16 %v1287, %v1287
      %v1386 = vpack.c.b16 %v1288, %v1288
      %v1387 = vpack.c.b16 %v1289, %v1289
      %v1388 = vpack.c.b16 %v1290, %v1290
      %v1389 = vpack.c.b16 %v1291, %v1291
      %v1390 = vpack.c.b16 %v1292, %v1292
      %v1391 = vpack.c.b16 %v1293, %v1293
      %v1392 = vpack.c.b16 %v1294, %v1294
      %v1393 = vpack.c.b16 %v1295, %v1295
      %v1394 = vpack.c.b16 %v1296, %v1296
      %v1395 = vpack.c.b16 %v1297, %v1297
      %v1396 = vpack.c.b16 %v1298, %v1298
      %v1397 = vpack.c.b16 %v1299, %v1299
      %v1398 = vpack.c.b16 %v1300, %v1300
      %v1399 = vpack.c.b16 %v1301, %v1301
      %v1400 = vpack.c.b16 %v1302, %v1302
      %v1401 = vpack.c.b16 %v1303, %v1303
      %v1402 = vpack.c.b16 %v1304, %v1304
      %v1403 = vpack.c.b16 %v1305, %v1305
      %v1404 = vpack.c.b16 %v1306, %v1306
      %v1405 = vpack.c.b16 %v1307, %v1307
      %v1406 = vpack.c.b16 %v1308, %v1308
      %v1407 = vpack.c.b16 %v1309, %v1309
      %v1408 = vpack.c.b16 %v1310, %v1310
      %v1409 = vpack.c.b16 %v1311, %v1311
      %v1410 = vpack.c.b16 %v1312, %v1312
      %v1411 = vpack.c.b16 %v1313, %v1313
      %v1412 = vpack.c.b16 %v1314, %v1314
      %v1413 = vpack.c.b16 %v1315, %v1315
      %v1414 = vpack.c.b16 %v1316, %v1316
      %v1415 = vpack.c.b16 %v1317, %v1317
      %v1416 = vpack.c.b16 %v1318, %v1318
      %v1417 = vpack.c.b16 %v1319, %v1319
      %v1418 = vpack.c.b16 %v1320, %v1320
      %v1419 = vpack.c.b16 %v1321, %v1321
      %v1420 = vpack.c.b16 %v1322, %v1322
      %v1421 = vpack.c.b16 %v1323, %v1323
      %v1422 = vpack.c.b16 %v1324, %v1324
      %v1423 = vpack.c.b16 %v1325, %v1325
      %v1424 = vpack.c.b16 %v1326, %v1326
      %v1425 = vpack.c.b16 %v1327, %v1327
      %v1426 = vpack.c.b16 %v1328, %v1328
      %v1427 = vpack.c.b16 %v1329, %v1329
      %v1428 = vpack.c.b16 %v1330, %v1330
      %v1429 = vpack.c.b16 %v1331, %v1331
      %v1430 = vpack.c.b16 %v1332, %v1332
      %v1431 = vpack.c.b16 %v1333, %v1333
      %v1432 = vpack.c.b16 %v1334, %v1334
      %v1433 = vpack.c.b16 %v1335, %v1335
      %v1434 = vpack.c.b16 %v1336, %v1336
      %v1435 = vpack.c.b16 %v1337, %v1337
      %v1436 = vpack.c.b16 %v1338, %v1338
      %v1437 = vpack.c.b16 %v1339, %v1339
      %v1438 = vpack.c.b16 %v1340, %v1340
      %v1439 = vpack.c.b16 %v1341, %v1341
      %v1440 = vpack.c.b16 %v1342, %v1342
      %v1441 = vpack.c.b16 %v1343, %v1343
      %v1442 = vpack.c.b16 %v1344, %v1344
      %v1443 = vpack.c.b16 %v1345, %v1345
      %v1444 = vpack.c.b16 %v1346, %v1346
      %v1445 = vpack.c.b16 %v1347, %v1347
      %v1446 = vpack.c.b16 %v1348, %v1348
      %v1447 = vpack.c.b16 %v1349, %v1349
      %v1448 = vpack.c.b16 %v1350, %v1350
      %v1449 = vpack.c.b16 %v1351, %v1351
      %v1450 = vpack.c.b16 %v1352, %v1352
      %v1451 = vpack.c.b16 %v1353, %v1353
      %v1452 = vpack.c.b16 %v1354, %v1354
      %v1453 = vpack.c.b16 %v1355, %v1355
      %v1454 = vpack.c.b16 %v1356, %v1356
      %1553 = vst [vmem:[%s172] sm:$0xf] %v1357
      %1554 = vst [vmem:[%s172 + $0x4] sm:$0xf] %v1358
      %1555 = vst [vmem:[%s172 + $0x8] sm:$0xf] %v1359
      %1556 = vst [vmem:[%s172 + $0xc] sm:$0xf] %v1360
      %1557 = vst [vmem:[%s172 + $0x10] sm:$0xf] %v1361
      %1558 = vst [vmem:[%s172 + $0x14] sm:$0xf] %v1362
      %1559 = vst [vmem:[%s172 + $0x18] sm:$0xf] %v1363
      %1560 = vst [vmem:[%s172 + $0x1c] sm:$0xf] %v1364
      %1561 = vst [vmem:[%s172 + $0x20] sm:$0xf] %v1365
      %1562 = vst [vmem:[%s172 + $0x24] sm:$0xf] %v1366
      %1563 = vst [vmem:[%s172 + $0x28] sm:$0xf] %v1367
      %1564 = vst [vmem:[%s172 + $0x2c] sm:$0xf] %v1368
      %1565 = vst [vmem:[%s172 + $0x30] sm:$0xf] %v1369
      %1566 = vst [vmem:[%s172 + $0x34] sm:$0xf] %v1370
      %1567 = vst [vmem:[%s172 + $0x38] sm:$0xf] %v1371
      %1568 = vst [vmem:[%s172 + $0x3c] sm:$0xf] %v1372
      %1569 = vst [vmem:[%s172 + $0x40] sm:$0xf] %v1373
      %1570 = vst [vmem:[%s172 + $0x44] sm:$0xf] %v1374
      %1571 = vst [vmem:[%s172 + $0x48] sm:$0xf] %v1375
      %1572 = vst [vmem:[%s172 + $0x4c] sm:$0xf] %v1376
      %1573 = vst [vmem:[%s172 + $0x50] sm:$0xf] %v1377
      %1574 = vst [vmem:[%s172 + $0x54] sm:$0xf] %v1378
      %1575 = vst [vmem:[%s172 + $0x58] sm:$0xf] %v1379
      %1576 = vst [vmem:[%s172 + $0x5c] sm:$0xf] %v1380
      %1577 = vst [vmem:[%s172 + $0x60] sm:$0xf] %v1381
      %1578 = vst [vmem:[%s172 + $0x64] sm:$0xf] %v1382
      %1579 = vst [vmem:[%s172 + $0x68] sm:$0xf] %v1383
      %1580 = vst [vmem:[%s172 + $0x6c] sm:$0xf] %v1384
      %1581 = vst [vmem:[%s172 + $0x70] sm:$0xf] %v1385
      %1582 = vst [vmem:[%s172 + $0x74] sm:$0xf] %v1386
      %1583 = vst [vmem:[%s172 + $0x78] sm:$0xf] %v1387
      %1584 = vst [vmem:[%s172 + $0x7c] sm:$0xf] %v1388
      %1585 = vst [vmem:[%s172 + $0x80] sm:$0xf] %v1389
      %1586 = vst [vmem:[%s172 + $0x84] sm:$0xf] %v1390
      %1587 = vst [vmem:[%s172 + $0x88] sm:$0xf] %v1391
      %1588 = vst [vmem:[%s172 + $0x8c] sm:$0xf] %v1392
      %1589 = vst [vmem:[%s172 + $0x90] sm:$0xf] %v1393
      %1590 = vst [vmem:[%s172 + $0x94] sm:$0xf] %v1394
      %1591 = vst [vmem:[%s172 + $0x98] sm:$0xf] %v1395
      %1592 = vst [vmem:[%s172 + $0x9c] sm:$0xf] %v1396
      %1593 = vst [vmem:[%s172 + $0xa0] sm:$0xf] %v1397
      %1594 = vst [vmem:[%s172 + $0xa4] sm:$0xf] %v1398
      %1595 = vst [vmem:[%s172 + $0xa8] sm:$0xf] %v1399
      %1596 = vst [vmem:[%s172 + $0xac] sm:$0xf] %v1400
      %1597 = vst [vmem:[%s172 + $0xb0] sm:$0xf] %v1401
      %1598 = vst [vmem:[%s172 + $0xb4] sm:$0xf] %v1402
      %1599 = vst [vmem:[%s172 + $0xb8] sm:$0xf] %v1403
      %1600 = vst [vmem:[%s172 + $0xbc] sm:$0xf] %v1404
      %1601 = vst [vmem:[%s172 + $0xc0] sm:$0xf] %v1405
      %1602 = vst [vmem:[%s172 + $0xc4] sm:$0xf] %v1406
      %1603 = vst [vmem:[%s172 + $0xc8] sm:$0xf] %v1407
      %1604 = vst [vmem:[%s172 + $0xcc] sm:$0xf] %v1408
      %1605 = vst [vmem:[%s172 + $0xd0] sm:$0xf] %v1409
      %1606 = vst [vmem:[%s172 + $0xd4] sm:$0xf] %v1410
      %1607 = vst [vmem:[%s172 + $0xd8] sm:$0xf] %v1411
      %1608 = vst [vmem:[%s172 + $0xdc] sm:$0xf] %v1412
      %1609 = vst [vmem:[%s172 + $0xe0] sm:$0xf] %v1413
      %1610 = vst [vmem:[%s172 + $0xe4] sm:$0xf] %v1414
      %1611 = vst [vmem:[%s172 + $0xe8] sm:$0xf] %v1415
      %1612 = vst [vmem:[%s172 + $0xec] sm:$0xf] %v1416
      %1613 = vst [vmem:[%s172 + $0xf0] sm:$0xf] %v1417
      %1614 = vst [vmem:[%s172 + $0xf4] sm:$0xf] %v1418
      %1615 = vst [vmem:[%s172 + $0xf8] sm:$0xf] %v1419
      %1616 = vst [vmem:[%s172 + $0xfc] sm:$0xf] %v1420
      %1617 = vst [vmem:[%s172 + $0x100] sm:$0xf] %v1421
      %1618 = vst [vmem:[%s172 + $0x104] sm:$0xf] %v1422
      %1619 = vst [vmem:[%s172 + $0x108] sm:$0xf] %v1423
      %1620 = vst [vmem:[%s172 + $0x10c] sm:$0xf] %v1424
      %1621 = vst [vmem:[%s172 + $0x110] sm:$0xf] %v1425
      %1622 = vst [vmem:[%s172 + $0x114] sm:$0xf] %v1426
      %1623 = vst [vmem:[%s172 + $0x118] sm:$0xf] %v1427
      %1624 = vst [vmem:[%s172 + $0x11c] sm:$0xf] %v1428
      %1625 = vst [vmem:[%s172 + $0x120] sm:$0xf] %v1429
      %1626 = vst [vmem:[%s172 + $0x124] sm:$0xf] %v1430
      %1627 = vst [vmem:[%s172 + $0x128] sm:$0xf] %v1431
      %1628 = vst [vmem:[%s172 + $0x12c] sm:$0xf] %v1432
      %1629 = vst [vmem:[%s172 + $0x130] sm:$0xf] %v1433
      %1630 = vst [vmem:[%s172 + $0x134] sm:$0xf] %v1434
      %1631 = vst [vmem:[%s172 + $0x138] sm:$0xf] %v1435
      %1632 = vst [vmem:[%s172 + $0x13c] sm:$0xf] %v1436
      %1633 = vst [vmem:[%s172 + $0x140] sm:$0xf] %v1437
      %1634 = vst [vmem:[%s172 + $0x144] sm:$0xf] %v1438
      %1635 = vst [vmem:[%s172 + $0x148] sm:$0xf] %v1439
      %1636 = vst [vmem:[%s172 + $0x14c] sm:$0xf] %v1440
      %1637 = vst [vmem:[%s172 + $0x150] sm:$0xf] %v1441
      %1638 = vst [vmem:[%s172 + $0x154] sm:$0xf] %v1442
      %1639 = vst [vmem:[%s172 + $0x158] sm:$0xf] %v1443
      %1640 = vst [vmem:[%s172 + $0x15c] sm:$0xf] %v1444
      %1641 = vst [vmem:[%s172 + $0x160] sm:$0xf] %v1445
      %1642 = vst [vmem:[%s172 + $0x164] sm:$0xf] %v1446
      %1643 = vst [vmem:[%s172 + $0x168] sm:$0xf] %v1447
      %1644 = vst [vmem:[%s172 + $0x16c] sm:$0xf] %v1448
      %1645 = vst [vmem:[%s172 + $0x170] sm:$0xf] %v1449
      %1646 = vst [vmem:[%s172 + $0x174] sm:$0xf] %v1450
      %1647 = vst [vmem:[%s172 + $0x178] sm:$0xf] %v1451
      %1648 = vst [vmem:[%s172 + $0x17c] sm:$0xf] %v1452
      %1649 = vst [vmem:[%s172 + $0x180] sm:$0xf] %v1453
      %1650 = vst [vmem:[%s172 + $0x184] sm:$0xf] %v1454
      %s1651 = smul.u32 98, %s14
      %p1652 = scmp.lt.s32.totalorder %s1651, 195
      %s1653 = scalar_select %p1652, %s1651, 195
      %s1654 = smul.addr %s1653, 4
      %s1655 = scalar_lea.vmem %s3, %s1654
      // Predicated region
      $region33: #{_lambda_.5} parent=31 // pred_check
        %p1656 = pneg %p100
      $region34: #{_lambda_.5} parent=31 // pred_check_branch
        %1658 = sbr.rel (%p1656) target = $region36
      $region35: #{_lambda_.5} parent=31 // pred_region
        %s1659 = smul.u32 98, %s14
      $region36: #{_lambda_.5} parent=31 // pred_fallthru
        _
    $region32: #{_lambda_.5} parent=5 // pred_fallthru
      _
    %p1660 = scmp.le.s32.totalorder 2, %s9
    // Predicated region
    $region37: #{_lambda_.5} parent=5 // pred_check
      %p1661 = pneg %p1660
    $region38: #{_lambda_.5} parent=5 // pred_check_branch
      %1663 = sbr.rel (%p1661) target = $region40
    $region39: #{_lambda_.5} parent=5 // pred_region
      %s1664 = ssub.s32 %s9, 2
      // Predicated region
      $region41: #{_lambda_.5} parent=39 // pred_check
        %p1665 = pneg %p106
      $region42: #{_lambda_.5} parent=39 // pred_check_branch
        %1667 = sbr.rel (%p1665) target = $region44
      $region43: #{_lambda_.5} parent=39 // pred_region
        %s1668 = smul.u32 98, %s15
        %p1669 = scmp.lt.s32.totalorder %s1668, 195
        %s1670 = scalar_select %p1669, %s1668, 195
        %s1671 = smul.addr %s1670, 4
        %s1672 = scalar_lea.vmem %s3, %s1671
      $region44: #{_lambda_.5} parent=39 // pred_fallthru
        _
    $region40: #{_lambda_.5} parent=5 // pred_fallthru
      _
  $region6: #{_lambda_.5} parent=0 // loop_footer
    %s13 = sadd.s32 1, %s9
  $region7: #{_lambda_.5} parent=0 // loop_footer_branch
    %8 = sbr.rel target = $region3
  $region8: #{_lambda_.5} parent=0 // loop_exit
    _

// kernel: _lambda_.6
$region0: #{_lambda_.6}
  #allocation0 [shape = 'u32[]', space=smem, size = 0x4, offset = 0x4, fixed_abs, tag = 'smem constant byte address 0x4 - core index']
  #allocation1 [shape = 'u32[144,128]{1,0:T(1,128)}', space=vmem, size = 0x12000, scoped, tag = 'internal scratch']
  %s0 = inlined_call_operand.vmem [shape: bf16[2,14,2,14,256], index: 0, kind: input, shape index: {}]
  %s1 = inlined_call_operand.vmem [shape: bf16[2,14,14,32], index: 1, kind: output, shape index: {}]
  %s2 = sld [smem:[#allocation0]]
  $region37: #{_lambda_.6} parent=0
    _
  %s4 = ssub.s32 1, %s2
  %s5 = scalar_select 0, %s4, %s2
  loop: start=0, step=1, limit=4
  $region2: #{_lambda_.6} parent=0 // loop_pre_header
    _
  $region3: #{_lambda_.6} parent=0 // loop_header
    %s7 = sphi 0, %s11
    %p8 = scmp.ge.s32.totalorder %s7, 4
    %s17 = sphi 0, %s19
    %s20 = sphi 0, %s17
    %s21 = sphi 0, %s20
    %s37 = sphi 0, %s21
    %s43 = sphi 0, %s45
    %s46 = sphi 0, %s43
    %s47 = sphi 0, %s46
    %s63 = sphi 0, %s47
  $region4: #{_lambda_.6} parent=0 // loop_header_branch
    %10 = sbr.rel (%p8) target = $region8
  $region5: #{_lambda_.6} parent=0 // loop_body
    %s12 = ssub.s32 %s7, 1
    %s13 = ssub.s32 %s7, 2
    %s14 = sadd.s32 %s7, 1
    %s15 = ssub.s32 %s7, %s14
    %p16 = scmp.eq.s32.totalorder %s15, 0
    %s18 = sadd.s32 %s17, 1
    %s19 = scalar_select %p16, %s17, %s18
    %p22 = pneg %p16
    %p23 = scmp.eq.s32.totalorder %s7, 1
    %p24 = por %p22, %p23
    %p25 = scmp.ne.s32.totalorder %s17, %s20
    %p26 = scmp.eq.s32.totalorder %s7, 0
    %p27 = por %p25, %p26
    %p28 = scmp.ne.s32.totalorder %s17, %s20
    %p29 = scmp.eq.s32.totalorder %s12, 1
    %p30 = por %p28, %p29
    %p31 = scmp.ne.s32.totalorder %s20, %s21
    %p32 = scmp.eq.s32.totalorder %s12, 0
    %p33 = por %p31, %p32
    %p34 = scmp.ne.s32.totalorder %s20, %s21
    %p35 = scmp.eq.s32.totalorder %s13, 1
    %p36 = por %p34, %p35
    %p38 = scmp.ne.s32.totalorder %s21, %s37
    %p39 = scmp.eq.s32.totalorder %s13, 0
    %p40 = por %p38, %p39
    %s41 = ssub.s32 %s7, %s14
    %p42 = scmp.eq.s32.totalorder %s41, 0
    %s44 = sadd.s32 %s43, 1
    %s45 = scalar_select %p42, %s43, %s44
    %p48 = pneg %p42
    %p49 = scmp.eq.s32.totalorder %s7, 1
    %p50 = por %p48, %p49
    %p51 = scmp.ne.s32.totalorder %s43, %s46
    %p52 = scmp.eq.s32.totalorder %s7, 0
    %p53 = por %p51, %p52
    %p54 = scmp.ne.s32.totalorder %s43, %s46
    %p55 = scmp.eq.s32.totalorder %s12, 1
    %p56 = por %p54, %p55
    %p57 = scmp.ne.s32.totalorder %s46, %s47
    %p58 = scmp.eq.s32.totalorder %s12, 0
    %p59 = por %p57, %p58
    %p60 = scmp.ne.s32.totalorder %s46, %s47
    %p61 = scmp.eq.s32.totalorder %s13, 1
    %p62 = por %p60, %p61
    %p64 = scmp.ne.s32.totalorder %s47, %s63
    %p65 = scmp.eq.s32.totalorder %s13, 0
    %p66 = por %p64, %p65
    %p67 = scmp.le.s32.totalorder 1, %s7
    %p68 = scmp.lt.s32.totalorder %s7, 3
    %p69 = pnand %p67, %p68
    %p70 = pneg %p69
    // Predicated region
    $region9: #{_lambda_.6} parent=5 // pred_check
      _
    $region10: #{_lambda_.6} parent=5 // pred_check_branch
      %72 = sbr.rel (%p69) target = $region12
    $region11: #{_lambda_.6} parent=5 // pred_region
      %s73 = ssub.s32 %s7, 1
    $region12: #{_lambda_.6} parent=5 // pred_fallthru
      _
    %p74 = scmp.lt.s32.totalorder %s7, 2
    // Predicated region
    $region13: #{_lambda_.6} parent=5 // pred_check
      %p75 = pneg %p74
    $region14: #{_lambda_.6} parent=5 // pred_check_branch
      %77 = sbr.rel (%p75) target = $region16
    $region15: #{_lambda_.6} parent=5 // pred_region
      // Predicated region
      $region17: #{_lambda_.6} parent=15 // pred_check
        %p78 = pneg %p27
      $region18: #{_lambda_.6} parent=15 // pred_check_branch
        %80 = sbr.rel (%p78) target = $region20
      $region19: #{_lambda_.6} parent=15 // pred_region
        %p81 = scmp.lt.s32.totalorder %s7, 1
        %s82 = scalar_select %p81, %s7, 1
        %s83 = smul.addr %s82, 112
        %s84 = smul.addr %s83, 4
        %s85 = scalar_lea.vmem %s0, %s84
      $region20: #{_lambda_.6} parent=15 // pred_fallthru
        _
    $region16: #{_lambda_.6} parent=5 // pred_fallthru
      _
    %p86 = scmp.le.s32.totalorder 1, %s7
    %p87 = scmp.lt.s32.totalorder %s7, 3
    %p88 = pnand %p86, %p87
    %p89 = pneg %p88
    // Predicated region
    $region21: #{_lambda_.6} parent=5 // pred_check
      _
    $region22: #{_lambda_.6} parent=5 // pred_check_branch
      %91 = sbr.rel (%p88) target = $region24
    $region23: #{_lambda_.6} parent=5 // pred_region
      %s92 = ssub.s32 %s7, 1
      %p93 = scmp.lt.s32.totalorder %s12, 1
      %s94 = scalar_select %p93, %s12, 1
      %s95 = smul.addr %s94, 112
      %s96 = smul.addr %s95, 4
      %s97 = scalar_lea.vmem %s0, %s96
      %p98 = pneg %p33
      %p99 = pneg %p30
      %p100 = pneg %p59
      %p101 = pneg %p56
      %p102 = scmp.lt.s32.totalorder %s12, 1
      %s103 = scalar_select %p102, %s12, 1
      %s104 = smul.addr %s103, 28
      %s105 = smul.addr %s104, 4
      %s106 = scalar_lea.vmem %s1, %s105
      %p107 = scmp.lt.s32.totalorder %s12, 1
      %s108 = scalar_select %p107, %s12, 1
      %s109 = smul.addr %s108, 112
      %s110 = smul.addr %s109, 4
      %s111 = scalar_lea.vmem %s0, %s110
      %p112 = scmp.lt.s32.totalorder %s12, 1
      %s113 = scalar_select %p112, %s12, 1
      %s114 = smul.addr %s113, 28
      %s115 = smul.addr %s114, 4
      %s116 = scalar_lea.vmem %s1, %s115
      %v118 = vld [vmem:[%s111] sm:$0xff]
      %v119 = vld [vmem:[%s111 + $0x8] sm:$0x77]
      %v120 = vld [vmem:[%s111 + $0x10] sm:$0xff]
      %v121 = vld [vmem:[%s111 + $0x18] sm:$0x77]
      %v122 = vld [vmem:[%s111 + $0x20] sm:$0xff]
      %v123 = vld [vmem:[%s111 + $0x28] sm:$0x77]
      %v124 = vld [vmem:[%s111 + $0x30] sm:$0xff]
      %v125 = vld [vmem:[%s111 + $0x38] sm:$0x77]
      %v126 = vld [vmem:[%s111 + $0x40] sm:$0xff]
      %v127 = vld [vmem:[%s111 + $0x48] sm:$0x77]
      %v128 = vld [vmem:[%s111 + $0x50] sm:$0xff]
      %v129 = vld [vmem:[%s111 + $0x58] sm:$0x77]
      %v130 = vld [vmem:[%s111 + $0x60] sm:$0xff]
      %v131 = vld [vmem:[%s111 + $0x68] sm:$0x77]
      %v132 = vld [vmem:[%s111 + $0x70] sm:$0xff]
      %v133 = vld [vmem:[%s111 + $0x78] sm:$0x77]
      %v134 = vld [vmem:[%s111 + $0x80] sm:$0xff]
      %v135 = vld [vmem:[%s111 + $0x88] sm:$0x77]
      %v136 = vld [vmem:[%s111 + $0x90] sm:$0xff]
      %v137 = vld [vmem:[%s111 + $0x98] sm:$0x77]
      %v138 = vld [vmem:[%s111 + $0xa0] sm:$0xff]
      %v139 = vld [vmem:[%s111 + $0xa8] sm:$0x77]
      %v140 = vld [vmem:[%s111 + $0xb0] sm:$0xff]
      %v141 = vld [vmem:[%s111 + $0xb8] sm:$0x77]
      %v142 = vld [vmem:[%s111 + $0xc0] sm:$0xff]
      %v143 = vld [vmem:[%s111 + $0xc8] sm:$0x77]
      %v144 = vld [vmem:[%s111 + $0xd0] sm:$0xff]
      %v145 = vld [vmem:[%s111 + $0xd8] sm:$0x77]
      %v146 = vld [vmem:[%s111 + $0xe0] sm:$0xff]
      %v147 = vld [vmem:[%s111 + $0xe8] sm:$0x77]
      %v148 = vld [vmem:[%s111 + $0xf0] sm:$0xff]
      %v149 = vld [vmem:[%s111 + $0xf8] sm:$0x77]
      %v150 = vld [vmem:[%s111 + $0x100] sm:$0xff]
      %v151 = vld [vmem:[%s111 + $0x108] sm:$0x77]
      %v152 = vld [vmem:[%s111 + $0x110] sm:$0xff]
      %v153 = vld [vmem:[%s111 + $0x118] sm:$0x77]
      %v154 = vld [vmem:[%s111 + $0x120] sm:$0xff]
      %v155 = vld [vmem:[%s111 + $0x128] sm:$0x77]
      %v156 = vld [vmem:[%s111 + $0x130] sm:$0xff]
      %v157 = vld [vmem:[%s111 + $0x138] sm:$0x77]
      %v158 = vld [vmem:[%s111 + $0x140] sm:$0xff]
      %v159 = vld [vmem:[%s111 + $0x148] sm:$0x77]
      %v160 = vld [vmem:[%s111 + $0x150] sm:$0xff]
      %v161 = vld [vmem:[%s111 + $0x158] sm:$0x77]
      %v162 = vld [vmem:[%s111 + $0x160] sm:$0xff]
      %v163 = vld [vmem:[%s111 + $0x168] sm:$0x77]
      %v164 = vld [vmem:[%s111 + $0x170] sm:$0xff]
      %v165 = vld [vmem:[%s111 + $0x178] sm:$0x77]
      %v166 = vld [vmem:[%s111 + $0x180] sm:$0xff]
      %v167 = vld [vmem:[%s111 + $0x188] sm:$0x77]
      %v168 = vld [vmem:[%s111 + $0x190] sm:$0xff]
      %v169 = vld [vmem:[%s111 + $0x198] sm:$0x77]
      %v170 = vld [vmem:[%s111 + $0x1a0] sm:$0xff]
      %v171 = vld [vmem:[%s111 + $0x1a8] sm:$0x77]
      %v172 = vld [vmem:[%s111 + $0x1b0] sm:$0xff]
      %v173 = vld [vmem:[%s111 + $0x1b8] sm:$0x77]
      %v174 = vmax.bf16 %v118, %v120
      %vm175 = vcmask 1042432
      %vm176 = vcmask 1046532
      %vm177 = vmor %vm176, %vm175
      %v180 = vsel %vm177, %v119, 4286644096
      %v183 = vsel %vm177, %v121, 4286644096
      %v185 = vmax.bf16 %v180, %v183
      %v186 = vmax.bf16 %v122, %v124
      %v188 = vsel %vm177, %v123, 4286644096
      %v191 = vsel %vm177, %v125, 4286644096
      %v193 = vmax.bf16 %v188, %v191
      %v194 = vmax.bf16 %v126, %v128
      %v196 = vsel %vm177, %v127, 4286644096
      %v199 = vsel %vm177, %v129, 4286644096
      %v201 = vmax.bf16 %v196, %v199
      %v202 = vmax.bf16 %v130, %v132
      %v204 = vsel %vm177, %v131, 4286644096
      %v207 = vsel %vm177, %v133, 4286644096
      %v209 = vmax.bf16 %v204, %v207
      %v210 = vmax.bf16 %v134, %v136
      %v212 = vsel %vm177, %v135, 4286644096
      %v215 = vsel %vm177, %v137, 4286644096
      %v217 = vmax.bf16 %v212, %v215
      %v218 = vmax.bf16 %v138, %v140
      %v220 = vsel %vm177, %v139, 4286644096
      %v223 = vsel %vm177, %v141, 4286644096
      %v225 = vmax.bf16 %v220, %v223
      %v226 = vmax.bf16 %v142, %v144
      %v228 = vsel %vm177, %v143, 4286644096
      %v231 = vsel %vm177, %v145, 4286644096
      %v233 = vmax.bf16 %v228, %v231
      %v234 = vmax.bf16 %v146, %v148
      %v236 = vsel %vm177, %v147, 4286644096
      %v239 = vsel %vm177, %v149, 4286644096
      %v241 = vmax.bf16 %v236, %v239
      %v242 = vmax.bf16 %v150, %v152
      %v244 = vsel %vm177, %v151, 4286644096
      %v247 = vsel %vm177, %v153, 4286644096
      %v249 = vmax.bf16 %v244, %v247
      %v250 = vmax.bf16 %v154, %v156
      %v252 = vsel %vm177, %v155, 4286644096
      %v255 = vsel %vm177, %v157, 4286644096
      %v257 = vmax.bf16 %v252, %v255
      %v258 = vmax.bf16 %v158, %v160
      %v260 = vsel %vm177, %v159, 4286644096
      %v263 = vsel %vm177, %v161, 4286644096
      %v265 = vmax.bf16 %v260, %v263
      %v266 = vmax.bf16 %v162, %v164
      %v268 = vsel %vm177, %v163, 4286644096
      %v271 = vsel %vm177, %v165, 4286644096
      %v273 = vmax.bf16 %v268, %v271
      %v274 = vmax.bf16 %v166, %v168
      %v276 = vsel %vm177, %v167, 4286644096
      %v279 = vsel %vm177, %v169, 4286644096
      %v281 = vmax.bf16 %v276, %v279
      %v282 = vmax.bf16 %v170, %v172
      %v284 = vsel %vm177, %v171, 4286644096
      %v287 = vsel %vm177, %v173, 4286644096
      %v289 = vmax.bf16 %v284, %v287
      %v318 = vrot.slane %v174, 4
      %v319 = vrot.slane %v185, 4
      %v320 = vrot.slane %v186, 4
      %v321 = vrot.slane %v193, 4
      %v322 = vrot.slane %v194, 4
      %v323 = vrot.slane %v201, 4
      %v324 = vrot.slane %v202, 4
      %v325 = vrot.slane %v209, 4
      %v326 = vrot.slane %v210, 4
      %v327 = vrot.slane %v217, 4
      %v328 = vrot.slane %v218, 4
      %v329 = vrot.slane %v225, 4
      %v330 = vrot.slane %v226, 4
      %v331 = vrot.slane %v233, 4
      %v332 = vrot.slane %v234, 4
      %v333 = vrot.slane %v241, 4
      %v334 = vrot.slane %v242, 4
      %v335 = vrot.slane %v249, 4
      %v336 = vrot.slane %v250, 4
      %v337 = vrot.slane %v257, 4
      %v338 = vrot.slane %v258, 4
      %v339 = vrot.slane %v265, 4
      %v340 = vrot.slane %v266, 4
      %v341 = vrot.slane %v273, 4
      %v342 = vrot.slane %v274, 4
      %v343 = vrot.slane %v281, 4
      %v344 = vrot.slane %v282, 4
      %v345 = vrot.slane %v289, 4
      %v374 = vmax.bf16 %v174, %v318
      %v375 = vmax.bf16 %v185, %v319
      %v376 = vmax.bf16 %v186, %v320
      %v377 = vmax.bf16 %v193, %v321
      %v378 = vmax.bf16 %v194, %v322
      %v379 = vmax.bf16 %v201, %v323
      %v380 = vmax.bf16 %v202, %v324
      %v381 = vmax.bf16 %v209, %v325
      %v382 = vmax.bf16 %v210, %v326
      %v383 = vmax.bf16 %v217, %v327
      %v384 = vmax.bf16 %v218, %v328
      %v385 = vmax.bf16 %v225, %v329
      %v386 = vmax.bf16 %v226, %v330
      %v387 = vmax.bf16 %v233, %v331
      %v388 = vmax.bf16 %v234, %v332
      %v389 = vmax.bf16 %v241, %v333
      %v390 = vmax.bf16 %v242, %v334
      %v391 = vmax.bf16 %v249, %v335
      %v392 = vmax.bf16 %v250, %v336
      %v393 = vmax.bf16 %v257, %v337
      %v394 = vmax.bf16 %v258, %v338
      %v395 = vmax.bf16 %v265, %v339
      %v396 = vmax.bf16 %v266, %v340
      %v397 = vmax.bf16 %v273, %v341
      %v398 = vmax.bf16 %v274, %v342
      %v399 = vmax.bf16 %v281, %v343
      %v400 = vmax.bf16 %v282, %v344
      %v401 = vmax.bf16 %v289, %v345
      %vm402 = vcmask 257024
      %403 = vst.msk [vmem:[%s116] sm:$0xf] %vm402, %v374
      %vm404 = vcmask 256000
      %405 = vst.msk [vmem:[%s116 + $0x4] sm:$0x7] %vm404, %v375
      %406 = vst.msk [vmem:[%s116 + $0x8] sm:$0xf] %vm402, %v376
      %407 = vst.msk [vmem:[%s116 + $0xc] sm:$0x7] %vm404, %v377
      %408 = vst.msk [vmem:[%s116 + $0x10] sm:$0xf] %vm402, %v378
      %409 = vst.msk [vmem:[%s116 + $0x14] sm:$0x7] %vm404, %v379
      %410 = vst.msk [vmem:[%s116 + $0x18] sm:$0xf] %vm402, %v380
      %411 = vst.msk [vmem:[%s116 + $0x1c] sm:$0x7] %vm404, %v381
      %412 = vst.msk [vmem:[%s116 + $0x20] sm:$0xf] %vm402, %v382
      %413 = vst.msk [vmem:[%s116 + $0x24] sm:$0x7] %vm404, %v383
      %414 = vst.msk [vmem:[%s116 + $0x28] sm:$0xf] %vm402, %v384
      %415 = vst.msk [vmem:[%s116 + $0x2c] sm:$0x7] %vm404, %v385
      %416 = vst.msk [vmem:[%s116 + $0x30] sm:$0xf] %vm402, %v386
      %417 = vst.msk [vmem:[%s116 + $0x34] sm:$0x7] %vm404, %v387
      %418 = vst.msk [vmem:[%s116 + $0x38] sm:$0xf] %vm402, %v388
      %419 = vst.msk [vmem:[%s116 + $0x3c] sm:$0x7] %vm404, %v389
      %420 = vst.msk [vmem:[%s116 + $0x40] sm:$0xf] %vm402, %v390
      %421 = vst.msk [vmem:[%s116 + $0x44] sm:$0x7] %vm404, %v391
      %422 = vst.msk [vmem:[%s116 + $0x48] sm:$0xf] %vm402, %v392
      %423 = vst.msk [vmem:[%s116 + $0x4c] sm:$0x7] %vm404, %v393
      %424 = vst.msk [vmem:[%s116 + $0x50] sm:$0xf] %vm402, %v394
      %425 = vst.msk [vmem:[%s116 + $0x54] sm:$0x7] %vm404, %v395
      %426 = vst.msk [vmem:[%s116 + $0x58] sm:$0xf] %vm402, %v396
      %427 = vst.msk [vmem:[%s116 + $0x5c] sm:$0x7] %vm404, %v397
      %428 = vst.msk [vmem:[%s116 + $0x60] sm:$0xf] %vm402, %v398
      %429 = vst.msk [vmem:[%s116 + $0x64] sm:$0x7] %vm404, %v399
      %430 = vst.msk [vmem:[%s116 + $0x68] sm:$0xf] %vm402, %v400
      %431 = vst.msk [vmem:[%s116 + $0x6c] sm:$0x7] %vm404, %v401
      %p432 = scmp.lt.s32.totalorder %s12, 1
      %s433 = scalar_select %p432, %s12, 1
      %s434 = smul.addr %s433, 28
      %s435 = smul.addr %s434, 4
      %s436 = scalar_lea.vmem %s1, %s435
      // Predicated region
      $region25: #{_lambda_.6} parent=23 // pred_check
        %p437 = pneg %p56
      $region26: #{_lambda_.6} parent=23 // pred_check_branch
        %439 = sbr.rel (%p437) target = $region28
      $region27: #{_lambda_.6} parent=23 // pred_region
        _
      $region28: #{_lambda_.6} parent=23 // pred_fallthru
        _
    $region24: #{_lambda_.6} parent=5 // pred_fallthru
      _
    %p440 = scmp.le.s32.totalorder 2, %s7
    // Predicated region
    $region29: #{_lambda_.6} parent=5 // pred_check
      %p441 = pneg %p440
    $region30: #{_lambda_.6} parent=5 // pred_check_branch
      %443 = sbr.rel (%p441) target = $region32
    $region31: #{_lambda_.6} parent=5 // pred_region
      %s444 = ssub.s32 %s7, 2
      // Predicated region
      $region33: #{_lambda_.6} parent=31 // pred_check
        %p445 = pneg %p62
      $region34: #{_lambda_.6} parent=31 // pred_check_branch
        %447 = sbr.rel (%p445) target = $region36
      $region35: #{_lambda_.6} parent=31 // pred_region
        %p448 = scmp.lt.s32.totalorder %s13, 1
        %s449 = scalar_select %p448, %s13, 1
        %s450 = smul.addr %s449, 28
        %s451 = smul.addr %s450, 4
        %s452 = scalar_lea.vmem %s1, %s451
      $region36: #{_lambda_.6} parent=31 // pred_fallthru
        _
    $region32: #{_lambda_.6} parent=5 // pred_fallthru
      _
  $region6: #{_lambda_.6} parent=0 // loop_footer
    %s11 = sadd.s32 1, %s7
  $region7: #{_lambda_.6} parent=0 // loop_footer_branch
    %6 = sbr.rel target = $region3
  $region8: #{_lambda_.6} parent=0 // loop_exit
    _

// kernel: _lambda_.8
$region0: #{_lambda_.8}
  #allocation0 [shape = 'u32[]', space=smem, size = 0x4, offset = 0x4, fixed_abs, tag = 'smem constant byte address 0x4 - core index']
  #allocation1 [shape = 'u32[144,128]{1,0:T(1,128)}', space=vmem, size = 0x12000, scoped, tag = 'internal scratch']
  %s0 = inlined_call_operand.vmem [shape: bf16[2,7,2,7,256], index: 0, kind: input, shape index: {}]
  %s1 = inlined_call_operand.vmem [shape: bf16[2,7,7,48], index: 1, kind: output, shape index: {}]
  %s2 = sld [smem:[#allocation0]]
  $region37: #{_lambda_.8} parent=0
    _
  %s4 = ssub.s32 1, %s2
  %s5 = scalar_select 0, %s4, %s2
  loop: start=0, step=1, limit=4
  $region2: #{_lambda_.8} parent=0 // loop_pre_header
    _
  $region3: #{_lambda_.8} parent=0 // loop_header
    %s7 = sphi 0, %s11
    %p8 = scmp.ge.s32.totalorder %s7, 4
    %s17 = sphi 0, %s19
    %s20 = sphi 0, %s17
    %s21 = sphi 0, %s20
    %s37 = sphi 0, %s21
    %s43 = sphi 0, %s45
    %s46 = sphi 0, %s43
    %s47 = sphi 0, %s46
    %s63 = sphi 0, %s47
  $region4: #{_lambda_.8} parent=0 // loop_header_branch
    %10 = sbr.rel (%p8) target = $region8
  $region5: #{_lambda_.8} parent=0 // loop_body
    %s12 = ssub.s32 %s7, 1
    %s13 = ssub.s32 %s7, 2
    %s14 = sadd.s32 %s7, 1
    %s15 = ssub.s32 %s7, %s14
    %p16 = scmp.eq.s32.totalorder %s15, 0
    %s18 = sadd.s32 %s17, 1
    %s19 = scalar_select %p16, %s17, %s18
    %p22 = pneg %p16
    %p23 = scmp.eq.s32.totalorder %s7, 1
    %p24 = por %p22, %p23
    %p25 = scmp.ne.s32.totalorder %s17, %s20
    %p26 = scmp.eq.s32.totalorder %s7, 0
    %p27 = por %p25, %p26
    %p28 = scmp.ne.s32.totalorder %s17, %s20
    %p29 = scmp.eq.s32.totalorder %s12, 1
    %p30 = por %p28, %p29
    %p31 = scmp.ne.s32.totalorder %s20, %s21
    %p32 = scmp.eq.s32.totalorder %s12, 0
    %p33 = por %p31, %p32
    %p34 = scmp.ne.s32.totalorder %s20, %s21
    %p35 = scmp.eq.s32.totalorder %s13, 1
    %p36 = por %p34, %p35
    %p38 = scmp.ne.s32.totalorder %s21, %s37
    %p39 = scmp.eq.s32.totalorder %s13, 0
    %p40 = por %p38, %p39
    %s41 = ssub.s32 %s7, %s14
    %p42 = scmp.eq.s32.totalorder %s41, 0
    %s44 = sadd.s32 %s43, 1
    %s45 = scalar_select %p42, %s43, %s44
    %p48 = pneg %p42
    %p49 = scmp.eq.s32.totalorder %s7, 1
    %p50 = por %p48, %p49
    %p51 = scmp.ne.s32.totalorder %s43, %s46
    %p52 = scmp.eq.s32.totalorder %s7, 0
    %p53 = por %p51, %p52
    %p54 = scmp.ne.s32.totalorder %s43, %s46
    %p55 = scmp.eq.s32.totalorder %s12, 1
    %p56 = por %p54, %p55
    %p57 = scmp.ne.s32.totalorder %s46, %s47
    %p58 = scmp.eq.s32.totalorder %s12, 0
    %p59 = por %p57, %p58
    %p60 = scmp.ne.s32.totalorder %s46, %s47
    %p61 = scmp.eq.s32.totalorder %s13, 1
    %p62 = por %p60, %p61
    %p64 = scmp.ne.s32.totalorder %s47, %s63
    %p65 = scmp.eq.s32.totalorder %s13, 0
    %p66 = por %p64, %p65
    %p67 = scmp.le.s32.totalorder 1, %s7
    %p68 = scmp.lt.s32.totalorder %s7, 3
    %p69 = pnand %p67, %p68
    %p70 = pneg %p69
    // Predicated region
    $region9: #{_lambda_.8} parent=5 // pred_check
      _
    $region10: #{_lambda_.8} parent=5 // pred_check_branch
      %72 = sbr.rel (%p69) target = $region12
    $region11: #{_lambda_.8} parent=5 // pred_region
      %s73 = ssub.s32 %s7, 1
    $region12: #{_lambda_.8} parent=5 // pred_fallthru
      _
    %p74 = scmp.lt.s32.totalorder %s7, 2
    // Predicated region
    $region13: #{_lambda_.8} parent=5 // pred_check
      %p75 = pneg %p74
    $region14: #{_lambda_.8} parent=5 // pred_check_branch
      %77 = sbr.rel (%p75) target = $region16
    $region15: #{_lambda_.8} parent=5 // pred_region
      // Predicated region
      $region17: #{_lambda_.8} parent=15 // pred_check
        %p78 = pneg %p27
      $region18: #{_lambda_.8} parent=15 // pred_check_branch
        %80 = sbr.rel (%p78) target = $region20
      $region19: #{_lambda_.8} parent=15 // pred_region
        %p81 = scmp.lt.s32.totalorder %s7, 1
        %s82 = scalar_select %p81, %s7, 1
        %s83 = smul.addr %s82, 28
        %s84 = smul.addr %s83, 4
        %s85 = scalar_lea.vmem %s0, %s84
      $region20: #{_lambda_.8} parent=15 // pred_fallthru
        _
    $region16: #{_lambda_.8} parent=5 // pred_fallthru
      _
    %p86 = scmp.le.s32.totalorder 1, %s7
    %p87 = scmp.lt.s32.totalorder %s7, 3
    %p88 = pnand %p86, %p87
    %p89 = pneg %p88
    // Predicated region
    $region21: #{_lambda_.8} parent=5 // pred_check
      _
    $region22: #{_lambda_.8} parent=5 // pred_check_branch
      %91 = sbr.rel (%p88) target = $region24
    $region23: #{_lambda_.8} parent=5 // pred_region
      %s92 = ssub.s32 %s7, 1
      %p93 = scmp.lt.s32.totalorder %s12, 1
      %s94 = scalar_select %p93, %s12, 1
      %s95 = smul.addr %s94, 28
      %s96 = smul.addr %s95, 4
      %s97 = scalar_lea.vmem %s0, %s96
      %p98 = pneg %p33
      %p99 = pneg %p30
      %p100 = pneg %p59
      %p101 = pneg %p56
      %p102 = scmp.lt.s32.totalorder %s12, 1
      %s103 = scalar_select %p102, %s12, 1
      %s104 = smul.addr %s103, 7
      %s105 = smul.addr %s104, 4
      %s106 = scalar_lea.vmem %s1, %s105
      %p107 = scmp.lt.s32.totalorder %s12, 1
      %s108 = scalar_select %p107, %s12, 1
      %s109 = smul.addr %s108, 28
      %s110 = smul.addr %s109, 4
      %s111 = scalar_lea.vmem %s0, %s110
      %p112 = scmp.lt.s32.totalorder %s12, 1
      %s113 = scalar_select %p112, %s12, 1
      %s114 = smul.addr %s113, 7
      %s115 = smul.addr %s114, 4
      %s116 = scalar_lea.vmem %s1, %s115
      %v118 = vld [vmem:[%s111] sm:$0xff]
      %v119 = vld [vmem:[%s111 + $0x8] sm:$0xff]
      %v120 = vld [vmem:[%s111 + $0x10] sm:$0xff]
      %v121 = vld [vmem:[%s111 + $0x18] sm:$0xff]
      %v122 = vld [vmem:[%s111 + $0x20] sm:$0xff]
      %v123 = vld [vmem:[%s111 + $0x28] sm:$0xff]
      %v124 = vld [vmem:[%s111 + $0x30] sm:$0xff]
      %v125 = vld [vmem:[%s111 + $0x38] sm:$0xff]
      %v126 = vld [vmem:[%s111 + $0x40] sm:$0xff]
      %v127 = vld [vmem:[%s111 + $0x48] sm:$0xff]
      %v128 = vld [vmem:[%s111 + $0x50] sm:$0xff]
      %v129 = vld [vmem:[%s111 + $0x58] sm:$0xff]
      %v130 = vld [vmem:[%s111 + $0x60] sm:$0xff]
      %v131 = vld [vmem:[%s111 + $0x68] sm:$0xff]
      %vm132 = vcmask 1043456
      %vm133 = vsmask.f32 3328
      %vm134 = vmand %vm132, %vm133
      %vm135 = vcmask 1047556
      %vm136 = vsmask.f32 7424
      %vm137 = vmand %vm135, %vm136
      %vm138 = vmor %vm137, %vm134
      %v139 = vsel %vm138, %v118, 4286644096
      %v140 = vsel %vm138, %v119, 4286644096
      %v141 = vmax.bf16 %v139, %v140
      %v142 = vsel %vm138, %v120, 4286644096
      %v143 = vsel %vm138, %v121, 4286644096
      %v144 = vmax.bf16 %v142, %v143
      %v145 = vsel %vm138, %v122, 4286644096
      %v146 = vsel %vm138, %v123, 4286644096
      %v147 = vmax.bf16 %v145, %v146
      %v148 = vsel %vm138, %v124, 4286644096
      %v149 = vsel %vm138, %v125, 4286644096
      %v150 = vmax.bf16 %v148, %v149
      %v151 = vsel %vm138, %v126, 4286644096
      %v152 = vsel %vm138, %v127, 4286644096
      %v153 = vmax.bf16 %v151, %v152
      %v154 = vsel %vm138, %v128, 4286644096
      %v155 = vsel %vm138, %v129, 4286644096
      %v156 = vmax.bf16 %v154, %v155
      %v157 = vsel %vm138, %v130, 4286644096
      %v158 = vsel %vm138, %v131, 4286644096
      %v159 = vmax.bf16 %v157, %v158
      %v167 = vrot.slane %v141, 4
      %v168 = vrot.slane %v144, 4
      %v169 = vrot.slane %v147, 4
      %v170 = vrot.slane %v150, 4
      %v171 = vrot.slane %v153, 4
      %v172 = vrot.slane %v156, 4
      %v173 = vrot.slane %v159, 4
      %v181 = vmax.bf16 %v141, %v167
      %v182 = vmax.bf16 %v144, %v168
      %v183 = vmax.bf16 %v147, %v169
      %v184 = vmax.bf16 %v150, %v170
      %v185 = vmax.bf16 %v153, %v171
      %v186 = vmax.bf16 %v156, %v172
      %v187 = vmax.bf16 %v159, %v173
      %vm188 = vcmask 388096
      %vm189 = vmand %vm188, %vm133
      %v190 = vld [vmem:[%s116] sm:$0xf]
      %v191 = vsel %vm189, %v181, %v190
      %192 = vst [vmem:[%s116] sm:$0xf] %v191
      %v193 = vld [vmem:[%s116 + $0x4] sm:$0xf]
      %v194 = vsel %vm189, %v182, %v193
      %195 = vst [vmem:[%s116 + $0x4] sm:$0xf] %v194
      %v196 = vld [vmem:[%s116 + $0x8] sm:$0xf]
      %v197 = vsel %vm189, %v183, %v196
      %198 = vst [vmem:[%s116 + $0x8] sm:$0xf] %v197
      %v199 = vld [vmem:[%s116 + $0xc] sm:$0xf]
      %v200 = vsel %vm189, %v184, %v199
      %201 = vst [vmem:[%s116 + $0xc] sm:$0xf] %v200
      %v202 = vld [vmem:[%s116 + $0x10] sm:$0xf]
      %v203 = vsel %vm189, %v185, %v202
      %204 = vst [vmem:[%s116 + $0x10] sm:$0xf] %v203
      %v205 = vld [vmem:[%s116 + $0x14] sm:$0xf]
      %v206 = vsel %vm189, %v186, %v205
      %207 = vst [vmem:[%s116 + $0x14] sm:$0xf] %v206
      %v208 = vld [vmem:[%s116 + $0x18] sm:$0xf]
      %v209 = vsel %vm189, %v187, %v208
      %210 = vst [vmem:[%s116 + $0x18] sm:$0xf] %v209
      %p211 = scmp.lt.s32.totalorder %s12, 1
      %s212 = scalar_select %p211, %s12, 1
      %s213 = smul.addr %s212, 7
      %s214 = smul.addr %s213, 4
      %s215 = scalar_lea.vmem %s1, %s214
      // Predicated region
      $region25: #{_lambda_.8} parent=23 // pred_check
        %p216 = pneg %p56
      $region26: #{_lambda_.8} parent=23 // pred_check_branch
        %218 = sbr.rel (%p216) target = $region28
      $region27: #{_lambda_.8} parent=23 // pred_region
        _
      $region28: #{_lambda_.8} parent=23 // pred_fallthru
        _
    $region24: #{_lambda_.8} parent=5 // pred_fallthru
      _
    %p219 = scmp.le.s32.totalorder 2, %s7
    // Predicated region
    $region29: #{_lambda_.8} parent=5 // pred_check
      %p220 = pneg %p219
    $region30: #{_lambda_.8} parent=5 // pred_check_branch
      %222 = sbr.rel (%p220) target = $region32
    $region31: #{_lambda_.8} parent=5 // pred_region
      %s223 = ssub.s32 %s7, 2
      // Predicated region
      $region33: #{_lambda_.8} parent=31 // pred_check
        %p224 = pneg %p62
      $region34: #{_lambda_.8} parent=31 // pred_check_branch
        %226 = sbr.rel (%p224) target = $region36
      $region35: #{_lambda_.8} parent=31 // pred_region
        %p227 = scmp.lt.s32.totalorder %s13, 1
        %s228 = scalar_select %p227, %s13, 1
        %s229 = smul.addr %s228, 7
        %s230 = smul.addr %s229, 4
        %s231 = scalar_lea.vmem %s1, %s230
      $region36: #{_lambda_.8} parent=31 // pred_fallthru
        _
    $region32: #{_lambda_.8} parent=5 // pred_fallthru
      _
  $region6: #{_lambda_.8} parent=0 // loop_footer
    %s11 = sadd.s32 1, %s7
  $region7: #{_lambda_.8} parent=0 // loop_footer_branch
    %6 = sbr.rel target = $region3
  $region8: #{_lambda_.8} parent=0 // loop_exit
    _

// kernel: _lambda_.7
$region0: #{_lambda_.7}
  #allocation0 [shape = 'u32[]', space=smem, size = 0x4, offset = 0x4, fixed_abs, tag = 'smem constant byte address 0x4 - core index']
  #allocation1 [shape = 'u32[144,128]{1,0:T(1,128)}', space=vmem, size = 0x12000, scoped, tag = 'internal scratch']
  %s0 = inlined_call_operand.vmem [shape: bf16[392,896], index: 0, kind: input, shape index: {}]
  %s1 = inlined_call_operand.vmem [shape: bf16[896,128], index: 1, kind: input, shape index: {}]
  %s2 = inlined_call_operand.vmem [shape: f32[1,128], index: 2, kind: input, shape index: {}]
  %s3 = inlined_call_operand.vmem [shape: bf16[392,128], index: 3, kind: output, shape index: {}]
  %s4 = sld [smem:[#allocation0]]
  $region22: #{_lambda_.7} parent=0
    _
  %s6 = ssub.s32 1, %s4
  %s7 = scalar_select 0, %s6, %s4
  // Predicated region
  $region2: #{_lambda_.7} parent=0 // pred_check
    _
  $region3: #{_lambda_.7} parent=0 // pred_check_branch
    %9 = sbr.rel (0) target = $region5
  $region4: #{_lambda_.7} parent=0 // pred_region
    _
  $region5: #{_lambda_.7} parent=0 // pred_fallthru
    _
  // Predicated region
  $region6: #{_lambda_.7} parent=0 // pred_check
    _
  $region7: #{_lambda_.7} parent=0 // pred_check_branch
    %11 = sbr.rel (0) target = $region9
  $region8: #{_lambda_.7} parent=0 // pred_region
    _
  $region9: #{_lambda_.7} parent=0 // pred_fallthru
    _
  // Predicated region
  $region10: #{_lambda_.7} parent=0 // pred_check
    _
  $region11: #{_lambda_.7} parent=0 // pred_check_branch
    %13 = sbr.rel (0) target = $region13
  $region12: #{_lambda_.7} parent=0 // pred_region
    _
  $region13: #{_lambda_.7} parent=0 // pred_fallthru
    _
  %v15 = vld [vmem:[%s0] sm:$0xff]
  %v16 = vld [vmem:[%s0 + $0x8] sm:$0xff]
  %v17 = vld [vmem:[%s0 + $0x10] sm:$0xff]
  %v18 = vld [vmem:[%s0 + $0x18] sm:$0xf]
  %v19 = vld [vmem:[%s0 + $0x1c] sm:$0xff]
  %v20 = vld [vmem:[%s0 + $0x24] sm:$0xff]
  %v21 = vld [vmem:[%s0 + $0x2c] sm:$0xff]
  %v22 = vld [vmem:[%s0 + $0x34] sm:$0xf]
  %v23 = vld [vmem:[%s0 + $0x38] sm:$0xff]
  %v24 = vld [vmem:[%s0 + $0x40] sm:$0xff]
  %v25 = vld [vmem:[%s0 + $0x48] sm:$0xff]
  %v26 = vld [vmem:[%s0 + $0x50] sm:$0xf]
  %v27 = vld [vmem:[%s0 + $0x54] sm:$0xff]
  %v28 = vld [vmem:[%s0 + $0x5c] sm:$0xff]
  %v29 = vld [vmem:[%s0 + $0x64] sm:$0xff]
  %v30 = vld [vmem:[%s0 + $0x6c] sm:$0xf]
  %v31 = vld [vmem:[%s0 + $0x70] sm:$0xff]
  %v32 = vld [vmem:[%s0 + $0x78] sm:$0xff]
  %v33 = vld [vmem:[%s0 + $0x80] sm:$0xff]
  %v34 = vld [vmem:[%s0 + $0x88] sm:$0xf]
  %v35 = vld [vmem:[%s0 + $0x8c] sm:$0xff]
  %v36 = vld [vmem:[%s0 + $0x94] sm:$0xff]
  %v37 = vld [vmem:[%s0 + $0x9c] sm:$0xff]
  %v38 = vld [vmem:[%s0 + $0xa4] sm:$0xf]
  %v39 = vld [vmem:[%s0 + $0xa8] sm:$0xff]
  %v40 = vld [vmem:[%s0 + $0xb0] sm:$0xff]
  %v41 = vld [vmem:[%s0 + $0xb8] sm:$0xff]
  %v42 = vld [vmem:[%s0 + $0xc0] sm:$0xf]
  %v43 = vld [vmem:[%s0 + $0xc4] sm:$0xff]
  %v44 = vld [vmem:[%s0 + $0xcc] sm:$0xff]
  %v45 = vld [vmem:[%s0 + $0xd4] sm:$0xff]
  %v46 = vld [vmem:[%s0 + $0xdc] sm:$0xf]
  %v47 = vld [vmem:[%s0 + $0xe0] sm:$0xff]
  %v48 = vld [vmem:[%s0 + $0xe8] sm:$0xff]
  %v49 = vld [vmem:[%s0 + $0xf0] sm:$0xff]
  %v50 = vld [vmem:[%s0 + $0xf8] sm:$0xf]
  %v51 = vld [vmem:[%s0 + $0xfc] sm:$0xff]
  %v52 = vld [vmem:[%s0 + $0x104] sm:$0xff]
  %v53 = vld [vmem:[%s0 + $0x10c] sm:$0xff]
  %v54 = vld [vmem:[%s0 + $0x114] sm:$0xf]
  %v55 = vld [vmem:[%s0 + $0x118] sm:$0xff]
  %v56 = vld [vmem:[%s0 + $0x120] sm:$0xff]
  %v57 = vld [vmem:[%s0 + $0x128] sm:$0xff]
  %v58 = vld [vmem:[%s0 + $0x130] sm:$0xf]
  %v59 = vld [vmem:[%s0 + $0x134] sm:$0xff]
  %v60 = vld [vmem:[%s0 + $0x13c] sm:$0xff]
  %v61 = vld [vmem:[%s0 + $0x144] sm:$0xff]
  %v62 = vld [vmem:[%s0 + $0x14c] sm:$0xf]
  %v63 = vld [vmem:[%s0 + $0x150] sm:$0xff]
  %v64 = vld [vmem:[%s0 + $0x158] sm:$0xff]
  %v65 = vld [vmem:[%s0 + $0x160] sm:$0xff]
  %v66 = vld [vmem:[%s0 + $0x168] sm:$0xf]
  %v67 = vld [vmem:[%s0 + $0x16c] sm:$0xff]
  %v68 = vld [vmem:[%s0 + $0x174] sm:$0xff]
  %v69 = vld [vmem:[%s0 + $0x17c] sm:$0xff]
  %v70 = vld [vmem:[%s0 + $0x184] sm:$0xf]
  %v71 = vld [vmem:[%s0 + $0x188] sm:$0xff]
  %v72 = vld [vmem:[%s0 + $0x190] sm:$0xff]
  %v73 = vld [vmem:[%s0 + $0x198] sm:$0xff]
  %v74 = vld [vmem:[%s0 + $0x1a0] sm:$0xf]
  %v75 = vld [vmem:[%s0 + $0x1a4] sm:$0xff]
  %v76 = vld [vmem:[%s0 + $0x1ac] sm:$0xff]
  %v77 = vld [vmem:[%s0 + $0x1b4] sm:$0xff]
  %v78 = vld [vmem:[%s0 + $0x1bc] sm:$0xf]
  %v79 = vld [vmem:[%s0 + $0x1c0] sm:$0xff]
  %v80 = vld [vmem:[%s0 + $0x1c8] sm:$0xff]
  %v81 = vld [vmem:[%s0 + $0x1d0] sm:$0xff]
  %v82 = vld [vmem:[%s0 + $0x1d8] sm:$0xf]
  %v83 = vld [vmem:[%s0 + $0x1dc] sm:$0xff]
  %v84 = vld [vmem:[%s0 + $0x1e4] sm:$0xff]
  %v85 = vld [vmem:[%s0 + $0x1ec] sm:$0xff]
  %v86 = vld [vmem:[%s0 + $0x1f4] sm:$0xf]
  %v87 = vld [vmem:[%s0 + $0x1f8] sm:$0xff]
  %v88 = vld [vmem:[%s0 + $0x200] sm:$0xff]
  %v89 = vld [vmem:[%s0 + $0x208] sm:$0xff]
  %v90 = vld [vmem:[%s0 + $0x210] sm:$0xf]
  %v91 = vld [vmem:[%s0 + $0x214] sm:$0xff]
  %v92 = vld [vmem:[%s0 + $0x21c] sm:$0xff]
  %v93 = vld [vmem:[%s0 + $0x224] sm:$0xff]
  %v94 = vld [vmem:[%s0 + $0x22c] sm:$0xf]
  %v95 = vld [vmem:[%s0 + $0x230] sm:$0xff]
  %v96 = vld [vmem:[%s0 + $0x238] sm:$0xff]
  %v97 = vld [vmem:[%s0 + $0x240] sm:$0xff]
  %v98 = vld [vmem:[%s0 + $0x248] sm:$0xf]
  %v99 = vld [vmem:[%s0 + $0x24c] sm:$0xff]
  %v100 = vld [vmem:[%s0 + $0x254] sm:$0xff]
  %v101 = vld [vmem:[%s0 + $0x25c] sm:$0xff]
  %v102 = vld [vmem:[%s0 + $0x264] sm:$0xf]
  %v103 = vld [vmem:[%s0 + $0x268] sm:$0xff]
  %v104 = vld [vmem:[%s0 + $0x270] sm:$0xff]
  %v105 = vld [vmem:[%s0 + $0x278] sm:$0xff]
  %v106 = vld [vmem:[%s0 + $0x280] sm:$0xf]
  %v107 = vld [vmem:[%s0 + $0x284] sm:$0xff]
  %v108 = vld [vmem:[%s0 + $0x28c] sm:$0xff]
  %v109 = vld [vmem:[%s0 + $0x294] sm:$0xff]
  %v110 = vld [vmem:[%s0 + $0x29c] sm:$0xf]
  %v111 = vld [vmem:[%s0 + $0x2a0] sm:$0xff]
  %v112 = vld [vmem:[%s0 + $0x2a8] sm:$0xff]
  %v113 = vld [vmem:[%s0 + $0x2b0] sm:$0xff]
  %v114 = vld [vmem:[%s0 + $0x2b8] sm:$0xf]
  %v115 = vld [vmem:[%s0 + $0x2bc] sm:$0xff]
  %v116 = vld [vmem:[%s0 + $0x2c4] sm:$0xff]
  %v117 = vld [vmem:[%s0 + $0x2cc] sm:$0xff]
  %v118 = vld [vmem:[%s0 + $0x2d4] sm:$0xf]
  %v119 = vld [vmem:[%s0 + $0x2d8] sm:$0xff]
  %v120 = vld [vmem:[%s0 + $0x2e0] sm:$0xff]
  %v121 = vld [vmem:[%s0 + $0x2e8] sm:$0xff]
  %v122 = vld [vmem:[%s0 + $0x2f0] sm:$0xf]
  %v123 = vld [vmem:[%s0 + $0x2f4] sm:$0xff]
  %v124 = vld [vmem:[%s0 + $0x2fc] sm:$0xff]
  %v125 = vld [vmem:[%s0 + $0x304] sm:$0xff]
  %v126 = vld [vmem:[%s0 + $0x30c] sm:$0xf]
  %v127 = vld [vmem:[%s0 + $0x310] sm:$0xff]
  %v128 = vld [vmem:[%s0 + $0x318] sm:$0xff]
  %v129 = vld [vmem:[%s0 + $0x320] sm:$0xff]
  %v130 = vld [vmem:[%s0 + $0x328] sm:$0xf]
  %v131 = vld [vmem:[%s0 + $0x32c] sm:$0xff]
  %v132 = vld [vmem:[%s0 + $0x334] sm:$0xff]
  %v133 = vld [vmem:[%s0 + $0x33c] sm:$0xff]
  %v134 = vld [vmem:[%s0 + $0x344] sm:$0xf]
  %v135 = vld [vmem:[%s0 + $0x348] sm:$0xff]
  %v136 = vld [vmem:[%s0 + $0x350] sm:$0xff]
  %v137 = vld [vmem:[%s0 + $0x358] sm:$0xff]
  %v138 = vld [vmem:[%s0 + $0x360] sm:$0xf]
  %v139 = vld [vmem:[%s0 + $0x364] sm:$0xff]
  %v140 = vld [vmem:[%s0 + $0x36c] sm:$0xff]
  %v141 = vld [vmem:[%s0 + $0x374] sm:$0xff]
  %v142 = vld [vmem:[%s0 + $0x37c] sm:$0xf]
  %v143 = vld [vmem:[%s0 + $0x380] sm:$0xff]
  %v144 = vld [vmem:[%s0 + $0x388] sm:$0xff]
  %v145 = vld [vmem:[%s0 + $0x390] sm:$0xff]
  %v146 = vld [vmem:[%s0 + $0x398] sm:$0xf]
  %v147 = vld [vmem:[%s0 + $0x39c] sm:$0xff]
  %v148 = vld [vmem:[%s0 + $0x3a4] sm:$0xff]
  %v149 = vld [vmem:[%s0 + $0x3ac] sm:$0xff]
  %v150 = vld [vmem:[%s0 + $0x3b4] sm:$0xf]
  %v151 = vld [vmem:[%s0 + $0x3b8] sm:$0xff]
  %v152 = vld [vmem:[%s0 + $0x3c0] sm:$0xff]
  %v153 = vld [vmem:[%s0 + $0x3c8] sm:$0xff]
  %v154 = vld [vmem:[%s0 + $0x3d0] sm:$0xf]
  %v155 = vld [vmem:[%s0 + $0x3d4] sm:$0xff]
  %v156 = vld [vmem:[%s0 + $0x3dc] sm:$0xff]
  %v157 = vld [vmem:[%s0 + $0x3e4] sm:$0xff]
  %v158 = vld [vmem:[%s0 + $0x3ec] sm:$0xf]
  %v159 = vld [vmem:[%s0 + $0x3f0] sm:$0xff]
  %v160 = vld [vmem:[%s0 + $0x3f8] sm:$0xff]
  %v161 = vld [vmem:[%s0 + $0x400] sm:$0xff]
  %v162 = vld [vmem:[%s0 + $0x408] sm:$0xf]
  %v163 = vld [vmem:[%s0 + $0x40c] sm:$0xff]
  %v164 = vld [vmem:[%s0 + $0x414] sm:$0xff]
  %v165 = vld [vmem:[%s0 + $0x41c] sm:$0xff]
  %v166 = vld [vmem:[%s0 + $0x424] sm:$0xf]
  %v167 = vld [vmem:[%s0 + $0x428] sm:$0xff]
  %v168 = vld [vmem:[%s0 + $0x430] sm:$0xff]
  %v169 = vld [vmem:[%s0 + $0x438] sm:$0xff]
  %v170 = vld [vmem:[%s0 + $0x440] sm:$0xf]
  %v171 = vld [vmem:[%s0 + $0x444] sm:$0xff]
  %v172 = vld [vmem:[%s0 + $0x44c] sm:$0xff]
  %v173 = vld [vmem:[%s0 + $0x454] sm:$0xff]
  %v174 = vld [vmem:[%s0 + $0x45c] sm:$0xf]
  %v175 = vld [vmem:[%s0 + $0x460] sm:$0xff]
  %v176 = vld [vmem:[%s0 + $0x468] sm:$0xff]
  %v177 = vld [vmem:[%s0 + $0x470] sm:$0xff]
  %v178 = vld [vmem:[%s0 + $0x478] sm:$0xf]
  %v179 = vld [vmem:[%s0 + $0x47c] sm:$0xff]
  %v180 = vld [vmem:[%s0 + $0x484] sm:$0xff]
  %v181 = vld [vmem:[%s0 + $0x48c] sm:$0xff]
  %v182 = vld [vmem:[%s0 + $0x494] sm:$0xf]
  %v183 = vld [vmem:[%s0 + $0x498] sm:$0xff]
  %v184 = vld [vmem:[%s0 + $0x4a0] sm:$0xff]
  %v185 = vld [vmem:[%s0 + $0x4a8] sm:$0xff]
  %v186 = vld [vmem:[%s0 + $0x4b0] sm:$0xf]
  %v187 = vld [vmem:[%s0 + $0x4b4] sm:$0xff]
  %v188 = vld [vmem:[%s0 + $0x4bc] sm:$0xff]
  %v189 = vld [vmem:[%s0 + $0x4c4] sm:$0xff]
  %v190 = vld [vmem:[%s0 + $0x4cc] sm:$0xf]
  %v191 = vld [vmem:[%s0 + $0x4d0] sm:$0xff]
  %v192 = vld [vmem:[%s0 + $0x4d8] sm:$0xff]
  %v193 = vld [vmem:[%s0 + $0x4e0] sm:$0xff]
  %v194 = vld [vmem:[%s0 + $0x4e8] sm:$0xf]
  %v195 = vld [vmem:[%s0 + $0x4ec] sm:$0xff]
  %v196 = vld [vmem:[%s0 + $0x4f4] sm:$0xff]
  %v197 = vld [vmem:[%s0 + $0x4fc] sm:$0xff]
  %v198 = vld [vmem:[%s0 + $0x504] sm:$0xf]
  %v199 = vld [vmem:[%s0 + $0x508] sm:$0xff]
  %v200 = vld [vmem:[%s0 + $0x510] sm:$0xff]
  %v201 = vld [vmem:[%s0 + $0x518] sm:$0xff]
  %v202 = vld [vmem:[%s0 + $0x520] sm:$0xf]
  %v203 = vld [vmem:[%s0 + $0x524] sm:$0xff]
  %v204 = vld [vmem:[%s0 + $0x52c] sm:$0xff]
  %v205 = vld [vmem:[%s0 + $0x534] sm:$0xff]
  %v206 = vld [vmem:[%s0 + $0x53c] sm:$0xf]
  %v207 = vld [vmem:[%s0 + $0x540] sm:$0xff]
  %v208 = vld [vmem:[%s0 + $0x548] sm:$0xff]
  %v209 = vld [vmem:[%s0 + $0x550] sm:$0xff]
  %v210 = vld [vmem:[%s0 + $0x558] sm:$0xf]
  %v211 = vld [vmem:[%s1] sm:$0xf]
  %v212 = vld [vmem:[%s1 + $0x4] sm:$0xf]
  %v213 = vld [vmem:[%s1 + $0x8] sm:$0xf]
  %v214 = vld [vmem:[%s1 + $0xc] sm:$0xf]
  %v215 = vld [vmem:[%s1 + $0x10] sm:$0xf]
  %v216 = vld [vmem:[%s1 + $0x14] sm:$0xf]
  %v217 = vld [vmem:[%s1 + $0x18] sm:$0xf]
  %v218 = vld [vmem:[%s1 + $0x1c] sm:$0xf]
  %v219 = vld [vmem:[%s1 + $0x20] sm:$0xf]
  %v220 = vld [vmem:[%s1 + $0x24] sm:$0xf]
  %v221 = vld [vmem:[%s1 + $0x28] sm:$0xf]
  %v222 = vld [vmem:[%s1 + $0x2c] sm:$0xf]
  %v223 = vld [vmem:[%s1 + $0x30] sm:$0xf]
  %v224 = vld [vmem:[%s1 + $0x34] sm:$0xf]
  %v225 = vld [vmem:[%s1 + $0x38] sm:$0xf]
  %v226 = vld [vmem:[%s1 + $0x3c] sm:$0xf]
  %v227 = vld [vmem:[%s1 + $0x40] sm:$0xf]
  %v228 = vld [vmem:[%s1 + $0x44] sm:$0xf]
  %v229 = vld [vmem:[%s1 + $0x48] sm:$0xf]
  %v230 = vld [vmem:[%s1 + $0x4c] sm:$0xf]
  %v231 = vld [vmem:[%s1 + $0x50] sm:$0xf]
  %v232 = vld [vmem:[%s1 + $0x54] sm:$0xf]
  %v233 = vld [vmem:[%s1 + $0x58] sm:$0xf]
  %v234 = vld [vmem:[%s1 + $0x5c] sm:$0xf]
  %v235 = vld [vmem:[%s1 + $0x60] sm:$0xf]
  %v236 = vld [vmem:[%s1 + $0x64] sm:$0xf]
  %v237 = vld [vmem:[%s1 + $0x68] sm:$0xf]
  %v238 = vld [vmem:[%s1 + $0x6c] sm:$0xf]
  %v239 = vld [vmem:[%s1 + $0x70] sm:$0xf]
  %v240 = vld [vmem:[%s1 + $0x74] sm:$0xf]
  %v241 = vld [vmem:[%s1 + $0x78] sm:$0xf]
  %v242 = vld [vmem:[%s1 + $0x7c] sm:$0xf]
  %v243 = vld [vmem:[%s1 + $0x80] sm:$0xf]
  %v244 = vld [vmem:[%s1 + $0x84] sm:$0xf]
  %v245 = vld [vmem:[%s1 + $0x88] sm:$0xf]
  %v246 = vld [vmem:[%s1 + $0x8c] sm:$0xf]
  %v247 = vld [vmem:[%s1 + $0x90] sm:$0xf]
  %v248 = vld [vmem:[%s1 + $0x94] sm:$0xf]
  %v249 = vld [vmem:[%s1 + $0x98] sm:$0xf]
  %v250 = vld [vmem:[%s1 + $0x9c] sm:$0xf]
  %v251 = vld [vmem:[%s1 + $0xa0] sm:$0xf]
  %v252 = vld [vmem:[%s1 + $0xa4] sm:$0xf]
  %v253 = vld [vmem:[%s1 + $0xa8] sm:$0xf]
  %v254 = vld [vmem:[%s1 + $0xac] sm:$0xf]
  %v255 = vld [vmem:[%s1 + $0xb0] sm:$0xf]
  %v256 = vld [vmem:[%s1 + $0xb4] sm:$0xf]
  %v257 = vld [vmem:[%s1 + $0xb8] sm:$0xf]
  %v258 = vld [vmem:[%s1 + $0xbc] sm:$0xf]
  %v259 = vld [vmem:[%s1 + $0xc0] sm:$0xf]
  %v260 = vld [vmem:[%s1 + $0xc4] sm:$0xf]
  %v261 = vld [vmem:[%s1 + $0xc8] sm:$0xf]
  %v262 = vld [vmem:[%s1 + $0xcc] sm:$0xf]
  %v263 = vld [vmem:[%s1 + $0xd0] sm:$0xf]
  %v264 = vld [vmem:[%s1 + $0xd4] sm:$0xf]
  %v265 = vld [vmem:[%s1 + $0xd8] sm:$0xf]
  %v266 = vld [vmem:[%s1 + $0xdc] sm:$0xf]
  %v267 = vld [vmem:[%s1 + $0xe0] sm:$0xf]
  %v268 = vld [vmem:[%s1 + $0xe4] sm:$0xf]
  %v269 = vld [vmem:[%s1 + $0xe8] sm:$0xf]
  %v270 = vld [vmem:[%s1 + $0xec] sm:$0xf]
  %v271 = vld [vmem:[%s1 + $0xf0] sm:$0xf]
  %v272 = vld [vmem:[%s1 + $0xf4] sm:$0xf]
  %v273 = vld [vmem:[%s1 + $0xf8] sm:$0xf]
  %v274 = vld [vmem:[%s1 + $0xfc] sm:$0xf]
  %v275 = vld [vmem:[%s1 + $0x100] sm:$0xf]
  %v276 = vld [vmem:[%s1 + $0x104] sm:$0xf]
  %v277 = vld [vmem:[%s1 + $0x108] sm:$0xf]
  %v278 = vld [vmem:[%s1 + $0x10c] sm:$0xf]
  %v279 = vld [vmem:[%s1 + $0x110] sm:$0xf]
  %v280 = vld [vmem:[%s1 + $0x114] sm:$0xf]
  %v281 = vld [vmem:[%s1 + $0x118] sm:$0xf]
  %v282 = vld [vmem:[%s1 + $0x11c] sm:$0xf]
  %v283 = vld [vmem:[%s1 + $0x120] sm:$0xf]
  %v284 = vld [vmem:[%s1 + $0x124] sm:$0xf]
  %v285 = vld [vmem:[%s1 + $0x128] sm:$0xf]
  %v286 = vld [vmem:[%s1 + $0x12c] sm:$0xf]
  %v287 = vld [vmem:[%s1 + $0x130] sm:$0xf]
  %v288 = vld [vmem:[%s1 + $0x134] sm:$0xf]
  %v289 = vld [vmem:[%s1 + $0x138] sm:$0xf]
  %v290 = vld [vmem:[%s1 + $0x13c] sm:$0xf]
  %v291 = vld [vmem:[%s1 + $0x140] sm:$0xf]
  %v292 = vld [vmem:[%s1 + $0x144] sm:$0xf]
  %v293 = vld [vmem:[%s1 + $0x148] sm:$0xf]
  %v294 = vld [vmem:[%s1 + $0x14c] sm:$0xf]
  %v295 = vld [vmem:[%s1 + $0x150] sm:$0xf]
  %v296 = vld [vmem:[%s1 + $0x154] sm:$0xf]
  %v297 = vld [vmem:[%s1 + $0x158] sm:$0xf]
  %v298 = vld [vmem:[%s1 + $0x15c] sm:$0xf]
  %v299 = vld [vmem:[%s1 + $0x160] sm:$0xf]
  %v300 = vld [vmem:[%s1 + $0x164] sm:$0xf]
  %v301 = vld [vmem:[%s1 + $0x168] sm:$0xf]
  %v302 = vld [vmem:[%s1 + $0x16c] sm:$0xf]
  %v303 = vld [vmem:[%s1 + $0x170] sm:$0xf]
  %v304 = vld [vmem:[%s1 + $0x174] sm:$0xf]
  %v305 = vld [vmem:[%s1 + $0x178] sm:$0xf]
  %v306 = vld [vmem:[%s1 + $0x17c] sm:$0xf]
  %v307 = vld [vmem:[%s1 + $0x180] sm:$0xf]
  %v308 = vld [vmem:[%s1 + $0x184] sm:$0xf]
  %v309 = vld [vmem:[%s1 + $0x188] sm:$0xf]
  %v310 = vld [vmem:[%s1 + $0x18c] sm:$0xf]
  %v311 = vld [vmem:[%s1 + $0x190] sm:$0xf]
  %v312 = vld [vmem:[%s1 + $0x194] sm:$0xf]
  %v313 = vld [vmem:[%s1 + $0x198] sm:$0xf]
  %v314 = vld [vmem:[%s1 + $0x19c] sm:$0xf]
  %v315 = vld [vmem:[%s1 + $0x1a0] sm:$0xf]
  %v316 = vld [vmem:[%s1 + $0x1a4] sm:$0xf]
  %v317 = vld [vmem:[%s1 + $0x1a8] sm:$0xf]
  %v318 = vld [vmem:[%s1 + $0x1ac] sm:$0xf]
  %v319 = vld [vmem:[%s1 + $0x1b0] sm:$0xf]
  %v320 = vld [vmem:[%s1 + $0x1b4] sm:$0xf]
  %v321 = vld [vmem:[%s1 + $0x1b8] sm:$0xf]
  %v322 = vld [vmem:[%s1 + $0x1bc] sm:$0xf]
  %v323 = vld [vmem:[%s2] sm:$0x1]
  %v325 = vlaneseq
  %v326 = vshrl.u32 %v325, 7
  %v327 = vsub.s32 0, %v326
  %v328 = vrot.slane %v323, %v327
  %v526 = vunpack.c.l.b16 %v15
  %v527 = vunpack.c.h.b16 %v15
  %v528 = vunpack.c.l.b16 %v16
  %v529 = vunpack.c.h.b16 %v16
  %v530 = vunpack.c.l.b16 %v17
  %v531 = vunpack.c.h.b16 %v17
  %v532 = vunpack.c.l.b16 %v18
  %v533 = vunpack.c.l.b16 %v19
  %v534 = vunpack.c.h.b16 %v19
  %v535 = vunpack.c.l.b16 %v20
  %v536 = vunpack.c.h.b16 %v20
  %v537 = vunpack.c.l.b16 %v21
  %v538 = vunpack.c.h.b16 %v21
  %v539 = vunpack.c.l.b16 %v22
  %v540 = vunpack.c.l.b16 %v23
  %v541 = vunpack.c.h.b16 %v23
  %v542 = vunpack.c.l.b16 %v24
  %v543 = vunpack.c.h.b16 %v24
  %v544 = vunpack.c.l.b16 %v25
  %v545 = vunpack.c.h.b16 %v25
  %v546 = vunpack.c.l.b16 %v26
  %v547 = vunpack.c.l.b16 %v27
  %v548 = vunpack.c.h.b16 %v27
  %v549 = vunpack.c.l.b16 %v28
  %v550 = vunpack.c.h.b16 %v28
  %v551 = vunpack.c.l.b16 %v29
  %v552 = vunpack.c.h.b16 %v29
  %v553 = vunpack.c.l.b16 %v30
  %v554 = vunpack.c.l.b16 %v31
  %v555 = vunpack.c.h.b16 %v31
  %v556 = vunpack.c.l.b16 %v32
  %v557 = vunpack.c.h.b16 %v32
  %v558 = vunpack.c.l.b16 %v33
  %v559 = vunpack.c.h.b16 %v33
  %v560 = vunpack.c.l.b16 %v34
  %v561 = vunpack.c.l.b16 %v35
  %v562 = vunpack.c.h.b16 %v35
  %v563 = vunpack.c.l.b16 %v36
  %v564 = vunpack.c.h.b16 %v36
  %v565 = vunpack.c.l.b16 %v37
  %v566 = vunpack.c.h.b16 %v37
  %v567 = vunpack.c.l.b16 %v38
  %v568 = vunpack.c.l.b16 %v39
  %v569 = vunpack.c.h.b16 %v39
  %v570 = vunpack.c.l.b16 %v40
  %v571 = vunpack.c.h.b16 %v40
  %v572 = vunpack.c.l.b16 %v41
  %v573 = vunpack.c.h.b16 %v41
  %v574 = vunpack.c.l.b16 %v42
  %v575 = vunpack.c.l.b16 %v43
  %v576 = vunpack.c.h.b16 %v43
  %v577 = vunpack.c.l.b16 %v44
  %v578 = vunpack.c.h.b16 %v44
  %v579 = vunpack.c.l.b16 %v45
  %v580 = vunpack.c.h.b16 %v45
  %v581 = vunpack.c.l.b16 %v46
  %v582 = vunpack.c.l.b16 %v47
  %v583 = vunpack.c.h.b16 %v47
  %v584 = vunpack.c.l.b16 %v48
  %v585 = vunpack.c.h.b16 %v48
  %v586 = vunpack.c.l.b16 %v49
  %v587 = vunpack.c.h.b16 %v49
  %v588 = vunpack.c.l.b16 %v50
  %v589 = vunpack.c.l.b16 %v51
  %v590 = vunpack.c.h.b16 %v51
  %v591 = vunpack.c.l.b16 %v52
  %v592 = vunpack.c.h.b16 %v52
  %v593 = vunpack.c.l.b16 %v53
  %v594 = vunpack.c.h.b16 %v53
  %v595 = vunpack.c.l.b16 %v54
  %v596 = vunpack.c.l.b16 %v55
  %v597 = vunpack.c.h.b16 %v55
  %v598 = vunpack.c.l.b16 %v56
  %v599 = vunpack.c.h.b16 %v56
  %v600 = vunpack.c.l.b16 %v57
  %v601 = vunpack.c.h.b16 %v57
  %v602 = vunpack.c.l.b16 %v58
  %v603 = vunpack.c.l.b16 %v59
  %v604 = vunpack.c.h.b16 %v59
  %v605 = vunpack.c.l.b16 %v60
  %v606 = vunpack.c.h.b16 %v60
  %v607 = vunpack.c.l.b16 %v61
  %v608 = vunpack.c.h.b16 %v61
  %v609 = vunpack.c.l.b16 %v62
  %v610 = vunpack.c.l.b16 %v63
  %v611 = vunpack.c.h.b16 %v63
  %v612 = vunpack.c.l.b16 %v64
  %v613 = vunpack.c.h.b16 %v64
  %v614 = vunpack.c.l.b16 %v65
  %v615 = vunpack.c.h.b16 %v65
  %v616 = vunpack.c.l.b16 %v66
  %v617 = vunpack.c.l.b16 %v67
  %v618 = vunpack.c.h.b16 %v67
  %v619 = vunpack.c.l.b16 %v68
  %v620 = vunpack.c.h.b16 %v68
  %v621 = vunpack.c.l.b16 %v69
  %v622 = vunpack.c.h.b16 %v69
  %v623 = vunpack.c.l.b16 %v70
  %v624 = vunpack.c.l.b16 %v71
  %v625 = vunpack.c.h.b16 %v71
  %v626 = vunpack.c.l.b16 %v72
  %v627 = vunpack.c.h.b16 %v72
  %v628 = vunpack.c.l.b16 %v73
  %v629 = vunpack.c.h.b16 %v73
  %v630 = vunpack.c.l.b16 %v74
  %v631 = vunpack.c.l.b16 %v75
  %v632 = vunpack.c.h.b16 %v75
  %v633 = vunpack.c.l.b16 %v76
  %v634 = vunpack.c.h.b16 %v76
  %v635 = vunpack.c.l.b16 %v77
  %v636 = vunpack.c.h.b16 %v77
  %v637 = vunpack.c.l.b16 %v78
  %v638 = vunpack.c.l.b16 %v79
  %v639 = vunpack.c.h.b16 %v79
  %v640 = vunpack.c.l.b16 %v80
  %v641 = vunpack.c.h.b16 %v80
  %v642 = vunpack.c.l.b16 %v81
  %v643 = vunpack.c.h.b16 %v81
  %v644 = vunpack.c.l.b16 %v82
  %v645 = vunpack.c.l.b16 %v83
  %v646 = vunpack.c.h.b16 %v83
  %v647 = vunpack.c.l.b16 %v84
  %v648 = vunpack.c.h.b16 %v84
  %v649 = vunpack.c.l.b16 %v85
  %v650 = vunpack.c.h.b16 %v85
  %v651 = vunpack.c.l.b16 %v86
  %v652 = vunpack.c.l.b16 %v87
  %v653 = vunpack.c.h.b16 %v87
  %v654 = vunpack.c.l.b16 %v88
  %v655 = vunpack.c.h.b16 %v88
  %v656 = vunpack.c.l.b16 %v89
  %v657 = vunpack.c.h.b16 %v89
  %v658 = vunpack.c.l.b16 %v90
  %v659 = vunpack.c.l.b16 %v91
  %v660 = vunpack.c.h.b16 %v91
  %v661 = vunpack.c.l.b16 %v92
  %v662 = vunpack.c.h.b16 %v92
  %v663 = vunpack.c.l.b16 %v93
  %v664 = vunpack.c.h.b16 %v93
  %v665 = vunpack.c.l.b16 %v94
  %v666 = vunpack.c.l.b16 %v95
  %v667 = vunpack.c.h.b16 %v95
  %v668 = vunpack.c.l.b16 %v96
  %v669 = vunpack.c.h.b16 %v96
  %v670 = vunpack.c.l.b16 %v97
  %v671 = vunpack.c.h.b16 %v97
  %v672 = vunpack.c.l.b16 %v98
  %v673 = vunpack.c.l.b16 %v99
  %v674 = vunpack.c.h.b16 %v99
  %v675 = vunpack.c.l.b16 %v100
  %v676 = vunpack.c.h.b16 %v100
  %v677 = vunpack.c.l.b16 %v101
  %v678 = vunpack.c.h.b16 %v101
  %v679 = vunpack.c.l.b16 %v102
  %v680 = vunpack.c.l.b16 %v103
  %v681 = vunpack.c.h.b16 %v103
  %v682 = vunpack.c.l.b16 %v104
  %v683 = vunpack.c.h.b16 %v104
  %v684 = vunpack.c.l.b16 %v105
  %v685 = vunpack.c.h.b16 %v105
  %v686 = vunpack.c.l.b16 %v106
  %v687 = vunpack.c.l.b16 %v107
  %v688 = vunpack.c.h.b16 %v107
  %v689 = vunpack.c.l.b16 %v108
  %v690 = vunpack.c.h.b16 %v108
  %v691 = vunpack.c.l.b16 %v109
  %v692 = vunpack.c.h.b16 %v109
  %v693 = vunpack.c.l.b16 %v110
  %v694 = vunpack.c.l.b16 %v111
  %v695 = vunpack.c.h.b16 %v111
  %v696 = vunpack.c.l.b16 %v112
  %v697 = vunpack.c.h.b16 %v112
  %v698 = vunpack.c.l.b16 %v113
  %v699 = vunpack.c.h.b16 %v113
  %v700 = vunpack.c.l.b16 %v114
  %v701 = vunpack.c.l.b16 %v115
  %v702 = vunpack.c.h.b16 %v115
  %v703 = vunpack.c.l.b16 %v116
  %v704 = vunpack.c.h.b16 %v116
  %v705 = vunpack.c.l.b16 %v117
  %v706 = vunpack.c.h.b16 %v117
  %v707 = vunpack.c.l.b16 %v118
  %v708 = vunpack.c.l.b16 %v119
  %v709 = vunpack.c.h.b16 %v119
  %v710 = vunpack.c.l.b16 %v120
  %v711 = vunpack.c.h.b16 %v120
  %v712 = vunpack.c.l.b16 %v121
  %v713 = vunpack.c.h.b16 %v121
  %v714 = vunpack.c.l.b16 %v122
  %v715 = vunpack.c.l.b16 %v123
  %v716 = vunpack.c.h.b16 %v123
  %v717 = vunpack.c.l.b16 %v124
  %v718 = vunpack.c.h.b16 %v124
  %v719 = vunpack.c.l.b16 %v125
  %v720 = vunpack.c.h.b16 %v125
  %v721 = vunpack.c.l.b16 %v126
  %v722 = vunpack.c.l.b16 %v127
  %v723 = vunpack.c.h.b16 %v127
  %v724 = vunpack.c.l.b16 %v128
  %v725 = vunpack.c.h.b16 %v128
  %v726 = vunpack.c.l.b16 %v129
  %v727 = vunpack.c.h.b16 %v129
  %v728 = vunpack.c.l.b16 %v130
  %v729 = vunpack.c.l.b16 %v131
  %v730 = vunpack.c.h.b16 %v131
  %v731 = vunpack.c.l.b16 %v132
  %v732 = vunpack.c.h.b16 %v132
  %v733 = vunpack.c.l.b16 %v133
  %v734 = vunpack.c.h.b16 %v133
  %v735 = vunpack.c.l.b16 %v134
  %v736 = vunpack.c.l.b16 %v135
  %v737 = vunpack.c.h.b16 %v135
  %v738 = vunpack.c.l.b16 %v136
  %v739 = vunpack.c.h.b16 %v136
  %v740 = vunpack.c.l.b16 %v137
  %v741 = vunpack.c.h.b16 %v137
  %v742 = vunpack.c.l.b16 %v138
  %v743 = vunpack.c.l.b16 %v139
  %v744 = vunpack.c.h.b16 %v139
  %v745 = vunpack.c.l.b16 %v140
  %v746 = vunpack.c.h.b16 %v140
  %v747 = vunpack.c.l.b16 %v141
  %v748 = vunpack.c.h.b16 %v141
  %v749 = vunpack.c.l.b16 %v142
  %v750 = vunpack.c.l.b16 %v143
  %v751 = vunpack.c.h.b16 %v143
  %v752 = vunpack.c.l.b16 %v144
  %v753 = vunpack.c.h.b16 %v144
  %v754 = vunpack.c.l.b16 %v145
  %v755 = vunpack.c.h.b16 %v145
  %v756 = vunpack.c.l.b16 %v146
  %v757 = vunpack.c.l.b16 %v147
  %v758 = vunpack.c.h.b16 %v147
  %v759 = vunpack.c.l.b16 %v148
  %v760 = vunpack.c.h.b16 %v148
  %v761 = vunpack.c.l.b16 %v149
  %v762 = vunpack.c.h.b16 %v149
  %v763 = vunpack.c.l.b16 %v150
  %v764 = vunpack.c.l.b16 %v151
  %v765 = vunpack.c.h.b16 %v151
  %v766 = vunpack.c.l.b16 %v152
  %v767 = vunpack.c.h.b16 %v152
  %v768 = vunpack.c.l.b16 %v153
  %v769 = vunpack.c.h.b16 %v153
  %v770 = vunpack.c.l.b16 %v154
  %v771 = vunpack.c.l.b16 %v155
  %v772 = vunpack.c.h.b16 %v155
  %v773 = vunpack.c.l.b16 %v156
  %v774 = vunpack.c.h.b16 %v156
  %v775 = vunpack.c.l.b16 %v157
  %v776 = vunpack.c.h.b16 %v157
  %v777 = vunpack.c.l.b16 %v158
  %v778 = vunpack.c.l.b16 %v159
  %v779 = vunpack.c.h.b16 %v159
  %v780 = vunpack.c.l.b16 %v160
  %v781 = vunpack.c.h.b16 %v160
  %v782 = vunpack.c.l.b16 %v161
  %v783 = vunpack.c.h.b16 %v161
  %v784 = vunpack.c.l.b16 %v162
  %v785 = vunpack.c.l.b16 %v163
  %v786 = vunpack.c.h.b16 %v163
  %v787 = vunpack.c.l.b16 %v164
  %v788 = vunpack.c.h.b16 %v164
  %v789 = vunpack.c.l.b16 %v165
  %v790 = vunpack.c.h.b16 %v165
  %v791 = vunpack.c.l.b16 %v166
  %v792 = vunpack.c.l.b16 %v167
  %v793 = vunpack.c.h.b16 %v167
  %v794 = vunpack.c.l.b16 %v168
  %v795 = vunpack.c.h.b16 %v168
  %v796 = vunpack.c.l.b16 %v169
  %v797 = vunpack.c.h.b16 %v169
  %v798 = vunpack.c.l.b16 %v170
  %v799 = vunpack.c.l.b16 %v171
  %v800 = vunpack.c.h.b16 %v171
  %v801 = vunpack.c.l.b16 %v172
  %v802 = vunpack.c.h.b16 %v172
  %v803 = vunpack.c.l.b16 %v173
  %v804 = vunpack.c.h.b16 %v173
  %v805 = vunpack.c.l.b16 %v174
  %v806 = vunpack.c.l.b16 %v175
  %v807 = vunpack.c.h.b16 %v175
  %v808 = vunpack.c.l.b16 %v176
  %v809 = vunpack.c.h.b16 %v176
  %v810 = vunpack.c.l.b16 %v177
  %v811 = vunpack.c.h.b16 %v177
  %v812 = vunpack.c.l.b16 %v178
  %v813 = vunpack.c.l.b16 %v179
  %v814 = vunpack.c.h.b16 %v179
  %v815 = vunpack.c.l.b16 %v180
  %v816 = vunpack.c.h.b16 %v180
  %v817 = vunpack.c.l.b16 %v181
  %v818 = vunpack.c.h.b16 %v181
  %v819 = vunpack.c.l.b16 %v182
  %v820 = vunpack.c.l.b16 %v183
  %v821 = vunpack.c.h.b16 %v183
  %v822 = vunpack.c.l.b16 %v184
  %v823 = vunpack.c.h.b16 %v184
  %v824 = vunpack.c.l.b16 %v185
  %v825 = vunpack.c.h.b16 %v185
  %v826 = vunpack.c.l.b16 %v186
  %v827 = vunpack.c.l.b16 %v187
  %v828 = vunpack.c.h.b16 %v187
  %v829 = vunpack.c.l.b16 %v188
  %v830 = vunpack.c.h.b16 %v188
  %v831 = vunpack.c.l.b16 %v189
  %v832 = vunpack.c.h.b16 %v189
  %v833 = vunpack.c.l.b16 %v190
  %v834 = vunpack.c.l.b16 %v191
  %v835 = vunpack.c.h.b16 %v191
  %v836 = vunpack.c.l.b16 %v192
  %v837 = vunpack.c.h.b16 %v192
  %v838 = vunpack.c.l.b16 %v193
  %v839 = vunpack.c.h.b16 %v193
  %v840 = vunpack.c.l.b16 %v194
  %v841 = vunpack.c.l.b16 %v195
  %v842 = vunpack.c.h.b16 %v195
  %v843 = vunpack.c.l.b16 %v196
  %v844 = vunpack.c.h.b16 %v196
  %v845 = vunpack.c.l.b16 %v197
  %v846 = vunpack.c.h.b16 %v197
  %v847 = vunpack.c.l.b16 %v198
  %v848 = vunpack.c.l.b16 %v199
  %v849 = vunpack.c.h.b16 %v199
  %v850 = vunpack.c.l.b16 %v200
  %v851 = vunpack.c.h.b16 %v200
  %v852 = vunpack.c.l.b16 %v201
  %v853 = vunpack.c.h.b16 %v201
  %v854 = vunpack.c.l.b16 %v202
  %v855 = vunpack.c.l.b16 %v203
  %v856 = vunpack.c.h.b16 %v203
  %v857 = vunpack.c.l.b16 %v204
  %v858 = vunpack.c.h.b16 %v204
  %v859 = vunpack.c.l.b16 %v205
  %v860 = vunpack.c.h.b16 %v205
  %v861 = vunpack.c.l.b16 %v206
  %v862 = vunpack.c.l.b16 %v207
  %v863 = vunpack.c.h.b16 %v207
  %v864 = vunpack.c.l.b16 %v208
  %v865 = vunpack.c.h.b16 %v208
  %v866 = vunpack.c.l.b16 %v209
  %v867 = vunpack.c.h.b16 %v209
  %v868 = vunpack.c.l.b16 %v210
  %v869 = vpack.c.b16 %v533, %v526
  %v870 = vpack.c.b16 %v534, %v527
  %v871 = vpack.c.b16 %v535, %v528
  %v872 = vpack.c.b16 %v536, %v529
  %v873 = vpack.c.b16 %v537, %v530
  %v874 = vpack.c.b16 %v538, %v531
  %v875 = vpack.c.b16 %v539, %v532
  %v876 = vpack.c.b16 %v547, %v540
  %v877 = vpack.c.b16 %v548, %v541
  %v878 = vpack.c.b16 %v549, %v542
  %v879 = vpack.c.b16 %v550, %v543
  %v880 = vpack.c.b16 %v551, %v544
  %v881 = vpack.c.b16 %v552, %v545
  %v882 = vpack.c.b16 %v553, %v546
  %v883 = vpack.c.b16 %v561, %v554
  %v884 = vpack.c.b16 %v562, %v555
  %v885 = vpack.c.b16 %v563, %v556
  %v886 = vpack.c.b16 %v564, %v557
  %v887 = vpack.c.b16 %v565, %v558
  %v888 = vpack.c.b16 %v566, %v559
  %v889 = vpack.c.b16 %v567, %v560
  %v890 = vpack.c.b16 %v575, %v568
  %v891 = vpack.c.b16 %v576, %v569
  %v892 = vpack.c.b16 %v577, %v570
  %v893 = vpack.c.b16 %v578, %v571
  %v894 = vpack.c.b16 %v579, %v572
  %v895 = vpack.c.b16 %v580, %v573
  %v896 = vpack.c.b16 %v581, %v574
  %v897 = vpack.c.b16 %v589, %v582
  %v898 = vpack.c.b16 %v590, %v583
  %v899 = vpack.c.b16 %v591, %v584
  %v900 = vpack.c.b16 %v592, %v585
  %v901 = vpack.c.b16 %v593, %v586
  %v902 = vpack.c.b16 %v594, %v587
  %v903 = vpack.c.b16 %v595, %v588
  %v904 = vpack.c.b16 %v603, %v596
  %v905 = vpack.c.b16 %v604, %v597
  %v906 = vpack.c.b16 %v605, %v598
  %v907 = vpack.c.b16 %v606, %v599
  %v908 = vpack.c.b16 %v607, %v600
  %v909 = vpack.c.b16 %v608, %v601
  %v910 = vpack.c.b16 %v609, %v602
  %v911 = vpack.c.b16 %v617, %v610
  %v912 = vpack.c.b16 %v618, %v611
  %v913 = vpack.c.b16 %v619, %v612
  %v914 = vpack.c.b16 %v620, %v613
  %v915 = vpack.c.b16 %v621, %v614
  %v916 = vpack.c.b16 %v622, %v615
  %v917 = vpack.c.b16 %v623, %v616
  %v918 = vpack.c.b16 %v631, %v624
  %v919 = vpack.c.b16 %v632, %v625
  %v920 = vpack.c.b16 %v633, %v626
  %v921 = vpack.c.b16 %v634, %v627
  %v922 = vpack.c.b16 %v635, %v628
  %v923 = vpack.c.b16 %v636, %v629
  %v924 = vpack.c.b16 %v637, %v630
  %v925 = vpack.c.b16 %v645, %v638
  %v926 = vpack.c.b16 %v646, %v639
  %v927 = vpack.c.b16 %v647, %v640
  %v928 = vpack.c.b16 %v648, %v641
  %v929 = vpack.c.b16 %v649, %v642
  %v930 = vpack.c.b16 %v650, %v643
  %v931 = vpack.c.b16 %v651, %v644
  %v932 = vpack.c.b16 %v659, %v652
  %v933 = vpack.c.b16 %v660, %v653
  %v934 = vpack.c.b16 %v661, %v654
  %v935 = vpack.c.b16 %v662, %v655
  %v936 = vpack.c.b16 %v663, %v656
  %v937 = vpack.c.b16 %v664, %v657
  %v938 = vpack.c.b16 %v665, %v658
  %v939 = vpack.c.b16 %v673, %v666
  %v940 = vpack.c.b16 %v674, %v667
  %v941 = vpack.c.b16 %v675, %v668
  %v942 = vpack.c.b16 %v676, %v669
  %v943 = vpack.c.b16 %v677, %v670
  %v944 = vpack.c.b16 %v678, %v671
  %v945 = vpack.c.b16 %v679, %v672
  %v946 = vpack.c.b16 %v687, %v680
  %v947 = vpack.c.b16 %v688, %v681
  %v948 = vpack.c.b16 %v689, %v682
  %v949 = vpack.c.b16 %v690, %v683
  %v950 = vpack.c.b16 %v691, %v684
  %v951 = vpack.c.b16 %v692, %v685
  %v952 = vpack.c.b16 %v693, %v686
  %v953 = vpack.c.b16 %v701, %v694
  %v954 = vpack.c.b16 %v702, %v695
  %v955 = vpack.c.b16 %v703, %v696
  %v956 = vpack.c.b16 %v704, %v697
  %v957 = vpack.c.b16 %v705, %v698
  %v958 = vpack.c.b16 %v706, %v699
  %v959 = vpack.c.b16 %v707, %v700
  %v960 = vpack.c.b16 %v715, %v708
  %v961 = vpack.c.b16 %v716, %v709
  %v962 = vpack.c.b16 %v717, %v710
  %v963 = vpack.c.b16 %v718, %v711
  %v964 = vpack.c.b16 %v719, %v712
  %v965 = vpack.c.b16 %v720, %v713
  %v966 = vpack.c.b16 %v721, %v714
  %v967 = vpack.c.b16 %v729, %v722
  %v968 = vpack.c.b16 %v730, %v723
  %v969 = vpack.c.b16 %v731, %v724
  %v970 = vpack.c.b16 %v732, %v725
  %v971 = vpack.c.b16 %v733, %v726
  %v972 = vpack.c.b16 %v734, %v727
  %v973 = vpack.c.b16 %v735, %v728
  %v974 = vpack.c.b16 %v743, %v736
  %v975 = vpack.c.b16 %v744, %v737
  %v976 = vpack.c.b16 %v745, %v738
  %v977 = vpack.c.b16 %v746, %v739
  %v978 = vpack.c.b16 %v747, %v740
  %v979 = vpack.c.b16 %v748, %v741
  %v980 = vpack.c.b16 %v749, %v742
  %v981 = vpack.c.b16 %v757, %v750
  %v982 = vpack.c.b16 %v758, %v751
  %v983 = vpack.c.b16 %v759, %v752
  %v984 = vpack.c.b16 %v760, %v753
  %v985 = vpack.c.b16 %v761, %v754
  %v986 = vpack.c.b16 %v762, %v755
  %v987 = vpack.c.b16 %v763, %v756
  %v988 = vpack.c.b16 %v771, %v764
  %v989 = vpack.c.b16 %v772, %v765
  %v990 = vpack.c.b16 %v773, %v766
  %v991 = vpack.c.b16 %v774, %v767
  %v992 = vpack.c.b16 %v775, %v768
  %v993 = vpack.c.b16 %v776, %v769
  %v994 = vpack.c.b16 %v777, %v770
  %v995 = vpack.c.b16 %v785, %v778
  %v996 = vpack.c.b16 %v786, %v779
  %v997 = vpack.c.b16 %v787, %v780
  %v998 = vpack.c.b16 %v788, %v781
  %v999 = vpack.c.b16 %v789, %v782
  %v1000 = vpack.c.b16 %v790, %v783
  %v1001 = vpack.c.b16 %v791, %v784
  %v1002 = vpack.c.b16 %v799, %v792
  %v1003 = vpack.c.b16 %v800, %v793
  %v1004 = vpack.c.b16 %v801, %v794
  %v1005 = vpack.c.b16 %v802, %v795
  %v1006 = vpack.c.b16 %v803, %v796
  %v1007 = vpack.c.b16 %v804, %v797
  %v1008 = vpack.c.b16 %v805, %v798
  %v1009 = vpack.c.b16 %v813, %v806
  %v1010 = vpack.c.b16 %v814, %v807
  %v1011 = vpack.c.b16 %v815, %v808
  %v1012 = vpack.c.b16 %v816, %v809
  %v1013 = vpack.c.b16 %v817, %v810
  %v1014 = vpack.c.b16 %v818, %v811
  %v1015 = vpack.c.b16 %v819, %v812
  %v1016 = vpack.c.b16 %v827, %v820
  %v1017 = vpack.c.b16 %v828, %v821
  %v1018 = vpack.c.b16 %v829, %v822
  %v1019 = vpack.c.b16 %v830, %v823
  %v1020 = vpack.c.b16 %v831, %v824
  %v1021 = vpack.c.b16 %v832, %v825
  %v1022 = vpack.c.b16 %v833, %v826
  %v1023 = vpack.c.b16 %v841, %v834
  %v1024 = vpack.c.b16 %v842, %v835
  %v1025 = vpack.c.b16 %v843, %v836
  %v1026 = vpack.c.b16 %v844, %v837
  %v1027 = vpack.c.b16 %v845, %v838
  %v1028 = vpack.c.b16 %v846, %v839
  %v1029 = vpack.c.b16 %v847, %v840
  %v1030 = vpack.c.b16 %v855, %v848
  %v1031 = vpack.c.b16 %v856, %v849
  %v1032 = vpack.c.b16 %v857, %v850
  %v1033 = vpack.c.b16 %v858, %v851
  %v1034 = vpack.c.b16 %v859, %v852
  %v1035 = vpack.c.b16 %v860, %v853
  %v1036 = vpack.c.b16 %v861, %v854
  %v1037 = vpack.c.b16 %v862, %v862
  %v1038 = vpack.c.b16 %v863, %v863
  %v1039 = vpack.c.b16 %v864, %v864
  %v1040 = vpack.c.b16 %v865, %v865
  %v1041 = vpack.c.b16 %v866, %v866
  %v1042 = vpack.c.b16 %v867, %v867
  %v1043 = vpack.c.b16 %v868, %v868
  %v1331 = vunpack.c.l.b16 %v211
  %v1332 = vunpack.c.l.b16 %v212
  %v1333 = vunpack.c.l.b16 %v213
  %v1334 = vunpack.c.l.b16 %v214
  %v1335 = vunpack.c.l.b16 %v215
  %v1336 = vunpack.c.l.b16 %v216
  %v1337 = vunpack.c.l.b16 %v217
  %v1338 = vunpack.c.l.b16 %v218
  %v1339 = vunpack.c.l.b16 %v219
  %v1340 = vunpack.c.l.b16 %v220
  %v1341 = vunpack.c.l.b16 %v221
  %v1342 = vunpack.c.l.b16 %v222
  %v1343 = vunpack.c.l.b16 %v223
  %v1344 = vunpack.c.l.b16 %v224
  %v1345 = vunpack.c.l.b16 %v225
  %v1346 = vunpack.c.l.b16 %v226
  %v1347 = vunpack.c.l.b16 %v227
  %v1348 = vunpack.c.l.b16 %v228
  %v1349 = vunpack.c.l.b16 %v229
  %v1350 = vunpack.c.l.b16 %v230
  %v1351 = vunpack.c.l.b16 %v231
  %v1352 = vunpack.c.l.b16 %v232
  %v1353 = vunpack.c.l.b16 %v233
  %v1354 = vunpack.c.l.b16 %v234
  %v1355 = vunpack.c.l.b16 %v235
  %v1356 = vunpack.c.l.b16 %v236
  %v1357 = vunpack.c.l.b16 %v237
  %v1358 = vunpack.c.l.b16 %v238
  %v1359 = vunpack.c.l.b16 %v239
  %v1360 = vunpack.c.l.b16 %v240
  %v1361 = vunpack.c.l.b16 %v241
  %v1362 = vunpack.c.l.b16 %v242
  %v1363 = vunpack.c.l.b16 %v243
  %v1364 = vunpack.c.l.b16 %v244
  %v1365 = vunpack.c.l.b16 %v245
  %v1366 = vunpack.c.l.b16 %v246
  %v1367 = vunpack.c.l.b16 %v247
  %v1368 = vunpack.c.l.b16 %v248
  %v1369 = vunpack.c.l.b16 %v249
  %v1370 = vunpack.c.l.b16 %v250
  %v1371 = vunpack.c.l.b16 %v251
  %v1372 = vunpack.c.l.b16 %v252
  %v1373 = vunpack.c.l.b16 %v253
  %v1374 = vunpack.c.l.b16 %v254
  %v1375 = vunpack.c.l.b16 %v255
  %v1376 = vunpack.c.l.b16 %v256
  %v1377 = vunpack.c.l.b16 %v257
  %v1378 = vunpack.c.l.b16 %v258
  %v1379 = vunpack.c.l.b16 %v259
  %v1380 = vunpack.c.l.b16 %v260
  %v1381 = vunpack.c.l.b16 %v261
  %v1382 = vunpack.c.l.b16 %v262
  %v1383 = vunpack.c.l.b16 %v263
  %v1384 = vunpack.c.l.b16 %v264
  %v1385 = vunpack.c.l.b16 %v265
  %v1386 = vunpack.c.l.b16 %v266
  %v1387 = vunpack.c.l.b16 %v267
  %v1388 = vunpack.c.l.b16 %v268
  %v1389 = vunpack.c.l.b16 %v269
  %v1390 = vunpack.c.l.b16 %v270
  %v1391 = vunpack.c.l.b16 %v271
  %v1392 = vunpack.c.l.b16 %v272
  %v1393 = vunpack.c.l.b16 %v273
  %v1394 = vunpack.c.l.b16 %v274
  %v1395 = vunpack.c.l.b16 %v275
  %v1396 = vunpack.c.l.b16 %v276
  %v1397 = vunpack.c.l.b16 %v277
  %v1398 = vunpack.c.l.b16 %v278
  %v1399 = vunpack.c.l.b16 %v279
  %v1400 = vunpack.c.l.b16 %v280
  %v1401 = vunpack.c.l.b16 %v281
  %v1402 = vunpack.c.l.b16 %v282
  %v1403 = vunpack.c.l.b16 %v283
  %v1404 = vunpack.c.l.b16 %v284
  %v1405 = vunpack.c.l.b16 %v285
  %v1406 = vunpack.c.l.b16 %v286
  %v1407 = vunpack.c.l.b16 %v287
  %v1408 = vunpack.c.l.b16 %v288
  %v1409 = vunpack.c.l.b16 %v289
  %v1410 = vunpack.c.l.b16 %v290
  %v1411 = vunpack.c.l.b16 %v291
  %v1412 = vunpack.c.l.b16 %v292
  %v1413 = vunpack.c.l.b16 %v293
  %v1414 = vunpack.c.l.b16 %v294
  %v1415 = vunpack.c.l.b16 %v295
  %v1416 = vunpack.c.l.b16 %v296
  %v1417 = vunpack.c.l.b16 %v297
  %v1418 = vunpack.c.l.b16 %v298
  %v1419 = vunpack.c.l.b16 %v299
  %v1420 = vunpack.c.l.b16 %v300
  %v1421 = vunpack.c.l.b16 %v301
  %v1422 = vunpack.c.l.b16 %v302
  %v1423 = vunpack.c.l.b16 %v303
  %v1424 = vunpack.c.l.b16 %v304
  %v1425 = vunpack.c.l.b16 %v305
  %v1426 = vunpack.c.l.b16 %v306
  %v1427 = vunpack.c.l.b16 %v307
  %v1428 = vunpack.c.l.b16 %v308
  %v1429 = vunpack.c.l.b16 %v309
  %v1430 = vunpack.c.l.b16 %v310
  %v1431 = vunpack.c.l.b16 %v311
  %v1432 = vunpack.c.l.b16 %v312
  %v1433 = vunpack.c.l.b16 %v313
  %v1434 = vunpack.c.l.b16 %v314
  %v1435 = vunpack.c.l.b16 %v315
  %v1436 = vunpack.c.l.b16 %v316
  %v1437 = vunpack.c.l.b16 %v317
  %v1438 = vunpack.c.l.b16 %v318
  %v1439 = vunpack.c.l.b16 %v319
  %v1440 = vunpack.c.l.b16 %v320
  %v1441 = vunpack.c.l.b16 %v321
  %v1442 = vunpack.c.l.b16 %v322
  %v1443 = vpack.c.b16 %v1332, %v1331
  %v1444 = vpack.c.b16 %v1334, %v1333
  %v1445 = vpack.c.b16 %v1336, %v1335
  %v1446 = vpack.c.b16 %v1338, %v1337
  %v1447 = vpack.c.b16 %v1340, %v1339
  %v1448 = vpack.c.b16 %v1342, %v1341
  %v1449 = vpack.c.b16 %v1344, %v1343
  %v1450 = vpack.c.b16 %v1346, %v1345
  %v1451 = vpack.c.b16 %v1348, %v1347
  %v1452 = vpack.c.b16 %v1350, %v1349
  %v1453 = vpack.c.b16 %v1352, %v1351
  %v1454 = vpack.c.b16 %v1354, %v1353
  %v1455 = vpack.c.b16 %v1356, %v1355
  %v1456 = vpack.c.b16 %v1358, %v1357
  %v1457 = vpack.c.b16 %v1360, %v1359
  %v1458 = vpack.c.b16 %v1362, %v1361
  %v1459 = vpack.c.b16 %v1364, %v1363
  %v1460 = vpack.c.b16 %v1366, %v1365
  %v1461 = vpack.c.b16 %v1368, %v1367
  %v1462 = vpack.c.b16 %v1370, %v1369
  %v1463 = vpack.c.b16 %v1372, %v1371
  %v1464 = vpack.c.b16 %v1374, %v1373
  %v1465 = vpack.c.b16 %v1376, %v1375
  %v1466 = vpack.c.b16 %v1378, %v1377
  %v1467 = vpack.c.b16 %v1380, %v1379
  %v1468 = vpack.c.b16 %v1382, %v1381
  %v1469 = vpack.c.b16 %v1384, %v1383
  %v1470 = vpack.c.b16 %v1386, %v1385
  %v1471 = vpack.c.b16 %v1388, %v1387
  %v1472 = vpack.c.b16 %v1390, %v1389
  %v1473 = vpack.c.b16 %v1392, %v1391
  %v1474 = vpack.c.b16 %v1394, %v1393
  %v1475 = vpack.c.b16 %v1396, %v1395
  %v1476 = vpack.c.b16 %v1398, %v1397
  %v1477 = vpack.c.b16 %v1400, %v1399
  %v1478 = vpack.c.b16 %v1402, %v1401
  %v1479 = vpack.c.b16 %v1404, %v1403
  %v1480 = vpack.c.b16 %v1406, %v1405
  %v1481 = vpack.c.b16 %v1408, %v1407
  %v1482 = vpack.c.b16 %v1410, %v1409
  %v1483 = vpack.c.b16 %v1412, %v1411
  %v1484 = vpack.c.b16 %v1414, %v1413
  %v1485 = vpack.c.b16 %v1416, %v1415
  %v1486 = vpack.c.b16 %v1418, %v1417
  %v1487 = vpack.c.b16 %v1420, %v1419
  %v1488 = vpack.c.b16 %v1422, %v1421
  %v1489 = vpack.c.b16 %v1424, %v1423
  %v1490 = vpack.c.b16 %v1426, %v1425
  %v1491 = vpack.c.b16 %v1428, %v1427
  %v1492 = vpack.c.b16 %v1430, %v1429
  %v1493 = vpack.c.b16 %v1432, %v1431
  %v1494 = vpack.c.b16 %v1434, %v1433
  %v1495 = vpack.c.b16 %v1436, %v1435
  %v1496 = vpack.c.b16 %v1438, %v1437
  %v1497 = vpack.c.b16 %v1440, %v1439
  %v1498 = vpack.c.b16 %v1442, %v1441
  %1555 = vmatprep.subr.bf16.mxu0 0
  %1556 = vmatpush1.bf16.msra.mxu0 %v1450
  %1557 = vmatprep.subr.bf16.mxu0 0
  %1558 = vmatpush1.bf16.msra.mxu0 %v1449
  %1559 = vmatprep.subr.bf16.mxu0 0
  %1560 = vmatpush1.bf16.msra.mxu0 %v1448
  %1561 = vmatprep.subr.bf16.mxu0 0
  %1562 = vmatpush1.bf16.msra.mxu0 %v1447
  %1563 = vmatprep.subr.bf16.mxu0 0
  %1564 = vmatpush1.bf16.msra.mxu0 %v1446
  %1565 = vmatprep.subr.bf16.mxu0 0
  %1566 = vmatpush1.bf16.msra.mxu0 %v1445
  %1567 = vmatprep.subr.bf16.mxu0 0
  %1568 = vmatpush1.bf16.msra.mxu0 %v1444
  %1569 = vmatprep.subr.bf16.mxu0 0
  %1570 = vmatpush1.bf16.msra.mxu0 %v1443
  %1571 = vmatprep.subr.bf16.mxu0 0
  %1572 = vmatpush2.bf16.msra.mxu0 %v1458
  %1573 = vmatprep.subr.bf16.mxu0 0
  %1574 = vmatpush2.bf16.msra.mxu0 %v1457
  %1575 = vmatprep.subr.bf16.mxu0 0
  %1576 = vmatpush2.bf16.msra.mxu0 %v1456
  %1577 = vmatprep.subr.bf16.mxu0 0
  %1578 = vmatpush2.bf16.msra.mxu0 %v1455
  %1579 = vmatprep.subr.bf16.mxu0 0
  %1580 = vmatpush2.bf16.msra.mxu0 %v1454
  %1581 = vmatprep.subr.bf16.mxu0 0
  %1582 = vmatpush2.bf16.msra.mxu0 %v1453
  %1583 = vmatprep.subr.bf16.mxu0 0
  %1584 = vmatpush2.bf16.msra.mxu0 %v1452
  %1585 = vmatprep.subr.bf16.mxu0 0
  %1586 = vmatpush2.bf16.msra.mxu0 %v1451
  %1587 = vmatprep.mubr.bf16.mxu0 %v870
  %1588 = vmatmul.mubr.bf16.gmra.mxu0 %v869
  %v1589 = vpop.f32.mrf.mxu0
  %v1590 = vadd.f32 %v328, %v1589
  %v1591 = vpop.f32.mrf.mxu0
  %v1592 = vpop.f32.mrf.mxu0
  %v1593 = vadd.f32 %v328, %v1592
  %v1594 = vpop.f32.mrf.mxu0
  %1595 = vmatprep.mubr.bf16.mxu0 %v877
  %1596 = vmatmul.mubr.bf16.gmra.mxu0 %v876
  %v1597 = vpop.f32.mrf.mxu0
  %v1598 = vadd.f32 %v328, %v1597
  %v1599 = vpop.f32.mrf.mxu0
  %v1600 = vpop.f32.mrf.mxu0
  %v1601 = vadd.f32 %v328, %v1600
  %v1602 = vpop.f32.mrf.mxu0
  %1603 = vmatprep.mubr.bf16.mxu0 %v884
  %1604 = vmatmul.mubr.bf16.gmra.mxu0 %v883
  %v1605 = vpop.f32.mrf.mxu0
  %v1606 = vadd.f32 %v328, %v1605
  %v1607 = vpop.f32.mrf.mxu0
  %v1608 = vpop.f32.mrf.mxu0
  %v1609 = vadd.f32 %v328, %v1608
  %v1610 = vpop.f32.mrf.mxu0
  %1611 = vmatprep.mubr.bf16.mxu0 %v891
  %1612 = vmatmul.mubr.bf16.gmra.mxu0 %v890
  %v1613 = vpop.f32.mrf.mxu0
  %v1614 = vadd.f32 %v328, %v1613
  %v1615 = vpop.f32.mrf.mxu0
  %v1616 = vpop.f32.mrf.mxu0
  %v1617 = vadd.f32 %v328, %v1616
  %v1618 = vpop.f32.mrf.mxu0
  %1619 = vmatprep.mubr.bf16.mxu0 %v898
  %1620 = vmatmul.mubr.bf16.gmra.mxu0 %v897
  %v1621 = vpop.f32.mrf.mxu0
  %v1622 = vadd.f32 %v328, %v1621
  %v1623 = vpop.f32.mrf.mxu0
  %v1624 = vpop.f32.mrf.mxu0
  %v1625 = vadd.f32 %v328, %v1624
  %v1626 = vpop.f32.mrf.mxu0
  %1627 = vmatprep.mubr.bf16.mxu0 %v905
  %1628 = vmatmul.mubr.bf16.gmra.mxu0 %v904
  %v1629 = vpop.f32.mrf.mxu0
  %v1630 = vadd.f32 %v328, %v1629
  %v1631 = vpop.f32.mrf.mxu0
  %v1632 = vpop.f32.mrf.mxu0
  %v1633 = vadd.f32 %v328, %v1632
  %v1634 = vpop.f32.mrf.mxu0
  %1635 = vmatprep.mubr.bf16.mxu0 %v912
  %1636 = vmatmul.mubr.bf16.gmra.mxu0 %v911
  %v1637 = vpop.f32.mrf.mxu0
  %v1638 = vadd.f32 %v328, %v1637
  %v1639 = vpop.f32.mrf.mxu0
  %v1640 = vpop.f32.mrf.mxu0
  %v1641 = vadd.f32 %v328, %v1640
  %v1642 = vpop.f32.mrf.mxu0
  %1643 = vmatprep.mubr.bf16.mxu0 %v919
  %1644 = vmatmul.mubr.bf16.gmra.mxu0 %v918
  %v1645 = vpop.f32.mrf.mxu0
  %v1646 = vadd.f32 %v328, %v1645
  %v1647 = vpop.f32.mrf.mxu0
  %v1648 = vpop.f32.mrf.mxu0
  %v1649 = vadd.f32 %v328, %v1648
  %v1650 = vpop.f32.mrf.mxu0
  %1651 = vmatprep.mubr.bf16.mxu0 %v926
  %1652 = vmatmul.mubr.bf16.gmra.mxu0 %v925
  %v1653 = vpop.f32.mrf.mxu0
  %v1654 = vadd.f32 %v328, %v1653
  %v1655 = vpop.f32.mrf.mxu0
  %v1656 = vpop.f32.mrf.mxu0
  %v1657 = vadd.f32 %v328, %v1656
  %v1658 = vpop.f32.mrf.mxu0
  %1659 = vmatprep.mubr.bf16.mxu0 %v933
  %1660 = vmatmul.mubr.bf16.gmra.mxu0 %v932
  %v1661 = vpop.f32.mrf.mxu0
  %v1662 = vadd.f32 %v328, %v1661
  %v1663 = vpop.f32.mrf.mxu0
  %v1664 = vpop.f32.mrf.mxu0
  %v1665 = vadd.f32 %v328, %v1664
  %v1666 = vpop.f32.mrf.mxu0
  %1667 = vmatprep.mubr.bf16.mxu0 %v940
  %1668 = vmatmul.mubr.bf16.gmra.mxu0 %v939
  %v1669 = vpop.f32.mrf.mxu0
  %v1670 = vadd.f32 %v328, %v1669
  %v1671 = vpop.f32.mrf.mxu0
  %v1672 = vpop.f32.mrf.mxu0
  %v1673 = vadd.f32 %v328, %v1672
  %v1674 = vpop.f32.mrf.mxu0
  %1675 = vmatprep.mubr.bf16.mxu0 %v947
  %1676 = vmatmul.mubr.bf16.gmra.mxu0 %v946
  %v1677 = vpop.f32.mrf.mxu0
  %v1678 = vadd.f32 %v328, %v1677
  %v1679 = vpop.f32.mrf.mxu0
  %v1680 = vpop.f32.mrf.mxu0
  %v1681 = vadd.f32 %v328, %v1680
  %v1682 = vpop.f32.mrf.mxu0
  %1683 = vmatprep.mubr.bf16.mxu0 %v954
  %1684 = vmatmul.mubr.bf16.gmra.mxu0 %v953
  %v1685 = vpop.f32.mrf.mxu0
  %v1686 = vadd.f32 %v328, %v1685
  %v1687 = vpop.f32.mrf.mxu0
  %v1688 = vpop.f32.mrf.mxu0
  %v1689 = vadd.f32 %v328, %v1688
  %v1690 = vpop.f32.mrf.mxu0
  %1691 = vmatprep.mubr.bf16.mxu0 %v961
  %1692 = vmatmul.mubr.bf16.gmra.mxu0 %v960
  %v1693 = vpop.f32.mrf.mxu0
  %v1694 = vadd.f32 %v328, %v1693
  %v1695 = vpop.f32.mrf.mxu0
  %v1696 = vpop.f32.mrf.mxu0
  %v1697 = vadd.f32 %v328, %v1696
  %v1698 = vpop.f32.mrf.mxu0
  %1699 = vmatprep.mubr.bf16.mxu0 %v968
  %1700 = vmatmul.mubr.bf16.gmra.mxu0 %v967
  %v1701 = vpop.f32.mrf.mxu0
  %v1702 = vadd.f32 %v328, %v1701
  %v1703 = vpop.f32.mrf.mxu0
  %v1704 = vpop.f32.mrf.mxu0
  %v1705 = vadd.f32 %v328, %v1704
  %v1706 = vpop.f32.mrf.mxu0
  %1707 = vmatprep.mubr.bf16.mxu0 %v975
  %1708 = vmatmul.mubr.bf16.gmra.mxu0 %v974
  %v1709 = vpop.f32.mrf.mxu0
  %v1710 = vadd.f32 %v328, %v1709
  %v1711 = vpop.f32.mrf.mxu0
  %v1712 = vpop.f32.mrf.mxu0
  %v1713 = vadd.f32 %v328, %v1712
  %v1714 = vpop.f32.mrf.mxu0
  %1715 = vmatprep.mubr.bf16.mxu0 %v982
  %1716 = vmatmul.mubr.bf16.gmra.mxu0 %v981
  %v1717 = vpop.f32.mrf.mxu0
  %v1718 = vadd.f32 %v328, %v1717
  %v1719 = vpop.f32.mrf.mxu0
  %v1720 = vpop.f32.mrf.mxu0
  %v1721 = vadd.f32 %v328, %v1720
  %v1722 = vpop.f32.mrf.mxu0
  %1723 = vmatprep.mubr.bf16.mxu0 %v989
  %1724 = vmatmul.mubr.bf16.gmra.mxu0 %v988
  %v1725 = vpop.f32.mrf.mxu0
  %v1726 = vadd.f32 %v328, %v1725
  %v1727 = vpop.f32.mrf.mxu0
  %v1728 = vpop.f32.mrf.mxu0
  %v1729 = vadd.f32 %v328, %v1728
  %v1730 = vpop.f32.mrf.mxu0
  %1731 = vmatprep.mubr.bf16.mxu0 %v996
  %1732 = vmatmul.mubr.bf16.gmra.mxu0 %v995
  %v1733 = vpop.f32.mrf.mxu0
  %v1734 = vadd.f32 %v328, %v1733
  %v1735 = vpop.f32.mrf.mxu0
  %v1736 = vpop.f32.mrf.mxu0
  %v1737 = vadd.f32 %v328, %v1736
  %v1738 = vpop.f32.mrf.mxu0
  %1739 = vmatprep.mubr.bf16.mxu0 %v1003
  %1740 = vmatmul.mubr.bf16.gmra.mxu0 %v1002
  %v1741 = vpop.f32.mrf.mxu0
  %v1742 = vadd.f32 %v328, %v1741
  %v1743 = vpop.f32.mrf.mxu0
  %v1744 = vpop.f32.mrf.mxu0
  %v1745 = vadd.f32 %v328, %v1744
  %v1746 = vpop.f32.mrf.mxu0
  %1747 = vmatprep.mubr.bf16.mxu0 %v1010
  %1748 = vmatmul.mubr.bf16.gmra.mxu0 %v1009
  %v1749 = vpop.f32.mrf.mxu0
  %v1750 = vadd.f32 %v328, %v1749
  %v1751 = vpop.f32.mrf.mxu0
  %v1752 = vpop.f32.mrf.mxu0
  %v1753 = vadd.f32 %v328, %v1752
  %v1754 = vpop.f32.mrf.mxu0
  %1755 = vmatprep.mubr.bf16.mxu0 %v1017
  %1756 = vmatmul.mubr.bf16.gmra.mxu0 %v1016
  %v1757 = vpop.f32.mrf.mxu0
  %v1758 = vadd.f32 %v328, %v1757
  %v1759 = vpop.f32.mrf.mxu0
  %v1760 = vpop.f32.mrf.mxu0
  %v1761 = vadd.f32 %v328, %v1760
  %v1762 = vpop.f32.mrf.mxu0
  %1763 = vmatprep.mubr.bf16.mxu0 %v1024
  %1764 = vmatmul.mubr.bf16.gmra.mxu0 %v1023
  %v1765 = vpop.f32.mrf.mxu0
  %v1766 = vadd.f32 %v328, %v1765
  %v1767 = vpop.f32.mrf.mxu0
  %v1768 = vpop.f32.mrf.mxu0
  %v1769 = vadd.f32 %v328, %v1768
  %v1770 = vpop.f32.mrf.mxu0
  %1771 = vmatprep.mubr.bf16.mxu0 %v1031
  %1772 = vmatmul.mubr.bf16.gmra.mxu0 %v1030
  %v1773 = vpop.f32.mrf.mxu0
  %v1774 = vadd.f32 %v328, %v1773
  %v1775 = vpop.f32.mrf.mxu0
  %v1776 = vpop.f32.mrf.mxu0
  %v1777 = vadd.f32 %v328, %v1776
  %v1778 = vpop.f32.mrf.mxu0
  %1779 = vmatprep.mubr.bf16.mxu0 %v1038
  %1780 = vmatmul.mubr.bf16.gmra.mxu0 %v1037
  %v1781 = vpop.f32.mrf.mxu0
  %v1782 = vadd.f32 %v328, %v1781
  %v1783 = vpop.f32.mrf.mxu0
  %v1784 = vpop.f32.mrf.mxu0
  %v1785 = vpop.f32.mrf.mxu0
  %1786 = vdwg.mxu0
  %1787 = vmatprep.subr.bf16.mxu0 0
  %1788 = vmatpush1.bf16.msra.mxu0 %v1466
  %1789 = vmatprep.subr.bf16.mxu0 0
  %1790 = vmatpush1.bf16.msra.mxu0 %v1465
  %1791 = vmatprep.subr.bf16.mxu0 0
  %1792 = vmatpush1.bf16.msra.mxu0 %v1464
  %1793 = vmatprep.subr.bf16.mxu0 0
  %1794 = vmatpush1.bf16.msra.mxu0 %v1463
  %1795 = vmatprep.subr.bf16.mxu0 0
  %1796 = vmatpush1.bf16.msra.mxu0 %v1462
  %1797 = vmatprep.subr.bf16.mxu0 0
  %1798 = vmatpush1.bf16.msra.mxu0 %v1461
  %1799 = vmatprep.subr.bf16.mxu0 0
  %1800 = vmatpush1.bf16.msra.mxu0 %v1460
  %1801 = vmatprep.subr.bf16.mxu0 0
  %1802 = vmatpush1.bf16.msra.mxu0 %v1459
  %1803 = vmatprep.subr.bf16.mxu0 0
  %1804 = vmatpush2.bf16.msra.mxu0 %v1474
  %1805 = vmatprep.subr.bf16.mxu0 0
  %1806 = vmatpush2.bf16.msra.mxu0 %v1473
  %1807 = vmatprep.subr.bf16.mxu0 0
  %1808 = vmatpush2.bf16.msra.mxu0 %v1472
  %1809 = vmatprep.subr.bf16.mxu0 0
  %1810 = vmatpush2.bf16.msra.mxu0 %v1471
  %1811 = vmatprep.subr.bf16.mxu0 0
  %1812 = vmatpush2.bf16.msra.mxu0 %v1470
  %1813 = vmatprep.subr.bf16.mxu0 0
  %1814 = vmatpush2.bf16.msra.mxu0 %v1469
  %1815 = vmatprep.subr.bf16.mxu0 0
  %1816 = vmatpush2.bf16.msra.mxu0 %v1468
  %1817 = vmatprep.subr.bf16.mxu0 0
  %1818 = vmatpush2.bf16.msra.mxu0 %v1467
  %1819 = vmatprep.mubr.bf16.mxu0 %v872
  %1820 = vmatmul.mubr.bf16.gmra.mxu0 %v871
  %v1821 = vpop.f32.mrf.mxu0
  %v1822 = vadd.f32 %v1590, %v1821
  %v1823 = vpop.f32.mrf.mxu0
  %v1824 = vpop.f32.mrf.mxu0
  %v1825 = vadd.f32 %v1593, %v1824
  %v1826 = vpop.f32.mrf.mxu0
  %1827 = vmatprep.mubr.bf16.mxu0 %v879
  %1828 = vmatmul.mubr.bf16.gmra.mxu0 %v878
  %v1829 = vpop.f32.mrf.mxu0
  %v1830 = vadd.f32 %v1598, %v1829
  %v1831 = vpop.f32.mrf.mxu0
  %v1832 = vpop.f32.mrf.mxu0
  %v1833 = vadd.f32 %v1601, %v1832
  %v1834 = vpop.f32.mrf.mxu0
  %1835 = vmatprep.mubr.bf16.mxu0 %v886
  %1836 = vmatmul.mubr.bf16.gmra.mxu0 %v885
  %v1837 = vpop.f32.mrf.mxu0
  %v1838 = vadd.f32 %v1606, %v1837
  %v1839 = vpop.f32.mrf.mxu0
  %v1840 = vpop.f32.mrf.mxu0
  %v1841 = vadd.f32 %v1609, %v1840
  %v1842 = vpop.f32.mrf.mxu0
  %1843 = vmatprep.mubr.bf16.mxu0 %v893
  %1844 = vmatmul.mubr.bf16.gmra.mxu0 %v892
  %v1845 = vpop.f32.mrf.mxu0
  %v1846 = vadd.f32 %v1614, %v1845
  %v1847 = vpop.f32.mrf.mxu0
  %v1848 = vpop.f32.mrf.mxu0
  %v1849 = vadd.f32 %v1617, %v1848
  %v1850 = vpop.f32.mrf.mxu0
  %1851 = vmatprep.mubr.bf16.mxu0 %v900
  %1852 = vmatmul.mubr.bf16.gmra.mxu0 %v899
  %v1853 = vpop.f32.mrf.mxu0
  %v1854 = vadd.f32 %v1622, %v1853
  %v1855 = vpop.f32.mrf.mxu0
  %v1856 = vpop.f32.mrf.mxu0
  %v1857 = vadd.f32 %v1625, %v1856
  %v1858 = vpop.f32.mrf.mxu0
  %1859 = vmatprep.mubr.bf16.mxu0 %v907
  %1860 = vmatmul.mubr.bf16.gmra.mxu0 %v906
  %v1861 = vpop.f32.mrf.mxu0
  %v1862 = vadd.f32 %v1630, %v1861
  %v1863 = vpop.f32.mrf.mxu0
  %v1864 = vpop.f32.mrf.mxu0
  %v1865 = vadd.f32 %v1633, %v1864
  %v1866 = vpop.f32.mrf.mxu0
  %1867 = vmatprep.mubr.bf16.mxu0 %v914
  %1868 = vmatmul.mubr.bf16.gmra.mxu0 %v913
  %v1869 = vpop.f32.mrf.mxu0
  %v1870 = vadd.f32 %v1638, %v1869
  %v1871 = vpop.f32.mrf.mxu0
  %v1872 = vpop.f32.mrf.mxu0
  %v1873 = vadd.f32 %v1641, %v1872
  %v1874 = vpop.f32.mrf.mxu0
  %1875 = vmatprep.mubr.bf16.mxu0 %v921
  %1876 = vmatmul.mubr.bf16.gmra.mxu0 %v920
  %v1877 = vpop.f32.mrf.mxu0
  %v1878 = vadd.f32 %v1646, %v1877
  %v1879 = vpop.f32.mrf.mxu0
  %v1880 = vpop.f32.mrf.mxu0
  %v1881 = vadd.f32 %v1649, %v1880
  %v1882 = vpop.f32.mrf.mxu0
  %1883 = vmatprep.mubr.bf16.mxu0 %v928
  %1884 = vmatmul.mubr.bf16.gmra.mxu0 %v927
  %v1885 = vpop.f32.mrf.mxu0
  %v1886 = vadd.f32 %v1654, %v1885
  %v1887 = vpop.f32.mrf.mxu0
  %v1888 = vpop.f32.mrf.mxu0
  %v1889 = vadd.f32 %v1657, %v1888
  %v1890 = vpop.f32.mrf.mxu0
  %1891 = vmatprep.mubr.bf16.mxu0 %v935
  %1892 = vmatmul.mubr.bf16.gmra.mxu0 %v934
  %v1893 = vpop.f32.mrf.mxu0
  %v1894 = vadd.f32 %v1662, %v1893
  %v1895 = vpop.f32.mrf.mxu0
  %v1896 = vpop.f32.mrf.mxu0
  %v1897 = vadd.f32 %v1665, %v1896
  %v1898 = vpop.f32.mrf.mxu0
  %1899 = vmatprep.mubr.bf16.mxu0 %v942
  %1900 = vmatmul.mubr.bf16.gmra.mxu0 %v941
  %v1901 = vpop.f32.mrf.mxu0
  %v1902 = vadd.f32 %v1670, %v1901
  %v1903 = vpop.f32.mrf.mxu0
  %v1904 = vpop.f32.mrf.mxu0
  %v1905 = vadd.f32 %v1673, %v1904
  %v1906 = vpop.f32.mrf.mxu0
  %1907 = vmatprep.mubr.bf16.mxu0 %v949
  %1908 = vmatmul.mubr.bf16.gmra.mxu0 %v948
  %v1909 = vpop.f32.mrf.mxu0
  %v1910 = vadd.f32 %v1678, %v1909
  %v1911 = vpop.f32.mrf.mxu0
  %v1912 = vpop.f32.mrf.mxu0
  %v1913 = vadd.f32 %v1681, %v1912
  %v1914 = vpop.f32.mrf.mxu0
  %1915 = vmatprep.mubr.bf16.mxu0 %v956
  %1916 = vmatmul.mubr.bf16.gmra.mxu0 %v955
  %v1917 = vpop.f32.mrf.mxu0
  %v1918 = vadd.f32 %v1686, %v1917
  %v1919 = vpop.f32.mrf.mxu0
  %v1920 = vpop.f32.mrf.mxu0
  %v1921 = vadd.f32 %v1689, %v1920
  %v1922 = vpop.f32.mrf.mxu0
  %1923 = vmatprep.mubr.bf16.mxu0 %v963
  %1924 = vmatmul.mubr.bf16.gmra.mxu0 %v962
  %v1925 = vpop.f32.mrf.mxu0
  %v1926 = vadd.f32 %v1694, %v1925
  %v1927 = vpop.f32.mrf.mxu0
  %v1928 = vpop.f32.mrf.mxu0
  %v1929 = vadd.f32 %v1697, %v1928
  %v1930 = vpop.f32.mrf.mxu0
  %1931 = vmatprep.mubr.bf16.mxu0 %v970
  %1932 = vmatmul.mubr.bf16.gmra.mxu0 %v969
  %v1933 = vpop.f32.mrf.mxu0
  %v1934 = vadd.f32 %v1702, %v1933
  %v1935 = vpop.f32.mrf.mxu0
  %v1936 = vpop.f32.mrf.mxu0
  %v1937 = vadd.f32 %v1705, %v1936
  %v1938 = vpop.f32.mrf.mxu0
  %1939 = vmatprep.mubr.bf16.mxu0 %v977
  %1940 = vmatmul.mubr.bf16.gmra.mxu0 %v976
  %v1941 = vpop.f32.mrf.mxu0
  %v1942 = vadd.f32 %v1710, %v1941
  %v1943 = vpop.f32.mrf.mxu0
  %v1944 = vpop.f32.mrf.mxu0
  %v1945 = vadd.f32 %v1713, %v1944
  %v1946 = vpop.f32.mrf.mxu0
  %1947 = vmatprep.mubr.bf16.mxu0 %v984
  %1948 = vmatmul.mubr.bf16.gmra.mxu0 %v983
  %v1949 = vpop.f32.mrf.mxu0
  %v1950 = vadd.f32 %v1718, %v1949
  %v1951 = vpop.f32.mrf.mxu0
  %v1952 = vpop.f32.mrf.mxu0
  %v1953 = vadd.f32 %v1721, %v1952
  %v1954 = vpop.f32.mrf.mxu0
  %1955 = vmatprep.mubr.bf16.mxu0 %v991
  %1956 = vmatmul.mubr.bf16.gmra.mxu0 %v990
  %v1957 = vpop.f32.mrf.mxu0
  %v1958 = vadd.f32 %v1726, %v1957
  %v1959 = vpop.f32.mrf.mxu0
  %v1960 = vpop.f32.mrf.mxu0
  %v1961 = vadd.f32 %v1729, %v1960
  %v1962 = vpop.f32.mrf.mxu0
  %1963 = vmatprep.mubr.bf16.mxu0 %v998
  %1964 = vmatmul.mubr.bf16.gmra.mxu0 %v997
  %v1965 = vpop.f32.mrf.mxu0
  %v1966 = vadd.f32 %v1734, %v1965
  %v1967 = vpop.f32.mrf.mxu0
  %v1968 = vpop.f32.mrf.mxu0
  %v1969 = vadd.f32 %v1737, %v1968
  %v1970 = vpop.f32.mrf.mxu0
  %1971 = vmatprep.mubr.bf16.mxu0 %v1005
  %1972 = vmatmul.mubr.bf16.gmra.mxu0 %v1004
  %v1973 = vpop.f32.mrf.mxu0
  %v1974 = vadd.f32 %v1742, %v1973
  %v1975 = vpop.f32.mrf.mxu0
  %v1976 = vpop.f32.mrf.mxu0
  %v1977 = vadd.f32 %v1745, %v1976
  %v1978 = vpop.f32.mrf.mxu0
  %1979 = vmatprep.mubr.bf16.mxu0 %v1012
  %1980 = vmatmul.mubr.bf16.gmra.mxu0 %v1011
  %v1981 = vpop.f32.mrf.mxu0
  %v1982 = vadd.f32 %v1750, %v1981
  %v1983 = vpop.f32.mrf.mxu0
  %v1984 = vpop.f32.mrf.mxu0
  %v1985 = vadd.f32 %v1753, %v1984
  %v1986 = vpop.f32.mrf.mxu0
  %1987 = vmatprep.mubr.bf16.mxu0 %v1019
  %1988 = vmatmul.mubr.bf16.gmra.mxu0 %v1018
  %v1989 = vpop.f32.mrf.mxu0
  %v1990 = vadd.f32 %v1758, %v1989
  %v1991 = vpop.f32.mrf.mxu0
  %v1992 = vpop.f32.mrf.mxu0
  %v1993 = vadd.f32 %v1761, %v1992
  %v1994 = vpop.f32.mrf.mxu0
  %1995 = vmatprep.mubr.bf16.mxu0 %v1026
  %1996 = vmatmul.mubr.bf16.gmra.mxu0 %v1025
  %v1997 = vpop.f32.mrf.mxu0
  %v1998 = vadd.f32 %v1766, %v1997
  %v1999 = vpop.f32.mrf.mxu0
  %v2000 = vpop.f32.mrf.mxu0
  %v2001 = vadd.f32 %v1769, %v2000
  %v2002 = vpop.f32.mrf.mxu0
  %2003 = vmatprep.mubr.bf16.mxu0 %v1033
  %2004 = vmatmul.mubr.bf16.gmra.mxu0 %v1032
  %v2005 = vpop.f32.mrf.mxu0
  %v2006 = vadd.f32 %v1774, %v2005
  %v2007 = vpop.f32.mrf.mxu0
  %v2008 = vpop.f32.mrf.mxu0
  %v2009 = vadd.f32 %v1777, %v2008
  %v2010 = vpop.f32.mrf.mxu0
  %2011 = vmatprep.mubr.bf16.mxu0 %v1040
  %2012 = vmatmul.mubr.bf16.gmra.mxu0 %v1039
  %v2013 = vpop.f32.mrf.mxu0
  %v2014 = vadd.f32 %v1782, %v2013
  %v2015 = vpop.f32.mrf.mxu0
  %v2016 = vpop.f32.mrf.mxu0
  %v2017 = vpop.f32.mrf.mxu0
  %2018 = vdwg.mxu0
  %2019 = vmatprep.subr.bf16.mxu0 0
  %2020 = vmatpush1.bf16.msra.mxu0 %v1482
  %2021 = vmatprep.subr.bf16.mxu0 0
  %2022 = vmatpush1.bf16.msra.mxu0 %v1481
  %2023 = vmatprep.subr.bf16.mxu0 0
  %2024 = vmatpush1.bf16.msra.mxu0 %v1480
  %2025 = vmatprep.subr.bf16.mxu0 0
  %2026 = vmatpush1.bf16.msra.mxu0 %v1479
  %2027 = vmatprep.subr.bf16.mxu0 0
  %2028 = vmatpush1.bf16.msra.mxu0 %v1478
  %2029 = vmatprep.subr.bf16.mxu0 0
  %2030 = vmatpush1.bf16.msra.mxu0 %v1477
  %2031 = vmatprep.subr.bf16.mxu0 0
  %2032 = vmatpush1.bf16.msra.mxu0 %v1476
  %2033 = vmatprep.subr.bf16.mxu0 0
  %2034 = vmatpush1.bf16.msra.mxu0 %v1475
  %2035 = vmatprep.subr.bf16.mxu0 0
  %2036 = vmatpush2.bf16.msra.mxu0 %v1490
  %2037 = vmatprep.subr.bf16.mxu0 0
  %2038 = vmatpush2.bf16.msra.mxu0 %v1489
  %2039 = vmatprep.subr.bf16.mxu0 0
  %2040 = vmatpush2.bf16.msra.mxu0 %v1488
  %2041 = vmatprep.subr.bf16.mxu0 0
  %2042 = vmatpush2.bf16.msra.mxu0 %v1487
  %2043 = vmatprep.subr.bf16.mxu0 0
  %2044 = vmatpush2.bf16.msra.mxu0 %v1486
  %2045 = vmatprep.subr.bf16.mxu0 0
  %2046 = vmatpush2.bf16.msra.mxu0 %v1485
  %2047 = vmatprep.subr.bf16.mxu0 0
  %2048 = vmatpush2.bf16.msra.mxu0 %v1484
  %2049 = vmatprep.subr.bf16.mxu0 0
  %2050 = vmatpush2.bf16.msra.mxu0 %v1483
  %2051 = vmatprep.mubr.bf16.mxu0 %v874
  %2052 = vmatmul.mubr.bf16.gmra.mxu0 %v873
  %v2053 = vpop.f32.mrf.mxu0
  %v2054 = vadd.f32 %v1822, %v2053
  %v2055 = vpop.f32.mrf.mxu0
  %v2056 = vpop.f32.mrf.mxu0
  %v2057 = vadd.f32 %v1825, %v2056
  %v2058 = vpop.f32.mrf.mxu0
  %2059 = vmatprep.mubr.bf16.mxu0 %v881
  %2060 = vmatmul.mubr.bf16.gmra.mxu0 %v880
  %v2061 = vpop.f32.mrf.mxu0
  %v2062 = vadd.f32 %v1830, %v2061
  %v2063 = vpop.f32.mrf.mxu0
  %v2064 = vpop.f32.mrf.mxu0
  %v2065 = vadd.f32 %v1833, %v2064
  %v2066 = vpop.f32.mrf.mxu0
  %2067 = vmatprep.mubr.bf16.mxu0 %v888
  %2068 = vmatmul.mubr.bf16.gmra.mxu0 %v887
  %v2069 = vpop.f32.mrf.mxu0
  %v2070 = vadd.f32 %v1838, %v2069
  %v2071 = vpop.f32.mrf.mxu0
  %v2072 = vpop.f32.mrf.mxu0
  %v2073 = vadd.f32 %v1841, %v2072
  %v2074 = vpop.f32.mrf.mxu0
  %2075 = vmatprep.mubr.bf16.mxu0 %v895
  %2076 = vmatmul.mubr.bf16.gmra.mxu0 %v894
  %v2077 = vpop.f32.mrf.mxu0
  %v2078 = vadd.f32 %v1846, %v2077
  %v2079 = vpop.f32.mrf.mxu0
  %v2080 = vpop.f32.mrf.mxu0
  %v2081 = vadd.f32 %v1849, %v2080
  %v2082 = vpop.f32.mrf.mxu0
  %2083 = vmatprep.mubr.bf16.mxu0 %v902
  %2084 = vmatmul.mubr.bf16.gmra.mxu0 %v901
  %v2085 = vpop.f32.mrf.mxu0
  %v2086 = vadd.f32 %v1854, %v2085
  %v2087 = vpop.f32.mrf.mxu0
  %v2088 = vpop.f32.mrf.mxu0
  %v2089 = vadd.f32 %v1857, %v2088
  %v2090 = vpop.f32.mrf.mxu0
  %2091 = vmatprep.mubr.bf16.mxu0 %v909
  %2092 = vmatmul.mubr.bf16.gmra.mxu0 %v908
  %v2093 = vpop.f32.mrf.mxu0
  %v2094 = vadd.f32 %v1862, %v2093
  %v2095 = vpop.f32.mrf.mxu0
  %v2096 = vpop.f32.mrf.mxu0
  %v2097 = vadd.f32 %v1865, %v2096
  %v2098 = vpop.f32.mrf.mxu0
  %2099 = vmatprep.mubr.bf16.mxu0 %v916
  %2100 = vmatmul.mubr.bf16.gmra.mxu0 %v915
  %v2101 = vpop.f32.mrf.mxu0
  %v2102 = vadd.f32 %v1870, %v2101
  %v2103 = vpop.f32.mrf.mxu0
  %v2104 = vpop.f32.mrf.mxu0
  %v2105 = vadd.f32 %v1873, %v2104
  %v2106 = vpop.f32.mrf.mxu0
  %2107 = vmatprep.mubr.bf16.mxu0 %v923
  %2108 = vmatmul.mubr.bf16.gmra.mxu0 %v922
  %v2109 = vpop.f32.mrf.mxu0
  %v2110 = vadd.f32 %v1878, %v2109
  %v2111 = vpop.f32.mrf.mxu0
  %v2112 = vpop.f32.mrf.mxu0
  %v2113 = vadd.f32 %v1881, %v2112
  %v2114 = vpop.f32.mrf.mxu0
  %2115 = vmatprep.mubr.bf16.mxu0 %v930
  %2116 = vmatmul.mubr.bf16.gmra.mxu0 %v929
  %v2117 = vpop.f32.mrf.mxu0
  %v2118 = vadd.f32 %v1886, %v2117
  %v2119 = vpop.f32.mrf.mxu0
  %v2120 = vpop.f32.mrf.mxu0
  %v2121 = vadd.f32 %v1889, %v2120
  %v2122 = vpop.f32.mrf.mxu0
  %2123 = vmatprep.mubr.bf16.mxu0 %v937
  %2124 = vmatmul.mubr.bf16.gmra.mxu0 %v936
  %v2125 = vpop.f32.mrf.mxu0
  %v2126 = vadd.f32 %v1894, %v2125
  %v2127 = vpop.f32.mrf.mxu0
  %v2128 = vpop.f32.mrf.mxu0
  %v2129 = vadd.f32 %v1897, %v2128
  %v2130 = vpop.f32.mrf.mxu0
  %2131 = vmatprep.mubr.bf16.mxu0 %v944
  %2132 = vmatmul.mubr.bf16.gmra.mxu0 %v943
  %v2133 = vpop.f32.mrf.mxu0
  %v2134 = vadd.f32 %v1902, %v2133
  %v2135 = vpop.f32.mrf.mxu0
  %v2136 = vpop.f32.mrf.mxu0
  %v2137 = vadd.f32 %v1905, %v2136
  %v2138 = vpop.f32.mrf.mxu0
  %2139 = vmatprep.mubr.bf16.mxu0 %v951
  %2140 = vmatmul.mubr.bf16.gmra.mxu0 %v950
  %v2141 = vpop.f32.mrf.mxu0
  %v2142 = vadd.f32 %v1910, %v2141
  %v2143 = vpop.f32.mrf.mxu0
  %v2144 = vpop.f32.mrf.mxu0
  %v2145 = vadd.f32 %v1913, %v2144
  %v2146 = vpop.f32.mrf.mxu0
  %2147 = vmatprep.mubr.bf16.mxu0 %v958
  %2148 = vmatmul.mubr.bf16.gmra.mxu0 %v957
  %v2149 = vpop.f32.mrf.mxu0
  %v2150 = vadd.f32 %v1918, %v2149
  %v2151 = vpop.f32.mrf.mxu0
  %v2152 = vpop.f32.mrf.mxu0
  %v2153 = vadd.f32 %v1921, %v2152
  %v2154 = vpop.f32.mrf.mxu0
  %2155 = vmatprep.mubr.bf16.mxu0 %v965
  %2156 = vmatmul.mubr.bf16.gmra.mxu0 %v964
  %v2157 = vpop.f32.mrf.mxu0
  %v2158 = vadd.f32 %v1926, %v2157
  %v2159 = vpop.f32.mrf.mxu0
  %v2160 = vpop.f32.mrf.mxu0
  %v2161 = vadd.f32 %v1929, %v2160
  %v2162 = vpop.f32.mrf.mxu0
  %2163 = vmatprep.mubr.bf16.mxu0 %v972
  %2164 = vmatmul.mubr.bf16.gmra.mxu0 %v971
  %v2165 = vpop.f32.mrf.mxu0
  %v2166 = vadd.f32 %v1934, %v2165
  %v2167 = vpop.f32.mrf.mxu0
  %v2168 = vpop.f32.mrf.mxu0
  %v2169 = vadd.f32 %v1937, %v2168
  %v2170 = vpop.f32.mrf.mxu0
  %2171 = vmatprep.mubr.bf16.mxu0 %v979
  %2172 = vmatmul.mubr.bf16.gmra.mxu0 %v978
  %v2173 = vpop.f32.mrf.mxu0
  %v2174 = vadd.f32 %v1942, %v2173
  %v2175 = vpop.f32.mrf.mxu0
  %v2176 = vpop.f32.mrf.mxu0
  %v2177 = vadd.f32 %v1945, %v2176
  %v2178 = vpop.f32.mrf.mxu0
  %2179 = vmatprep.mubr.bf16.mxu0 %v986
  %2180 = vmatmul.mubr.bf16.gmra.mxu0 %v985
  %v2181 = vpop.f32.mrf.mxu0
  %v2182 = vadd.f32 %v1950, %v2181
  %v2183 = vpop.f32.mrf.mxu0
  %v2184 = vpop.f32.mrf.mxu0
  %v2185 = vadd.f32 %v1953, %v2184
  %v2186 = vpop.f32.mrf.mxu0
  %2187 = vmatprep.mubr.bf16.mxu0 %v993
  %2188 = vmatmul.mubr.bf16.gmra.mxu0 %v992
  %v2189 = vpop.f32.mrf.mxu0
  %v2190 = vadd.f32 %v1958, %v2189
  %v2191 = vpop.f32.mrf.mxu0
  %v2192 = vpop.f32.mrf.mxu0
  %v2193 = vadd.f32 %v1961, %v2192
  %v2194 = vpop.f32.mrf.mxu0
  %2195 = vmatprep.mubr.bf16.mxu0 %v1000
  %2196 = vmatmul.mubr.bf16.gmra.mxu0 %v999
  %v2197 = vpop.f32.mrf.mxu0
  %v2198 = vadd.f32 %v1966, %v2197
  %v2199 = vpop.f32.mrf.mxu0
  %v2200 = vpop.f32.mrf.mxu0
  %v2201 = vadd.f32 %v1969, %v2200
  %v2202 = vpop.f32.mrf.mxu0
  %2203 = vmatprep.mubr.bf16.mxu0 %v1007
  %2204 = vmatmul.mubr.bf16.gmra.mxu0 %v1006
  %v2205 = vpop.f32.mrf.mxu0
  %v2206 = vadd.f32 %v1974, %v2205
  %v2207 = vpop.f32.mrf.mxu0
  %v2208 = vpop.f32.mrf.mxu0
  %v2209 = vadd.f32 %v1977, %v2208
  %v2210 = vpop.f32.mrf.mxu0
  %2211 = vmatprep.mubr.bf16.mxu0 %v1014
  %2212 = vmatmul.mubr.bf16.gmra.mxu0 %v1013
  %v2213 = vpop.f32.mrf.mxu0
  %v2214 = vadd.f32 %v1982, %v2213
  %v2215 = vpop.f32.mrf.mxu0
  %v2216 = vpop.f32.mrf.mxu0
  %v2217 = vadd.f32 %v1985, %v2216
  %v2218 = vpop.f32.mrf.mxu0
  %2219 = vmatprep.mubr.bf16.mxu0 %v1021
  %2220 = vmatmul.mubr.bf16.gmra.mxu0 %v1020
  %v2221 = vpop.f32.mrf.mxu0
  %v2222 = vadd.f32 %v1990, %v2221
  %v2223 = vpop.f32.mrf.mxu0
  %v2224 = vpop.f32.mrf.mxu0
  %v2225 = vadd.f32 %v1993, %v2224
  %v2226 = vpop.f32.mrf.mxu0
  %2227 = vmatprep.mubr.bf16.mxu0 %v1028
  %2228 = vmatmul.mubr.bf16.gmra.mxu0 %v1027
  %v2229 = vpop.f32.mrf.mxu0
  %v2230 = vadd.f32 %v1998, %v2229
  %v2231 = vpop.f32.mrf.mxu0
  %v2232 = vpop.f32.mrf.mxu0
  %v2233 = vadd.f32 %v2001, %v2232
  %v2234 = vpop.f32.mrf.mxu0
  %2235 = vmatprep.mubr.bf16.mxu0 %v1035
  %2236 = vmatmul.mubr.bf16.gmra.mxu0 %v1034
  %v2237 = vpop.f32.mrf.mxu0
  %v2238 = vadd.f32 %v2006, %v2237
  %v2239 = vpop.f32.mrf.mxu0
  %v2240 = vpop.f32.mrf.mxu0
  %v2241 = vadd.f32 %v2009, %v2240
  %v2242 = vpop.f32.mrf.mxu0
  %2243 = vmatprep.mubr.bf16.mxu0 %v1042
  %2244 = vmatmul.mubr.bf16.gmra.mxu0 %v1041
  %v2245 = vpop.f32.mrf.mxu0
  %v2246 = vadd.f32 %v2014, %v2245
  %v2247 = vpop.f32.mrf.mxu0
  %v2248 = vpop.f32.mrf.mxu0
  %v2249 = vpop.f32.mrf.mxu0
  %2250 = vdwg.mxu0
  %2251 = vmatprep.subr.bf16.mxu0 0
  %2252 = vmatpush1.bf16.msra.mxu0 %v1498
  %2253 = vmatprep.subr.bf16.mxu0 0
  %2254 = vmatpush1.bf16.msra.mxu0 %v1497
  %2255 = vmatprep.subr.bf16.mxu0 0
  %2256 = vmatpush1.bf16.msra.mxu0 %v1496
  %2257 = vmatprep.subr.bf16.mxu0 0
  %2258 = vmatpush1.bf16.msra.mxu0 %v1495
  %2259 = vmatprep.subr.bf16.mxu0 0
  %2260 = vmatpush1.bf16.msra.mxu0 %v1494
  %2261 = vmatprep.subr.bf16.mxu0 0
  %2262 = vmatpush1.bf16.msra.mxu0 %v1493
  %2263 = vmatprep.subr.bf16.mxu0 0
  %2264 = vmatpush1.bf16.msra.mxu0 %v1492
  %2265 = vmatprep.subr.bf16.mxu0 0
  %2266 = vmatpush1.bf16.msra.mxu0 %v1491
  %2267 = vmatprep.subr.bf16.mxu0 0
  %2268 = vmatpush2.bf16.msra.mxu0 0
  %2269 = vmatprep.subr.bf16.mxu0 0
  %2270 = vmatpush2.bf16.msra.mxu0 0
  %2271 = vmatprep.subr.bf16.mxu0 0
  %2272 = vmatpush2.bf16.msra.mxu0 0
  %2273 = vmatprep.subr.bf16.mxu0 0
  %2274 = vmatpush2.bf16.msra.mxu0 0
  %2275 = vmatprep.subr.bf16.mxu0 0
  %2276 = vmatpush2.bf16.msra.mxu0 0
  %2277 = vmatprep.subr.bf16.mxu0 0
  %2278 = vmatpush2.bf16.msra.mxu0 0
  %2279 = vmatprep.subr.bf16.mxu0 0
  %2280 = vmatpush2.bf16.msra.mxu0 0
  %2281 = vmatprep.subr.bf16.mxu0 0
  %2282 = vmatpush2.bf16.msra.mxu0 0
  %2283 = vmatprep.mubr.bf16.mxu0 0
  %2284 = vmatmul.mubr.bf16.gmra.mxu0 %v875
  %v2285 = vpop.f32.mrf.mxu0
  %v2286 = vadd.f32 %v2054, %v2285
  %v2287 = vpop.f32.mrf.mxu0
  %v2288 = vpop.f32.mrf.mxu0
  %v2289 = vadd.f32 %v2057, %v2288
  %v2290 = vpop.f32.mrf.mxu0
  %2291 = vmatprep.mubr.bf16.mxu0 0
  %2292 = vmatmul.mubr.bf16.gmra.mxu0 %v882
  %v2293 = vpop.f32.mrf.mxu0
  %v2294 = vadd.f32 %v2062, %v2293
  %v2295 = vpop.f32.mrf.mxu0
  %v2296 = vpop.f32.mrf.mxu0
  %v2297 = vadd.f32 %v2065, %v2296
  %v2298 = vpop.f32.mrf.mxu0
  %2299 = vmatprep.mubr.bf16.mxu0 0
  %2300 = vmatmul.mubr.bf16.gmra.mxu0 %v889
  %v2301 = vpop.f32.mrf.mxu0
  %v2302 = vadd.f32 %v2070, %v2301
  %v2303 = vpop.f32.mrf.mxu0
  %v2304 = vpop.f32.mrf.mxu0
  %v2305 = vadd.f32 %v2073, %v2304
  %v2306 = vpop.f32.mrf.mxu0
  %2307 = vmatprep.mubr.bf16.mxu0 0
  %2308 = vmatmul.mubr.bf16.gmra.mxu0 %v896
  %v2309 = vpop.f32.mrf.mxu0
  %v2310 = vadd.f32 %v2078, %v2309
  %v2311 = vpop.f32.mrf.mxu0
  %v2312 = vpop.f32.mrf.mxu0
  %v2313 = vadd.f32 %v2081, %v2312
  %v2314 = vpop.f32.mrf.mxu0
  %2315 = vmatprep.mubr.bf16.mxu0 0
  %2316 = vmatmul.mubr.bf16.gmra.mxu0 %v903
  %v2317 = vpop.f32.mrf.mxu0
  %v2318 = vadd.f32 %v2086, %v2317
  %v2319 = vpop.f32.mrf.mxu0
  %v2320 = vpop.f32.mrf.mxu0
  %v2321 = vadd.f32 %v2089, %v2320
  %v2322 = vpop.f32.mrf.mxu0
  %2323 = vmatprep.mubr.bf16.mxu0 0
  %2324 = vmatmul.mubr.bf16.gmra.mxu0 %v910
  %v2325 = vpop.f32.mrf.mxu0
  %v2326 = vadd.f32 %v2094, %v2325
  %v2327 = vpop.f32.mrf.mxu0
  %v2328 = vpop.f32.mrf.mxu0
  %v2329 = vadd.f32 %v2097, %v2328
  %v2330 = vpop.f32.mrf.mxu0
  %2331 = vmatprep.mubr.bf16.mxu0 0
  %2332 = vmatmul.mubr.bf16.gmra.mxu0 %v917
  %v2333 = vpop.f32.mrf.mxu0
  %v2334 = vadd.f32 %v2102, %v2333
  %v2335 = vpop.f32.mrf.mxu0
  %v2336 = vpop.f32.mrf.mxu0
  %v2337 = vadd.f32 %v2105, %v2336
  %v2338 = vpop.f32.mrf.mxu0
  %2339 = vmatprep.mubr.bf16.mxu0 0
  %2340 = vmatmul.mubr.bf16.gmra.mxu0 %v924
  %v2341 = vpop.f32.mrf.mxu0
  %v2342 = vadd.f32 %v2110, %v2341
  %v2343 = vpop.f32.mrf.mxu0
  %v2344 = vpop.f32.mrf.mxu0
  %v2345 = vadd.f32 %v2113, %v2344
  %v2346 = vpop.f32.mrf.mxu0
  %2347 = vmatprep.mubr.bf16.mxu0 0
  %2348 = vmatmul.mubr.bf16.gmra.mxu0 %v931
  %v2349 = vpop.f32.mrf.mxu0
  %v2350 = vadd.f32 %v2118, %v2349
  %v2351 = vpop.f32.mrf.mxu0
  %v2352 = vpop.f32.mrf.mxu0
  %v2353 = vadd.f32 %v2121, %v2352
  %v2354 = vpop.f32.mrf.mxu0
  %2355 = vmatprep.mubr.bf16.mxu0 0
  %2356 = vmatmul.mubr.bf16.gmra.mxu0 %v938
  %v2357 = vpop.f32.mrf.mxu0
  %v2358 = vadd.f32 %v2126, %v2357
  %v2359 = vpop.f32.mrf.mxu0
  %v2360 = vpop.f32.mrf.mxu0
  %v2361 = vadd.f32 %v2129, %v2360
  %v2362 = vpop.f32.mrf.mxu0
  %2363 = vmatprep.mubr.bf16.mxu0 0
  %2364 = vmatmul.mubr.bf16.gmra.mxu0 %v945
  %v2365 = vpop.f32.mrf.mxu0
  %v2366 = vadd.f32 %v2134, %v2365
  %v2367 = vpop.f32.mrf.mxu0
  %v2368 = vpop.f32.mrf.mxu0
  %v2369 = vadd.f32 %v2137, %v2368
  %v2370 = vpop.f32.mrf.mxu0
  %2371 = vmatprep.mubr.bf16.mxu0 0
  %2372 = vmatmul.mubr.bf16.gmra.mxu0 %v952
  %v2373 = vpop.f32.mrf.mxu0
  %v2374 = vadd.f32 %v2142, %v2373
  %v2375 = vpop.f32.mrf.mxu0
  %v2376 = vpop.f32.mrf.mxu0
  %v2377 = vadd.f32 %v2145, %v2376
  %v2378 = vpop.f32.mrf.mxu0
  %2379 = vmatprep.mubr.bf16.mxu0 0
  %2380 = vmatmul.mubr.bf16.gmra.mxu0 %v959
  %v2381 = vpop.f32.mrf.mxu0
  %v2382 = vadd.f32 %v2150, %v2381
  %v2383 = vpop.f32.mrf.mxu0
  %v2384 = vpop.f32.mrf.mxu0
  %v2385 = vadd.f32 %v2153, %v2384
  %v2386 = vpop.f32.mrf.mxu0
  %2387 = vmatprep.mubr.bf16.mxu0 0
  %2388 = vmatmul.mubr.bf16.gmra.mxu0 %v966
  %v2389 = vpop.f32.mrf.mxu0
  %v2390 = vadd.f32 %v2158, %v2389
  %v2391 = vpop.f32.mrf.mxu0
  %v2392 = vpop.f32.mrf.mxu0
  %v2393 = vadd.f32 %v2161, %v2392
  %v2394 = vpop.f32.mrf.mxu0
  %2395 = vmatprep.mubr.bf16.mxu0 0
  %2396 = vmatmul.mubr.bf16.gmra.mxu0 %v973
  %v2397 = vpop.f32.mrf.mxu0
  %v2398 = vadd.f32 %v2166, %v2397
  %v2399 = vpop.f32.mrf.mxu0
  %v2400 = vpop.f32.mrf.mxu0
  %v2401 = vadd.f32 %v2169, %v2400
  %v2402 = vpop.f32.mrf.mxu0
  %2403 = vmatprep.mubr.bf16.mxu0 0
  %2404 = vmatmul.mubr.bf16.gmra.mxu0 %v980
  %v2405 = vpop.f32.mrf.mxu0
  %v2406 = vadd.f32 %v2174, %v2405
  %v2407 = vpop.f32.mrf.mxu0
  %v2408 = vpop.f32.mrf.mxu0
  %v2409 = vadd.f32 %v2177, %v2408
  %v2410 = vpop.f32.mrf.mxu0
  %2411 = vmatprep.mubr.bf16.mxu0 0
  %2412 = vmatmul.mubr.bf16.gmra.mxu0 %v987
  %v2413 = vpop.f32.mrf.mxu0
  %v2414 = vadd.f32 %v2182, %v2413
  %v2415 = vpop.f32.mrf.mxu0
  %v2416 = vpop.f32.mrf.mxu0
  %v2417 = vadd.f32 %v2185, %v2416
  %v2418 = vpop.f32.mrf.mxu0
  %2419 = vmatprep.mubr.bf16.mxu0 0
  %2420 = vmatmul.mubr.bf16.gmra.mxu0 %v994
  %v2421 = vpop.f32.mrf.mxu0
  %v2422 = vadd.f32 %v2190, %v2421
  %v2423 = vpop.f32.mrf.mxu0
  %v2424 = vpop.f32.mrf.mxu0
  %v2425 = vadd.f32 %v2193, %v2424
  %v2426 = vpop.f32.mrf.mxu0
  %2427 = vmatprep.mubr.bf16.mxu0 0
  %2428 = vmatmul.mubr.bf16.gmra.mxu0 %v1001
  %v2429 = vpop.f32.mrf.mxu0
  %v2430 = vadd.f32 %v2198, %v2429
  %v2431 = vpop.f32.mrf.mxu0
  %v2432 = vpop.f32.mrf.mxu0
  %v2433 = vadd.f32 %v2201, %v2432
  %v2434 = vpop.f32.mrf.mxu0
  %2435 = vmatprep.mubr.bf16.mxu0 0
  %2436 = vmatmul.mubr.bf16.gmra.mxu0 %v1008
  %v2437 = vpop.f32.mrf.mxu0
  %v2438 = vadd.f32 %v2206, %v2437
  %v2439 = vpop.f32.mrf.mxu0
  %v2440 = vpop.f32.mrf.mxu0
  %v2441 = vadd.f32 %v2209, %v2440
  %v2442 = vpop.f32.mrf.mxu0
  %2443 = vmatprep.mubr.bf16.mxu0 0
  %2444 = vmatmul.mubr.bf16.gmra.mxu0 %v1015
  %v2445 = vpop.f32.mrf.mxu0
  %v2446 = vadd.f32 %v2214, %v2445
  %v2447 = vpop.f32.mrf.mxu0
  %v2448 = vpop.f32.mrf.mxu0
  %v2449 = vadd.f32 %v2217, %v2448
  %v2450 = vpop.f32.mrf.mxu0
  %2451 = vmatprep.mubr.bf16.mxu0 0
  %2452 = vmatmul.mubr.bf16.gmra.mxu0 %v1022
  %v2453 = vpop.f32.mrf.mxu0
  %v2454 = vadd.f32 %v2222, %v2453
  %v2455 = vpop.f32.mrf.mxu0
  %v2456 = vpop.f32.mrf.mxu0
  %v2457 = vadd.f32 %v2225, %v2456
  %v2458 = vpop.f32.mrf.mxu0
  %2459 = vmatprep.mubr.bf16.mxu0 0
  %2460 = vmatmul.mubr.bf16.gmra.mxu0 %v1029
  %v2461 = vpop.f32.mrf.mxu0
  %v2462 = vadd.f32 %v2230, %v2461
  %v2463 = vpop.f32.mrf.mxu0
  %v2464 = vpop.f32.mrf.mxu0
  %v2465 = vadd.f32 %v2233, %v2464
  %v2466 = vpop.f32.mrf.mxu0
  %2467 = vmatprep.mubr.bf16.mxu0 0
  %2468 = vmatmul.mubr.bf16.gmra.mxu0 %v1036
  %v2469 = vpop.f32.mrf.mxu0
  %v2470 = vadd.f32 %v2238, %v2469
  %v2471 = vpop.f32.mrf.mxu0
  %v2472 = vpop.f32.mrf.mxu0
  %v2473 = vadd.f32 %v2241, %v2472
  %v2474 = vpop.f32.mrf.mxu0
  %2475 = vmatprep.mubr.bf16.mxu0 0
  %2476 = vmatmul.mubr.bf16.gmra.mxu0 %v1043
  %v2477 = vpop.f32.mrf.mxu0
  %v2478 = vadd.f32 %v2246, %v2477
  %v2479 = vpop.f32.mrf.mxu0
  %v2480 = vpop.f32.mrf.mxu0
  %v2481 = vpop.f32.mrf.mxu0
  %2482 = vdwg.mxu0
  %v2483 = vmax.f32 %v2286, 0.0
  %v2484 = vmax.f32 %v2289, 0.0
  %v2485 = vmax.f32 %v2294, 0.0
  %v2486 = vmax.f32 %v2297, 0.0
  %v2487 = vmax.f32 %v2302, 0.0
  %v2488 = vmax.f32 %v2305, 0.0
  %v2489 = vmax.f32 %v2310, 0.0
  %v2490 = vmax.f32 %v2313, 0.0
  %v2491 = vmax.f32 %v2318, 0.0
  %v2492 = vmax.f32 %v2321, 0.0
  %v2493 = vmax.f32 %v2326, 0.0
  %v2494 = vmax.f32 %v2329, 0.0
  %v2495 = vmax.f32 %v2334, 0.0
  %v2496 = vmax.f32 %v2337, 0.0
  %v2497 = vmax.f32 %v2342, 0.0
  %v2498 = vmax.f32 %v2345, 0.0
  %v2499 = vmax.f32 %v2350, 0.0
  %v2500 = vmax.f32 %v2353, 0.0
  %v2501 = vmax.f32 %v2358, 0.0
  %v2502 = vmax.f32 %v2361, 0.0
  %v2503 = vmax.f32 %v2366, 0.0
  %v2504 = vmax.f32 %v2369, 0.0
  %v2505 = vmax.f32 %v2374, 0.0
  %v2506 = vmax.f32 %v2377, 0.0
  %v2507 = vmax.f32 %v2382, 0.0
  %v2508 = vmax.f32 %v2385, 0.0
  %v2509 = vmax.f32 %v2390, 0.0
  %v2510 = vmax.f32 %v2393, 0.0
  %v2511 = vmax.f32 %v2398, 0.0
  %v2512 = vmax.f32 %v2401, 0.0
  %v2513 = vmax.f32 %v2406, 0.0
  %v2514 = vmax.f32 %v2409, 0.0
  %v2515 = vmax.f32 %v2414, 0.0
  %v2516 = vmax.f32 %v2417, 0.0
  %v2517 = vmax.f32 %v2422, 0.0
  %v2518 = vmax.f32 %v2425, 0.0
  %v2519 = vmax.f32 %v2430, 0.0
  %v2520 = vmax.f32 %v2433, 0.0
  %v2521 = vmax.f32 %v2438, 0.0
  %v2522 = vmax.f32 %v2441, 0.0
  %v2523 = vmax.f32 %v2446, 0.0
  %v2524 = vmax.f32 %v2449, 0.0
  %v2525 = vmax.f32 %v2454, 0.0
  %v2526 = vmax.f32 %v2457, 0.0
  %v2527 = vmax.f32 %v2462, 0.0
  %v2528 = vmax.f32 %v2465, 0.0
  %v2529 = vmax.f32 %v2470, 0.0
  %v2530 = vmax.f32 %v2473, 0.0
  %v2531 = vmax.f32 %v2478, 0.0
  %v2532 = vpack.c.bf16 %v2484, %v2483
  %v2533 = vpack.c.bf16 %v2486, %v2485
  %v2534 = vpack.c.bf16 %v2488, %v2487
  %v2535 = vpack.c.bf16 %v2490, %v2489
  %v2536 = vpack.c.bf16 %v2492, %v2491
  %v2537 = vpack.c.bf16 %v2494, %v2493
  %v2538 = vpack.c.bf16 %v2496, %v2495
  %v2539 = vpack.c.bf16 %v2498, %v2497
  %v2540 = vpack.c.bf16 %v2500, %v2499
  %v2541 = vpack.c.bf16 %v2502, %v2501
  %v2542 = vpack.c.bf16 %v2504, %v2503
  %v2543 = vpack.c.bf16 %v2506, %v2505
  %v2544 = vpack.c.bf16 %v2508, %v2507
  %v2545 = vpack.c.bf16 %v2510, %v2509
  %v2546 = vpack.c.bf16 %v2512, %v2511
  %v2547 = vpack.c.bf16 %v2514, %v2513
  %v2548 = vpack.c.bf16 %v2516, %v2515
  %v2549 = vpack.c.bf16 %v2518, %v2517
  %v2550 = vpack.c.bf16 %v2520, %v2519
  %v2551 = vpack.c.bf16 %v2522, %v2521
  %v2552 = vpack.c.bf16 %v2524, %v2523
  %v2553 = vpack.c.bf16 %v2526, %v2525
  %v2554 = vpack.c.bf16 %v2528, %v2527
  %v2555 = vpack.c.bf16 %v2530, %v2529
  %v2556 = vpack.c.bf16 %v2531, %v2531
  %v2582 = vunpack.c.l.b16 %v2532
  %v2583 = vunpack.c.h.b16 %v2532
  %v2584 = vunpack.c.l.b16 %v2533
  %v2585 = vunpack.c.h.b16 %v2533
  %v2586 = vunpack.c.l.b16 %v2534
  %v2587 = vunpack.c.h.b16 %v2534
  %v2588 = vunpack.c.l.b16 %v2535
  %v2589 = vunpack.c.h.b16 %v2535
  %v2590 = vunpack.c.l.b16 %v2536
  %v2591 = vunpack.c.h.b16 %v2536
  %v2592 = vunpack.c.l.b16 %v2537
  %v2593 = vunpack.c.h.b16 %v2537
  %v2594 = vunpack.c.l.b16 %v2538
  %v2595 = vunpack.c.h.b16 %v2538
  %v2596 = vunpack.c.l.b16 %v2539
  %v2597 = vunpack.c.h.b16 %v2539
  %v2598 = vunpack.c.l.b16 %v2540
  %v2599 = vunpack.c.h.b16 %v2540
  %v2600 = vunpack.c.l.b16 %v2541
  %v2601 = vunpack.c.h.b16 %v2541
  %v2602 = vunpack.c.l.b16 %v2542
  %v2603 = vunpack.c.h.b16 %v2542
  %v2604 = vunpack.c.l.b16 %v2543
  %v2605 = vunpack.c.h.b16 %v2543
  %v2606 = vunpack.c.l.b16 %v2544
  %v2607 = vunpack.c.h.b16 %v2544
  %v2608 = vunpack.c.l.b16 %v2545
  %v2609 = vunpack.c.h.b16 %v2545
  %v2610 = vunpack.c.l.b16 %v2546
  %v2611 = vunpack.c.h.b16 %v2546
  %v2612 = vunpack.c.l.b16 %v2547
  %v2613 = vunpack.c.h.b16 %v2547
  %v2614 = vunpack.c.l.b16 %v2548
  %v2615 = vunpack.c.h.b16 %v2548
  %v2616 = vunpack.c.l.b16 %v2549
  %v2617 = vunpack.c.h.b16 %v2549
  %v2618 = vunpack.c.l.b16 %v2550
  %v2619 = vunpack.c.h.b16 %v2550
  %v2620 = vunpack.c.l.b16 %v2551
  %v2621 = vunpack.c.h.b16 %v2551
  %v2622 = vunpack.c.l.b16 %v2552
  %v2623 = vunpack.c.h.b16 %v2552
  %v2624 = vunpack.c.l.b16 %v2553
  %v2625 = vunpack.c.h.b16 %v2553
  %v2626 = vunpack.c.l.b16 %v2554
  %v2627 = vunpack.c.h.b16 %v2554
  %v2628 = vunpack.c.l.b16 %v2555
  %v2629 = vunpack.c.h.b16 %v2555
  %v2630 = vunpack.c.l.b16 %v2556
  %v2631 = vpack.c.b16 %v2582, %v2582
  %v2632 = vpack.c.b16 %v2583, %v2583
  %v2633 = vpack.c.b16 %v2584, %v2584
  %v2634 = vpack.c.b16 %v2585, %v2585
  %v2635 = vpack.c.b16 %v2586, %v2586
  %v2636 = vpack.c.b16 %v2587, %v2587
  %v2637 = vpack.c.b16 %v2588, %v2588
  %v2638 = vpack.c.b16 %v2589, %v2589
  %v2639 = vpack.c.b16 %v2590, %v2590
  %v2640 = vpack.c.b16 %v2591, %v2591
  %v2641 = vpack.c.b16 %v2592, %v2592
  %v2642 = vpack.c.b16 %v2593, %v2593
  %v2643 = vpack.c.b16 %v2594, %v2594
  %v2644 = vpack.c.b16 %v2595, %v2595
  %v2645 = vpack.c.b16 %v2596, %v2596
  %v2646 = vpack.c.b16 %v2597, %v2597
  %v2647 = vpack.c.b16 %v2598, %v2598
  %v2648 = vpack.c.b16 %v2599, %v2599
  %v2649 = vpack.c.b16 %v2600, %v2600
  %v2650 = vpack.c.b16 %v2601, %v2601
  %v2651 = vpack.c.b16 %v2602, %v2602
  %v2652 = vpack.c.b16 %v2603, %v2603
  %v2653 = vpack.c.b16 %v2604, %v2604
  %v2654 = vpack.c.b16 %v2605, %v2605
  %v2655 = vpack.c.b16 %v2606, %v2606
  %v2656 = vpack.c.b16 %v2607, %v2607
  %v2657 = vpack.c.b16 %v2608, %v2608
  %v2658 = vpack.c.b16 %v2609, %v2609
  %v2659 = vpack.c.b16 %v2610, %v2610
  %v2660 = vpack.c.b16 %v2611, %v2611
  %v2661 = vpack.c.b16 %v2612, %v2612
  %v2662 = vpack.c.b16 %v2613, %v2613
  %v2663 = vpack.c.b16 %v2614, %v2614
  %v2664 = vpack.c.b16 %v2615, %v2615
  %v2665 = vpack.c.b16 %v2616, %v2616
  %v2666 = vpack.c.b16 %v2617, %v2617
  %v2667 = vpack.c.b16 %v2618, %v2618
  %v2668 = vpack.c.b16 %v2619, %v2619
  %v2669 = vpack.c.b16 %v2620, %v2620
  %v2670 = vpack.c.b16 %v2621, %v2621
  %v2671 = vpack.c.b16 %v2622, %v2622
  %v2672 = vpack.c.b16 %v2623, %v2623
  %v2673 = vpack.c.b16 %v2624, %v2624
  %v2674 = vpack.c.b16 %v2625, %v2625
  %v2675 = vpack.c.b16 %v2626, %v2626
  %v2676 = vpack.c.b16 %v2627, %v2627
  %v2677 = vpack.c.b16 %v2628, %v2628
  %v2678 = vpack.c.b16 %v2629, %v2629
  %v2679 = vpack.c.b16 %v2630, %v2630
  %2729 = vst [vmem:[%s3] sm:$0xf] %v2631
  %2730 = vst [vmem:[%s3 + $0x4] sm:$0xf] %v2632
  %2731 = vst [vmem:[%s3 + $0x8] sm:$0xf] %v2633
  %2732 = vst [vmem:[%s3 + $0xc] sm:$0xf] %v2634
  %2733 = vst [vmem:[%s3 + $0x10] sm:$0xf] %v2635
  %2734 = vst [vmem:[%s3 + $0x14] sm:$0xf] %v2636
  %2735 = vst [vmem:[%s3 + $0x18] sm:$0xf] %v2637
  %2736 = vst [vmem:[%s3 + $0x1c] sm:$0xf] %v2638
  %2737 = vst [vmem:[%s3 + $0x20] sm:$0xf] %v2639
  %2738 = vst [vmem:[%s3 + $0x24] sm:$0xf] %v2640
  %2739 = vst [vmem:[%s3 + $0x28] sm:$0xf] %v2641
  %2740 = vst [vmem:[%s3 + $0x2c] sm:$0xf] %v2642
  %2741 = vst [vmem:[%s3 + $0x30] sm:$0xf] %v2643
  %2742 = vst [vmem:[%s3 + $0x34] sm:$0xf] %v2644
  %2743 = vst [vmem:[%s3 + $0x38] sm:$0xf] %v2645
  %2744 = vst [vmem:[%s3 + $0x3c] sm:$0xf] %v2646
  %2745 = vst [vmem:[%s3 + $0x40] sm:$0xf] %v2647
  %2746 = vst [vmem:[%s3 + $0x44] sm:$0xf] %v2648
  %2747 = vst [vmem:[%s3 + $0x48] sm:$0xf] %v2649
  %2748 = vst [vmem:[%s3 + $0x4c] sm:$0xf] %v2650
  %2749 = vst [vmem:[%s3 + $0x50] sm:$0xf] %v2651
  %2750 = vst [vmem:[%s3 + $0x54] sm:$0xf] %v2652
  %2751 = vst [vmem:[%s3 + $0x58] sm:$0xf] %v2653
  %2752 = vst [vmem:[%s3 + $0x5c] sm:$0xf] %v2654
  %2753 = vst [vmem:[%s3 + $0x60] sm:$0xf] %v2655
  %2754 = vst [vmem:[%s3 + $0x64] sm:$0xf] %v2656
  %2755 = vst [vmem:[%s3 + $0x68] sm:$0xf] %v2657
  %2756 = vst [vmem:[%s3 + $0x6c] sm:$0xf] %v2658
  %2757 = vst [vmem:[%s3 + $0x70] sm:$0xf] %v2659
  %2758 = vst [vmem:[%s3 + $0x74] sm:$0xf] %v2660
  %2759 = vst [vmem:[%s3 + $0x78] sm:$0xf] %v2661
  %2760 = vst [vmem:[%s3 + $0x7c] sm:$0xf] %v2662
  %2761 = vst [vmem:[%s3 + $0x80] sm:$0xf] %v2663
  %2762 = vst [vmem:[%s3 + $0x84] sm:$0xf] %v2664
  %2763 = vst [vmem:[%s3 + $0x88] sm:$0xf] %v2665
  %2764 = vst [vmem:[%s3 + $0x8c] sm:$0xf] %v2666
  %2765 = vst [vmem:[%s3 + $0x90] sm:$0xf] %v2667
  %2766 = vst [vmem:[%s3 + $0x94] sm:$0xf] %v2668
  %2767 = vst [vmem:[%s3 + $0x98] sm:$0xf] %v2669
  %2768 = vst [vmem:[%s3 + $0x9c] sm:$0xf] %v2670
  %2769 = vst [vmem:[%s3 + $0xa0] sm:$0xf] %v2671
  %2770 = vst [vmem:[%s3 + $0xa4] sm:$0xf] %v2672
  %2771 = vst [vmem:[%s3 + $0xa8] sm:$0xf] %v2673
  %2772 = vst [vmem:[%s3 + $0xac] sm:$0xf] %v2674
  %2773 = vst [vmem:[%s3 + $0xb0] sm:$0xf] %v2675
  %2774 = vst [vmem:[%s3 + $0xb4] sm:$0xf] %v2676
  %2775 = vst [vmem:[%s3 + $0xb8] sm:$0xf] %v2677
  %2776 = vst [vmem:[%s3 + $0xbc] sm:$0xf] %v2678
  %2777 = vst [vmem:[%s3 + $0xc0] sm:$0xf] %v2679
  // Predicated region
  $region14: #{_lambda_.7} parent=0 // pred_check
    _
  $region15: #{_lambda_.7} parent=0 // pred_check_branch
    %2779 = sbr.rel (0) target = $region17
  $region16: #{_lambda_.7} parent=0 // pred_region
    _
  $region17: #{_lambda_.7} parent=0 // pred_fallthru
    _
  // Predicated region
  $region18: #{_lambda_.7} parent=0 // pred_check
    _
  $region19: #{_lambda_.7} parent=0 // pred_check_branch
    %2781 = sbr.rel (0) target = $region21
  $region20: #{_lambda_.7} parent=0 // pred_region
    _
  $region21: #{_lambda_.7} parent=0 // pred_fallthru
    _

// kernel: _lambda_.9
$region0: #{_lambda_.9}
  #allocation0 [shape = 'u32[]', space=smem, size = 0x4, offset = 0x4, fixed_abs, tag = 'smem constant byte address 0x4 - core index']
  #allocation1 [shape = 'u32[144,128]{1,0:T(1,128)}', space=vmem, size = 0x12000, scoped, tag = 'internal scratch']
  %s0 = inlined_call_operand.vmem [shape: bf16[8,2432], index: 0, kind: input, shape index: {}]
  %s1 = inlined_call_operand.vmem [shape: bf16[2432,128], index: 1, kind: input, shape index: {}]
  %s2 = inlined_call_operand.vmem [shape: f32[1,128], index: 2, kind: input, shape index: {}]
  %s3 = inlined_call_operand.vmem [shape: f32[8,128], index: 3, kind: output, shape index: {}]
  %s4 = sld [smem:[#allocation0]]
  $region22: #{_lambda_.9} parent=0
    _
  %s6 = ssub.s32 1, %s4
  %s7 = scalar_select 0, %s6, %s4
  // Predicated region
  $region2: #{_lambda_.9} parent=0 // pred_check
    _
  $region3: #{_lambda_.9} parent=0 // pred_check_branch
    %9 = sbr.rel (0) target = $region5
  $region4: #{_lambda_.9} parent=0 // pred_region
    _
  $region5: #{_lambda_.9} parent=0 // pred_fallthru
    _
  // Predicated region
  $region6: #{_lambda_.9} parent=0 // pred_check
    _
  $region7: #{_lambda_.9} parent=0 // pred_check_branch
    %11 = sbr.rel (0) target = $region9
  $region8: #{_lambda_.9} parent=0 // pred_region
    _
  $region9: #{_lambda_.9} parent=0 // pred_fallthru
    _
  // Predicated region
  $region10: #{_lambda_.9} parent=0 // pred_check
    _
  $region11: #{_lambda_.9} parent=0 // pred_check_branch
    %13 = sbr.rel (0) target = $region13
  $region12: #{_lambda_.9} parent=0 // pred_region
    _
  $region13: #{_lambda_.9} parent=0 // pred_fallthru
    _
  %v15 = vld [vmem:[%s0] sm:$0xff]
  %v16 = vld [vmem:[%s0 + $0x8] sm:$0xff]
  %v17 = vld [vmem:[%s0 + $0x10] sm:$0xff]
  %v18 = vld [vmem:[%s0 + $0x18] sm:$0xff]
  %v19 = vld [vmem:[%s0 + $0x20] sm:$0xff]
  %v20 = vld [vmem:[%s0 + $0x28] sm:$0xff]
  %v21 = vld [vmem:[%s0 + $0x30] sm:$0xff]
  %v22 = vld [vmem:[%s0 + $0x38] sm:$0xff]
  %v23 = vld [vmem:[%s0 + $0x40] sm:$0xff]
  %v24 = vld [vmem:[%s0 + $0x48] sm:$0xf]
  %v25 = vld [vmem:[%s1] sm:$0xf]
  %v26 = vld [vmem:[%s1 + $0x4] sm:$0xf]
  %v27 = vld [vmem:[%s1 + $0x8] sm:$0xf]
  %v28 = vld [vmem:[%s1 + $0xc] sm:$0xf]
  %v29 = vld [vmem:[%s1 + $0x10] sm:$0xf]
  %v30 = vld [vmem:[%s1 + $0x14] sm:$0xf]
  %v31 = vld [vmem:[%s1 + $0x18] sm:$0xf]
  %v32 = vld [vmem:[%s1 + $0x1c] sm:$0xf]
  %v33 = vld [vmem:[%s1 + $0x20] sm:$0xf]
  %v34 = vld [vmem:[%s1 + $0x24] sm:$0xf]
  %v35 = vld [vmem:[%s1 + $0x28] sm:$0xf]
  %v36 = vld [vmem:[%s1 + $0x2c] sm:$0xf]
  %v37 = vld [vmem:[%s1 + $0x30] sm:$0xf]
  %v38 = vld [vmem:[%s1 + $0x34] sm:$0xf]
  %v39 = vld [vmem:[%s1 + $0x38] sm:$0xf]
  %v40 = vld [vmem:[%s1 + $0x3c] sm:$0xf]
  %v41 = vld [vmem:[%s1 + $0x40] sm:$0xf]
  %v42 = vld [vmem:[%s1 + $0x44] sm:$0xf]
  %v43 = vld [vmem:[%s1 + $0x48] sm:$0xf]
  %v44 = vld [vmem:[%s1 + $0x4c] sm:$0xf]
  %v45 = vld [vmem:[%s1 + $0x50] sm:$0xf]
  %v46 = vld [vmem:[%s1 + $0x54] sm:$0xf]
  %v47 = vld [vmem:[%s1 + $0x58] sm:$0xf]
  %v48 = vld [vmem:[%s1 + $0x5c] sm:$0xf]
  %v49 = vld [vmem:[%s1 + $0x60] sm:$0xf]
  %v50 = vld [vmem:[%s1 + $0x64] sm:$0xf]
  %v51 = vld [vmem:[%s1 + $0x68] sm:$0xf]
  %v52 = vld [vmem:[%s1 + $0x6c] sm:$0xf]
  %v53 = vld [vmem:[%s1 + $0x70] sm:$0xf]
  %v54 = vld [vmem:[%s1 + $0x74] sm:$0xf]
  %v55 = vld [vmem:[%s1 + $0x78] sm:$0xf]
  %v56 = vld [vmem:[%s1 + $0x7c] sm:$0xf]
  %v57 = vld [vmem:[%s1 + $0x80] sm:$0xf]
  %v58 = vld [vmem:[%s1 + $0x84] sm:$0xf]
  %v59 = vld [vmem:[%s1 + $0x88] sm:$0xf]
  %v60 = vld [vmem:[%s1 + $0x8c] sm:$0xf]
  %v61 = vld [vmem:[%s1 + $0x90] sm:$0xf]
  %v62 = vld [vmem:[%s1 + $0x94] sm:$0xf]
  %v63 = vld [vmem:[%s1 + $0x98] sm:$0xf]
  %v64 = vld [vmem:[%s1 + $0x9c] sm:$0xf]
  %v65 = vld [vmem:[%s1 + $0xa0] sm:$0xf]
  %v66 = vld [vmem:[%s1 + $0xa4] sm:$0xf]
  %v67 = vld [vmem:[%s1 + $0xa8] sm:$0xf]
  %v68 = vld [vmem:[%s1 + $0xac] sm:$0xf]
  %v69 = vld [vmem:[%s1 + $0xb0] sm:$0xf]
  %v70 = vld [vmem:[%s1 + $0xb4] sm:$0xf]
  %v71 = vld [vmem:[%s1 + $0xb8] sm:$0xf]
  %v72 = vld [vmem:[%s1 + $0xbc] sm:$0xf]
  %v73 = vld [vmem:[%s1 + $0xc0] sm:$0xf]
  %v74 = vld [vmem:[%s1 + $0xc4] sm:$0xf]
  %v75 = vld [vmem:[%s1 + $0xc8] sm:$0xf]
  %v76 = vld [vmem:[%s1 + $0xcc] sm:$0xf]
  %v77 = vld [vmem:[%s1 + $0xd0] sm:$0xf]
  %v78 = vld [vmem:[%s1 + $0xd4] sm:$0xf]
  %v79 = vld [vmem:[%s1 + $0xd8] sm:$0xf]
  %v80 = vld [vmem:[%s1 + $0xdc] sm:$0xf]
  %v81 = vld [vmem:[%s1 + $0xe0] sm:$0xf]
  %v82 = vld [vmem:[%s1 + $0xe4] sm:$0xf]
  %v83 = vld [vmem:[%s1 + $0xe8] sm:$0xf]
  %v84 = vld [vmem:[%s1 + $0xec] sm:$0xf]
  %v85 = vld [vmem:[%s1 + $0xf0] sm:$0xf]
  %v86 = vld [vmem:[%s1 + $0xf4] sm:$0xf]
  %v87 = vld [vmem:[%s1 + $0xf8] sm:$0xf]
  %v88 = vld [vmem:[%s1 + $0xfc] sm:$0xf]
  %v89 = vld [vmem:[%s1 + $0x100] sm:$0xf]
  %v90 = vld [vmem:[%s1 + $0x104] sm:$0xf]
  %v91 = vld [vmem:[%s1 + $0x108] sm:$0xf]
  %v92 = vld [vmem:[%s1 + $0x10c] sm:$0xf]
  %v93 = vld [vmem:[%s1 + $0x110] sm:$0xf]
  %v94 = vld [vmem:[%s1 + $0x114] sm:$0xf]
  %v95 = vld [vmem:[%s1 + $0x118] sm:$0xf]
  %v96 = vld [vmem:[%s1 + $0x11c] sm:$0xf]
  %v97 = vld [vmem:[%s1 + $0x120] sm:$0xf]
  %v98 = vld [vmem:[%s1 + $0x124] sm:$0xf]
  %v99 = vld [vmem:[%s1 + $0x128] sm:$0xf]
  %v100 = vld [vmem:[%s1 + $0x12c] sm:$0xf]
  %v101 = vld [vmem:[%s1 + $0x130] sm:$0xf]
  %v102 = vld [vmem:[%s1 + $0x134] sm:$0xf]
  %v103 = vld [vmem:[%s1 + $0x138] sm:$0xf]
  %v104 = vld [vmem:[%s1 + $0x13c] sm:$0xf]
  %v105 = vld [vmem:[%s1 + $0x140] sm:$0xf]
  %v106 = vld [vmem:[%s1 + $0x144] sm:$0xf]
  %v107 = vld [vmem:[%s1 + $0x148] sm:$0xf]
  %v108 = vld [vmem:[%s1 + $0x14c] sm:$0xf]
  %v109 = vld [vmem:[%s1 + $0x150] sm:$0xf]
  %v110 = vld [vmem:[%s1 + $0x154] sm:$0xf]
  %v111 = vld [vmem:[%s1 + $0x158] sm:$0xf]
  %v112 = vld [vmem:[%s1 + $0x15c] sm:$0xf]
  %v113 = vld [vmem:[%s1 + $0x160] sm:$0xf]
  %v114 = vld [vmem:[%s1 + $0x164] sm:$0xf]
  %v115 = vld [vmem:[%s1 + $0x168] sm:$0xf]
  %v116 = vld [vmem:[%s1 + $0x16c] sm:$0xf]
  %v117 = vld [vmem:[%s1 + $0x170] sm:$0xf]
  %v118 = vld [vmem:[%s1 + $0x174] sm:$0xf]
  %v119 = vld [vmem:[%s1 + $0x178] sm:$0xf]
  %v120 = vld [vmem:[%s1 + $0x17c] sm:$0xf]
  %v121 = vld [vmem:[%s1 + $0x180] sm:$0xf]
  %v122 = vld [vmem:[%s1 + $0x184] sm:$0xf]
  %v123 = vld [vmem:[%s1 + $0x188] sm:$0xf]
  %v124 = vld [vmem:[%s1 + $0x18c] sm:$0xf]
  %v125 = vld [vmem:[%s1 + $0x190] sm:$0xf]
  %v126 = vld [vmem:[%s1 + $0x194] sm:$0xf]
  %v127 = vld [vmem:[%s1 + $0x198] sm:$0xf]
  %v128 = vld [vmem:[%s1 + $0x19c] sm:$0xf]
  %v129 = vld [vmem:[%s1 + $0x1a0] sm:$0xf]
  %v130 = vld [vmem:[%s1 + $0x1a4] sm:$0xf]
  %v131 = vld [vmem:[%s1 + $0x1a8] sm:$0xf]
  %v132 = vld [vmem:[%s1 + $0x1ac] sm:$0xf]
  %v133 = vld [vmem:[%s1 + $0x1b0] sm:$0xf]
  %v134 = vld [vmem:[%s1 + $0x1b4] sm:$0xf]
  %v135 = vld [vmem:[%s1 + $0x1b8] sm:$0xf]
  %v136 = vld [vmem:[%s1 + $0x1bc] sm:$0xf]
  %v137 = vld [vmem:[%s1 + $0x1c0] sm:$0xf]
  %v138 = vld [vmem:[%s1 + $0x1c4] sm:$0xf]
  %v139 = vld [vmem:[%s1 + $0x1c8] sm:$0xf]
  %v140 = vld [vmem:[%s1 + $0x1cc] sm:$0xf]
  %v141 = vld [vmem:[%s1 + $0x1d0] sm:$0xf]
  %v142 = vld [vmem:[%s1 + $0x1d4] sm:$0xf]
  %v143 = vld [vmem:[%s1 + $0x1d8] sm:$0xf]
  %v144 = vld [vmem:[%s1 + $0x1dc] sm:$0xf]
  %v145 = vld [vmem:[%s1 + $0x1e0] sm:$0xf]
  %v146 = vld [vmem:[%s1 + $0x1e4] sm:$0xf]
  %v147 = vld [vmem:[%s1 + $0x1e8] sm:$0xf]
  %v148 = vld [vmem:[%s1 + $0x1ec] sm:$0xf]
  %v149 = vld [vmem:[%s1 + $0x1f0] sm:$0xf]
  %v150 = vld [vmem:[%s1 + $0x1f4] sm:$0xf]
  %v151 = vld [vmem:[%s1 + $0x1f8] sm:$0xf]
  %v152 = vld [vmem:[%s1 + $0x1fc] sm:$0xf]
  %v153 = vld [vmem:[%s1 + $0x200] sm:$0xf]
  %v154 = vld [vmem:[%s1 + $0x204] sm:$0xf]
  %v155 = vld [vmem:[%s1 + $0x208] sm:$0xf]
  %v156 = vld [vmem:[%s1 + $0x20c] sm:$0xf]
  %v157 = vld [vmem:[%s1 + $0x210] sm:$0xf]
  %v158 = vld [vmem:[%s1 + $0x214] sm:$0xf]
  %v159 = vld [vmem:[%s1 + $0x218] sm:$0xf]
  %v160 = vld [vmem:[%s1 + $0x21c] sm:$0xf]
  %v161 = vld [vmem:[%s1 + $0x220] sm:$0xf]
  %v162 = vld [vmem:[%s1 + $0x224] sm:$0xf]
  %v163 = vld [vmem:[%s1 + $0x228] sm:$0xf]
  %v164 = vld [vmem:[%s1 + $0x22c] sm:$0xf]
  %v165 = vld [vmem:[%s1 + $0x230] sm:$0xf]
  %v166 = vld [vmem:[%s1 + $0x234] sm:$0xf]
  %v167 = vld [vmem:[%s1 + $0x238] sm:$0xf]
  %v168 = vld [vmem:[%s1 + $0x23c] sm:$0xf]
  %v169 = vld [vmem:[%s1 + $0x240] sm:$0xf]
  %v170 = vld [vmem:[%s1 + $0x244] sm:$0xf]
  %v171 = vld [vmem:[%s1 + $0x248] sm:$0xf]
  %v172 = vld [vmem:[%s1 + $0x24c] sm:$0xf]
  %v173 = vld [vmem:[%s1 + $0x250] sm:$0xf]
  %v174 = vld [vmem:[%s1 + $0x254] sm:$0xf]
  %v175 = vld [vmem:[%s1 + $0x258] sm:$0xf]
  %v176 = vld [vmem:[%s1 + $0x25c] sm:$0xf]
  %v177 = vld [vmem:[%s1 + $0x260] sm:$0xf]
  %v178 = vld [vmem:[%s1 + $0x264] sm:$0xf]
  %v179 = vld [vmem:[%s1 + $0x268] sm:$0xf]
  %v180 = vld [vmem:[%s1 + $0x26c] sm:$0xf]
  %v181 = vld [vmem:[%s1 + $0x270] sm:$0xf]
  %v182 = vld [vmem:[%s1 + $0x274] sm:$0xf]
  %v183 = vld [vmem:[%s1 + $0x278] sm:$0xf]
  %v184 = vld [vmem:[%s1 + $0x27c] sm:$0xf]
  %v185 = vld [vmem:[%s1 + $0x280] sm:$0xf]
  %v186 = vld [vmem:[%s1 + $0x284] sm:$0xf]
  %v187 = vld [vmem:[%s1 + $0x288] sm:$0xf]
  %v188 = vld [vmem:[%s1 + $0x28c] sm:$0xf]
  %v189 = vld [vmem:[%s1 + $0x290] sm:$0xf]
  %v190 = vld [vmem:[%s1 + $0x294] sm:$0xf]
  %v191 = vld [vmem:[%s1 + $0x298] sm:$0xf]
  %v192 = vld [vmem:[%s1 + $0x29c] sm:$0xf]
  %v193 = vld [vmem:[%s1 + $0x2a0] sm:$0xf]
  %v194 = vld [vmem:[%s1 + $0x2a4] sm:$0xf]
  %v195 = vld [vmem:[%s1 + $0x2a8] sm:$0xf]
  %v196 = vld [vmem:[%s1 + $0x2ac] sm:$0xf]
  %v197 = vld [vmem:[%s1 + $0x2b0] sm:$0xf]
  %v198 = vld [vmem:[%s1 + $0x2b4] sm:$0xf]
  %v199 = vld [vmem:[%s1 + $0x2b8] sm:$0xf]
  %v200 = vld [vmem:[%s1 + $0x2bc] sm:$0xf]
  %v201 = vld [vmem:[%s1 + $0x2c0] sm:$0xf]
  %v202 = vld [vmem:[%s1 + $0x2c4] sm:$0xf]
  %v203 = vld [vmem:[%s1 + $0x2c8] sm:$0xf]
  %v204 = vld [vmem:[%s1 + $0x2cc] sm:$0xf]
  %v205 = vld [vmem:[%s1 + $0x2d0] sm:$0xf]
  %v206 = vld [vmem:[%s1 + $0x2d4] sm:$0xf]
  %v207 = vld [vmem:[%s1 + $0x2d8] sm:$0xf]
  %v208 = vld [vmem:[%s1 + $0x2dc] sm:$0xf]
  %v209 = vld [vmem:[%s1 + $0x2e0] sm:$0xf]
  %v210 = vld [vmem:[%s1 + $0x2e4] sm:$0xf]
  %v211 = vld [vmem:[%s1 + $0x2e8] sm:$0xf]
  %v212 = vld [vmem:[%s1 + $0x2ec] sm:$0xf]
  %v213 = vld [vmem:[%s1 + $0x2f0] sm:$0xf]
  %v214 = vld [vmem:[%s1 + $0x2f4] sm:$0xf]
  %v215 = vld [vmem:[%s1 + $0x2f8] sm:$0xf]
  %v216 = vld [vmem:[%s1 + $0x2fc] sm:$0xf]
  %v217 = vld [vmem:[%s1 + $0x300] sm:$0xf]
  %v218 = vld [vmem:[%s1 + $0x304] sm:$0xf]
  %v219 = vld [vmem:[%s1 + $0x308] sm:$0xf]
  %v220 = vld [vmem:[%s1 + $0x30c] sm:$0xf]
  %v221 = vld [vmem:[%s1 + $0x310] sm:$0xf]
  %v222 = vld [vmem:[%s1 + $0x314] sm:$0xf]
  %v223 = vld [vmem:[%s1 + $0x318] sm:$0xf]
  %v224 = vld [vmem:[%s1 + $0x31c] sm:$0xf]
  %v225 = vld [vmem:[%s1 + $0x320] sm:$0xf]
  %v226 = vld [vmem:[%s1 + $0x324] sm:$0xf]
  %v227 = vld [vmem:[%s1 + $0x328] sm:$0xf]
  %v228 = vld [vmem:[%s1 + $0x32c] sm:$0xf]
  %v229 = vld [vmem:[%s1 + $0x330] sm:$0xf]
  %v230 = vld [vmem:[%s1 + $0x334] sm:$0xf]
  %v231 = vld [vmem:[%s1 + $0x338] sm:$0xf]
  %v232 = vld [vmem:[%s1 + $0x33c] sm:$0xf]
  %v233 = vld [vmem:[%s1 + $0x340] sm:$0xf]
  %v234 = vld [vmem:[%s1 + $0x344] sm:$0xf]
  %v235 = vld [vmem:[%s1 + $0x348] sm:$0xf]
  %v236 = vld [vmem:[%s1 + $0x34c] sm:$0xf]
  %v237 = vld [vmem:[%s1 + $0x350] sm:$0xf]
  %v238 = vld [vmem:[%s1 + $0x354] sm:$0xf]
  %v239 = vld [vmem:[%s1 + $0x358] sm:$0xf]
  %v240 = vld [vmem:[%s1 + $0x35c] sm:$0xf]
  %v241 = vld [vmem:[%s1 + $0x360] sm:$0xf]
  %v242 = vld [vmem:[%s1 + $0x364] sm:$0xf]
  %v243 = vld [vmem:[%s1 + $0x368] sm:$0xf]
  %v244 = vld [vmem:[%s1 + $0x36c] sm:$0xf]
  %v245 = vld [vmem:[%s1 + $0x370] sm:$0xf]
  %v246 = vld [vmem:[%s1 + $0x374] sm:$0xf]
  %v247 = vld [vmem:[%s1 + $0x378] sm:$0xf]
  %v248 = vld [vmem:[%s1 + $0x37c] sm:$0xf]
  %v249 = vld [vmem:[%s1 + $0x380] sm:$0xf]
  %v250 = vld [vmem:[%s1 + $0x384] sm:$0xf]
  %v251 = vld [vmem:[%s1 + $0x388] sm:$0xf]
  %v252 = vld [vmem:[%s1 + $0x38c] sm:$0xf]
  %v253 = vld [vmem:[%s1 + $0x390] sm:$0xf]
  %v254 = vld [vmem:[%s1 + $0x394] sm:$0xf]
  %v255 = vld [vmem:[%s1 + $0x398] sm:$0xf]
  %v256 = vld [vmem:[%s1 + $0x39c] sm:$0xf]
  %v257 = vld [vmem:[%s1 + $0x3a0] sm:$0xf]
  %v258 = vld [vmem:[%s1 + $0x3a4] sm:$0xf]
  %v259 = vld [vmem:[%s1 + $0x3a8] sm:$0xf]
  %v260 = vld [vmem:[%s1 + $0x3ac] sm:$0xf]
  %v261 = vld [vmem:[%s1 + $0x3b0] sm:$0xf]
  %v262 = vld [vmem:[%s1 + $0x3b4] sm:$0xf]
  %v263 = vld [vmem:[%s1 + $0x3b8] sm:$0xf]
  %v264 = vld [vmem:[%s1 + $0x3bc] sm:$0xf]
  %v265 = vld [vmem:[%s1 + $0x3c0] sm:$0xf]
  %v266 = vld [vmem:[%s1 + $0x3c4] sm:$0xf]
  %v267 = vld [vmem:[%s1 + $0x3c8] sm:$0xf]
  %v268 = vld [vmem:[%s1 + $0x3cc] sm:$0xf]
  %v269 = vld [vmem:[%s1 + $0x3d0] sm:$0xf]
  %v270 = vld [vmem:[%s1 + $0x3d4] sm:$0xf]
  %v271 = vld [vmem:[%s1 + $0x3d8] sm:$0xf]
  %v272 = vld [vmem:[%s1 + $0x3dc] sm:$0xf]
  %v273 = vld [vmem:[%s1 + $0x3e0] sm:$0xf]
  %v274 = vld [vmem:[%s1 + $0x3e4] sm:$0xf]
  %v275 = vld [vmem:[%s1 + $0x3e8] sm:$0xf]
  %v276 = vld [vmem:[%s1 + $0x3ec] sm:$0xf]
  %v277 = vld [vmem:[%s1 + $0x3f0] sm:$0xf]
  %v278 = vld [vmem:[%s1 + $0x3f4] sm:$0xf]
  %v279 = vld [vmem:[%s1 + $0x3f8] sm:$0xf]
  %v280 = vld [vmem:[%s1 + $0x3fc] sm:$0xf]
  %v281 = vld [vmem:[%s1 + $0x400] sm:$0xf]
  %v282 = vld [vmem:[%s1 + $0x404] sm:$0xf]
  %v283 = vld [vmem:[%s1 + $0x408] sm:$0xf]
  %v284 = vld [vmem:[%s1 + $0x40c] sm:$0xf]
  %v285 = vld [vmem:[%s1 + $0x410] sm:$0xf]
  %v286 = vld [vmem:[%s1 + $0x414] sm:$0xf]
  %v287 = vld [vmem:[%s1 + $0x418] sm:$0xf]
  %v288 = vld [vmem:[%s1 + $0x41c] sm:$0xf]
  %v289 = vld [vmem:[%s1 + $0x420] sm:$0xf]
  %v290 = vld [vmem:[%s1 + $0x424] sm:$0xf]
  %v291 = vld [vmem:[%s1 + $0x428] sm:$0xf]
  %v292 = vld [vmem:[%s1 + $0x42c] sm:$0xf]
  %v293 = vld [vmem:[%s1 + $0x430] sm:$0xf]
  %v294 = vld [vmem:[%s1 + $0x434] sm:$0xf]
  %v295 = vld [vmem:[%s1 + $0x438] sm:$0xf]
  %v296 = vld [vmem:[%s1 + $0x43c] sm:$0xf]
  %v297 = vld [vmem:[%s1 + $0x440] sm:$0xf]
  %v298 = vld [vmem:[%s1 + $0x444] sm:$0xf]
  %v299 = vld [vmem:[%s1 + $0x448] sm:$0xf]
  %v300 = vld [vmem:[%s1 + $0x44c] sm:$0xf]
  %v301 = vld [vmem:[%s1 + $0x450] sm:$0xf]
  %v302 = vld [vmem:[%s1 + $0x454] sm:$0xf]
  %v303 = vld [vmem:[%s1 + $0x458] sm:$0xf]
  %v304 = vld [vmem:[%s1 + $0x45c] sm:$0xf]
  %v305 = vld [vmem:[%s1 + $0x460] sm:$0xf]
  %v306 = vld [vmem:[%s1 + $0x464] sm:$0xf]
  %v307 = vld [vmem:[%s1 + $0x468] sm:$0xf]
  %v308 = vld [vmem:[%s1 + $0x46c] sm:$0xf]
  %v309 = vld [vmem:[%s1 + $0x470] sm:$0xf]
  %v310 = vld [vmem:[%s1 + $0x474] sm:$0xf]
  %v311 = vld [vmem:[%s1 + $0x478] sm:$0xf]
  %v312 = vld [vmem:[%s1 + $0x47c] sm:$0xf]
  %v313 = vld [vmem:[%s1 + $0x480] sm:$0xf]
  %v314 = vld [vmem:[%s1 + $0x484] sm:$0xf]
  %v315 = vld [vmem:[%s1 + $0x488] sm:$0xf]
  %v316 = vld [vmem:[%s1 + $0x48c] sm:$0xf]
  %v317 = vld [vmem:[%s1 + $0x490] sm:$0xf]
  %v318 = vld [vmem:[%s1 + $0x494] sm:$0xf]
  %v319 = vld [vmem:[%s1 + $0x498] sm:$0xf]
  %v320 = vld [vmem:[%s1 + $0x49c] sm:$0xf]
  %v321 = vld [vmem:[%s1 + $0x4a0] sm:$0xf]
  %v322 = vld [vmem:[%s1 + $0x4a4] sm:$0xf]
  %v323 = vld [vmem:[%s1 + $0x4a8] sm:$0xf]
  %v324 = vld [vmem:[%s1 + $0x4ac] sm:$0xf]
  %v325 = vld [vmem:[%s1 + $0x4b0] sm:$0xf]
  %v326 = vld [vmem:[%s1 + $0x4b4] sm:$0xf]
  %v327 = vld [vmem:[%s1 + $0x4b8] sm:$0xf]
  %v328 = vld [vmem:[%s1 + $0x4bc] sm:$0xf]
  %v329 = vld [vmem:[%s2] sm:$0x1]
  %v331 = vlaneseq
  %v332 = vshrl.u32 %v331, 7
  %v333 = vsub.s32 0, %v332
  %v334 = vrot.slane %v329, %v333
  %v346 = vunpack.c.l.b16 %v15
  %v347 = vunpack.c.h.b16 %v15
  %v348 = vunpack.c.l.b16 %v16
  %v349 = vunpack.c.h.b16 %v16
  %v350 = vunpack.c.l.b16 %v17
  %v351 = vunpack.c.h.b16 %v17
  %v352 = vunpack.c.l.b16 %v18
  %v353 = vunpack.c.h.b16 %v18
  %v354 = vunpack.c.l.b16 %v19
  %v355 = vunpack.c.h.b16 %v19
  %v356 = vunpack.c.l.b16 %v20
  %v357 = vunpack.c.h.b16 %v20
  %v358 = vunpack.c.l.b16 %v21
  %v359 = vunpack.c.h.b16 %v21
  %v360 = vunpack.c.l.b16 %v22
  %v361 = vunpack.c.h.b16 %v22
  %v362 = vunpack.c.l.b16 %v23
  %v363 = vunpack.c.h.b16 %v23
  %v364 = vunpack.c.l.b16 %v24
  %v365 = vpack.c.b16 %v346, %v346
  %v366 = vpack.c.b16 %v347, %v347
  %v367 = vpack.c.b16 %v348, %v348
  %v368 = vpack.c.b16 %v349, %v349
  %v369 = vpack.c.b16 %v350, %v350
  %v370 = vpack.c.b16 %v351, %v351
  %v371 = vpack.c.b16 %v352, %v352
  %v372 = vpack.c.b16 %v353, %v353
  %v373 = vpack.c.b16 %v354, %v354
  %v374 = vpack.c.b16 %v355, %v355
  %v375 = vpack.c.b16 %v356, %v356
  %v376 = vpack.c.b16 %v357, %v357
  %v377 = vpack.c.b16 %v358, %v358
  %v378 = vpack.c.b16 %v359, %v359
  %v379 = vpack.c.b16 %v360, %v360
  %v380 = vpack.c.b16 %v361, %v361
  %v381 = vpack.c.b16 %v362, %v362
  %v382 = vpack.c.b16 %v363, %v363
  %v383 = vpack.c.b16 %v364, %v364
  %v707 = vunpack.c.l.b16 %v25
  %v708 = vunpack.c.l.b16 %v26
  %v709 = vunpack.c.l.b16 %v27
  %v710 = vunpack.c.l.b16 %v28
  %v711 = vunpack.c.l.b16 %v29
  %v712 = vunpack.c.l.b16 %v30
  %v713 = vunpack.c.l.b16 %v31
  %v714 = vunpack.c.l.b16 %v32
  %v715 = vunpack.c.l.b16 %v33
  %v716 = vunpack.c.l.b16 %v34
  %v717 = vunpack.c.l.b16 %v35
  %v718 = vunpack.c.l.b16 %v36
  %v719 = vunpack.c.l.b16 %v37
  %v720 = vunpack.c.l.b16 %v38
  %v721 = vunpack.c.l.b16 %v39
  %v722 = vunpack.c.l.b16 %v40
  %v723 = vunpack.c.l.b16 %v41
  %v724 = vunpack.c.l.b16 %v42
  %v725 = vunpack.c.l.b16 %v43
  %v726 = vunpack.c.l.b16 %v44
  %v727 = vunpack.c.l.b16 %v45
  %v728 = vunpack.c.l.b16 %v46
  %v729 = vunpack.c.l.b16 %v47
  %v730 = vunpack.c.l.b16 %v48
  %v731 = vunpack.c.l.b16 %v49
  %v732 = vunpack.c.l.b16 %v50
  %v733 = vunpack.c.l.b16 %v51
  %v734 = vunpack.c.l.b16 %v52
  %v735 = vunpack.c.l.b16 %v53
  %v736 = vunpack.c.l.b16 %v54
  %v737 = vunpack.c.l.b16 %v55
  %v738 = vunpack.c.l.b16 %v56
  %v739 = vunpack.c.l.b16 %v57
  %v740 = vunpack.c.l.b16 %v58
  %v741 = vunpack.c.l.b16 %v59
  %v742 = vunpack.c.l.b16 %v60
  %v743 = vunpack.c.l.b16 %v61
  %v744 = vunpack.c.l.b16 %v62
  %v745 = vunpack.c.l.b16 %v63
  %v746 = vunpack.c.l.b16 %v64
  %v747 = vunpack.c.l.b16 %v65
  %v748 = vunpack.c.l.b16 %v66
  %v749 = vunpack.c.l.b16 %v67
  %v750 = vunpack.c.l.b16 %v68
  %v751 = vunpack.c.l.b16 %v69
  %v752 = vunpack.c.l.b16 %v70
  %v753 = vunpack.c.l.b16 %v71
  %v754 = vunpack.c.l.b16 %v72
  %v755 = vunpack.c.l.b16 %v73
  %v756 = vunpack.c.l.b16 %v74
  %v757 = vunpack.c.l.b16 %v75
  %v758 = vunpack.c.l.b16 %v76
  %v759 = vunpack.c.l.b16 %v77
  %v760 = vunpack.c.l.b16 %v78
  %v761 = vunpack.c.l.b16 %v79
  %v762 = vunpack.c.l.b16 %v80
  %v763 = vunpack.c.l.b16 %v81
  %v764 = vunpack.c.l.b16 %v82
  %v765 = vunpack.c.l.b16 %v83
  %v766 = vunpack.c.l.b16 %v84
  %v767 = vunpack.c.l.b16 %v85
  %v768 = vunpack.c.l.b16 %v86
  %v769 = vunpack.c.l.b16 %v87
  %v770 = vunpack.c.l.b16 %v88
  %v771 = vunpack.c.l.b16 %v89
  %v772 = vunpack.c.l.b16 %v90
  %v773 = vunpack.c.l.b16 %v91
  %v774 = vunpack.c.l.b16 %v92
  %v775 = vunpack.c.l.b16 %v93
  %v776 = vunpack.c.l.b16 %v94
  %v777 = vunpack.c.l.b16 %v95
  %v778 = vunpack.c.l.b16 %v96
  %v779 = vunpack.c.l.b16 %v97
  %v780 = vunpack.c.l.b16 %v98
  %v781 = vunpack.c.l.b16 %v99
  %v782 = vunpack.c.l.b16 %v100
  %v783 = vunpack.c.l.b16 %v101
  %v784 = vunpack.c.l.b16 %v102
  %v785 = vunpack.c.l.b16 %v103
  %v786 = vunpack.c.l.b16 %v104
  %v787 = vunpack.c.l.b16 %v105
  %v788 = vunpack.c.l.b16 %v106
  %v789 = vunpack.c.l.b16 %v107
  %v790 = vunpack.c.l.b16 %v108
  %v791 = vunpack.c.l.b16 %v109
  %v792 = vunpack.c.l.b16 %v110
  %v793 = vunpack.c.l.b16 %v111
  %v794 = vunpack.c.l.b16 %v112
  %v795 = vunpack.c.l.b16 %v113
  %v796 = vunpack.c.l.b16 %v114
  %v797 = vunpack.c.l.b16 %v115
  %v798 = vunpack.c.l.b16 %v116
  %v799 = vunpack.c.l.b16 %v117
  %v800 = vunpack.c.l.b16 %v118
  %v801 = vunpack.c.l.b16 %v119
  %v802 = vunpack.c.l.b16 %v120
  %v803 = vunpack.c.l.b16 %v121
  %v804 = vunpack.c.l.b16 %v122
  %v805 = vunpack.c.l.b16 %v123
  %v806 = vunpack.c.l.b16 %v124
  %v807 = vunpack.c.l.b16 %v125
  %v808 = vunpack.c.l.b16 %v126
  %v809 = vunpack.c.l.b16 %v127
  %v810 = vunpack.c.l.b16 %v128
  %v811 = vunpack.c.l.b16 %v129
  %v812 = vunpack.c.l.b16 %v130
  %v813 = vunpack.c.l.b16 %v131
  %v814 = vunpack.c.l.b16 %v132
  %v815 = vunpack.c.l.b16 %v133
  %v816 = vunpack.c.l.b16 %v134
  %v817 = vunpack.c.l.b16 %v135
  %v818 = vunpack.c.l.b16 %v136
  %v819 = vunpack.c.l.b16 %v137
  %v820 = vunpack.c.l.b16 %v138
  %v821 = vunpack.c.l.b16 %v139
  %v822 = vunpack.c.l.b16 %v140
  %v823 = vunpack.c.l.b16 %v141
  %v824 = vunpack.c.l.b16 %v142
  %v825 = vunpack.c.l.b16 %v143
  %v826 = vunpack.c.l.b16 %v144
  %v827 = vunpack.c.l.b16 %v145
  %v828 = vunpack.c.l.b16 %v146
  %v829 = vunpack.c.l.b16 %v147
  %v830 = vunpack.c.l.b16 %v148
  %v831 = vunpack.c.l.b16 %v149
  %v832 = vunpack.c.l.b16 %v150
  %v833 = vunpack.c.l.b16 %v151
  %v834 = vunpack.c.l.b16 %v152
  %v835 = vunpack.c.l.b16 %v153
  %v836 = vunpack.c.l.b16 %v154
  %v837 = vunpack.c.l.b16 %v155
  %v838 = vunpack.c.l.b16 %v156
  %v839 = vunpack.c.l.b16 %v157
  %v840 = vunpack.c.l.b16 %v158
  %v841 = vunpack.c.l.b16 %v159
  %v842 = vunpack.c.l.b16 %v160
  %v843 = vunpack.c.l.b16 %v161
  %v844 = vunpack.c.l.b16 %v162
  %v845 = vunpack.c.l.b16 %v163
  %v846 = vunpack.c.l.b16 %v164
  %v847 = vunpack.c.l.b16 %v165
  %v848 = vunpack.c.l.b16 %v166
  %v849 = vunpack.c.l.b16 %v167
  %v850 = vunpack.c.l.b16 %v168
  %v851 = vunpack.c.l.b16 %v169
  %v852 = vunpack.c.l.b16 %v170
  %v853 = vunpack.c.l.b16 %v171
  %v854 = vunpack.c.l.b16 %v172
  %v855 = vunpack.c.l.b16 %v173
  %v856 = vunpack.c.l.b16 %v174
  %v857 = vunpack.c.l.b16 %v175
  %v858 = vunpack.c.l.b16 %v176
  %v859 = vunpack.c.l.b16 %v177
  %v860 = vunpack.c.l.b16 %v178
  %v861 = vunpack.c.l.b16 %v179
  %v862 = vunpack.c.l.b16 %v180
  %v863 = vunpack.c.l.b16 %v181
  %v864 = vunpack.c.l.b16 %v182
  %v865 = vunpack.c.l.b16 %v183
  %v866 = vunpack.c.l.b16 %v184
  %v867 = vunpack.c.l.b16 %v185
  %v868 = vunpack.c.l.b16 %v186
  %v869 = vunpack.c.l.b16 %v187
  %v870 = vunpack.c.l.b16 %v188
  %v871 = vunpack.c.l.b16 %v189
  %v872 = vunpack.c.l.b16 %v190
  %v873 = vunpack.c.l.b16 %v191
  %v874 = vunpack.c.l.b16 %v192
  %v875 = vunpack.c.l.b16 %v193
  %v876 = vunpack.c.l.b16 %v194
  %v877 = vunpack.c.l.b16 %v195
  %v878 = vunpack.c.l.b16 %v196
  %v879 = vunpack.c.l.b16 %v197
  %v880 = vunpack.c.l.b16 %v198
  %v881 = vunpack.c.l.b16 %v199
  %v882 = vunpack.c.l.b16 %v200
  %v883 = vunpack.c.l.b16 %v201
  %v884 = vunpack.c.l.b16 %v202
  %v885 = vunpack.c.l.b16 %v203
  %v886 = vunpack.c.l.b16 %v204
  %v887 = vunpack.c.l.b16 %v205
  %v888 = vunpack.c.l.b16 %v206
  %v889 = vunpack.c.l.b16 %v207
  %v890 = vunpack.c.l.b16 %v208
  %v891 = vunpack.c.l.b16 %v209
  %v892 = vunpack.c.l.b16 %v210
  %v893 = vunpack.c.l.b16 %v211
  %v894 = vunpack.c.l.b16 %v212
  %v895 = vunpack.c.l.b16 %v213
  %v896 = vunpack.c.l.b16 %v214
  %v897 = vunpack.c.l.b16 %v215
  %v898 = vunpack.c.l.b16 %v216
  %v899 = vunpack.c.l.b16 %v217
  %v900 = vunpack.c.l.b16 %v218
  %v901 = vunpack.c.l.b16 %v219
  %v902 = vunpack.c.l.b16 %v220
  %v903 = vunpack.c.l.b16 %v221
  %v904 = vunpack.c.l.b16 %v222
  %v905 = vunpack.c.l.b16 %v223
  %v906 = vunpack.c.l.b16 %v224
  %v907 = vunpack.c.l.b16 %v225
  %v908 = vunpack.c.l.b16 %v226
  %v909 = vunpack.c.l.b16 %v227
  %v910 = vunpack.c.l.b16 %v228
  %v911 = vunpack.c.l.b16 %v229
  %v912 = vunpack.c.l.b16 %v230
  %v913 = vunpack.c.l.b16 %v231
  %v914 = vunpack.c.l.b16 %v232
  %v915 = vunpack.c.l.b16 %v233
  %v916 = vunpack.c.l.b16 %v234
  %v917 = vunpack.c.l.b16 %v235
  %v918 = vunpack.c.l.b16 %v236
  %v919 = vunpack.c.l.b16 %v237
  %v920 = vunpack.c.l.b16 %v238
  %v921 = vunpack.c.l.b16 %v239
  %v922 = vunpack.c.l.b16 %v240
  %v923 = vunpack.c.l.b16 %v241
  %v924 = vunpack.c.l.b16 %v242
  %v925 = vunpack.c.l.b16 %v243
  %v926 = vunpack.c.l.b16 %v244
  %v927 = vunpack.c.l.b16 %v245
  %v928 = vunpack.c.l.b16 %v246
  %v929 = vunpack.c.l.b16 %v247
  %v930 = vunpack.c.l.b16 %v248
  %v931 = vunpack.c.l.b16 %v249
  %v932 = vunpack.c.l.b16 %v250
  %v933 = vunpack.c.l.b16 %v251
  %v934 = vunpack.c.l.b16 %v252
  %v935 = vunpack.c.l.b16 %v253
  %v936 = vunpack.c.l.b16 %v254
  %v937 = vunpack.c.l.b16 %v255
  %v938 = vunpack.c.l.b16 %v256
  %v939 = vunpack.c.l.b16 %v257
  %v940 = vunpack.c.l.b16 %v258
  %v941 = vunpack.c.l.b16 %v259
  %v942 = vunpack.c.l.b16 %v260
  %v943 = vunpack.c.l.b16 %v261
  %v944 = vunpack.c.l.b16 %v262
  %v945 = vunpack.c.l.b16 %v263
  %v946 = vunpack.c.l.b16 %v264
  %v947 = vunpack.c.l.b16 %v265
  %v948 = vunpack.c.l.b16 %v266
  %v949 = vunpack.c.l.b16 %v267
  %v950 = vunpack.c.l.b16 %v268
  %v951 = vunpack.c.l.b16 %v269
  %v952 = vunpack.c.l.b16 %v270
  %v953 = vunpack.c.l.b16 %v271
  %v954 = vunpack.c.l.b16 %v272
  %v955 = vunpack.c.l.b16 %v273
  %v956 = vunpack.c.l.b16 %v274
  %v957 = vunpack.c.l.b16 %v275
  %v958 = vunpack.c.l.b16 %v276
  %v959 = vunpack.c.l.b16 %v277
  %v960 = vunpack.c.l.b16 %v278
  %v961 = vunpack.c.l.b16 %v279
  %v962 = vunpack.c.l.b16 %v280
  %v963 = vunpack.c.l.b16 %v281
  %v964 = vunpack.c.l.b16 %v282
  %v965 = vunpack.c.l.b16 %v283
  %v966 = vunpack.c.l.b16 %v284
  %v967 = vunpack.c.l.b16 %v285
  %v968 = vunpack.c.l.b16 %v286
  %v969 = vunpack.c.l.b16 %v287
  %v970 = vunpack.c.l.b16 %v288
  %v971 = vunpack.c.l.b16 %v289
  %v972 = vunpack.c.l.b16 %v290
  %v973 = vunpack.c.l.b16 %v291
  %v974 = vunpack.c.l.b16 %v292
  %v975 = vunpack.c.l.b16 %v293
  %v976 = vunpack.c.l.b16 %v294
  %v977 = vunpack.c.l.b16 %v295
  %v978 = vunpack.c.l.b16 %v296
  %v979 = vunpack.c.l.b16 %v297
  %v980 = vunpack.c.l.b16 %v298
  %v981 = vunpack.c.l.b16 %v299
  %v982 = vunpack.c.l.b16 %v300
  %v983 = vunpack.c.l.b16 %v301
  %v984 = vunpack.c.l.b16 %v302
  %v985 = vunpack.c.l.b16 %v303
  %v986 = vunpack.c.l.b16 %v304
  %v987 = vunpack.c.l.b16 %v305
  %v988 = vunpack.c.l.b16 %v306
  %v989 = vunpack.c.l.b16 %v307
  %v990 = vunpack.c.l.b16 %v308
  %v991 = vunpack.c.l.b16 %v309
  %v992 = vunpack.c.l.b16 %v310
  %v993 = vunpack.c.l.b16 %v311
  %v994 = vunpack.c.l.b16 %v312
  %v995 = vunpack.c.l.b16 %v313
  %v996 = vunpack.c.l.b16 %v314
  %v997 = vunpack.c.l.b16 %v315
  %v998 = vunpack.c.l.b16 %v316
  %v999 = vunpack.c.l.b16 %v317
  %v1000 = vunpack.c.l.b16 %v318
  %v1001 = vunpack.c.l.b16 %v319
  %v1002 = vunpack.c.l.b16 %v320
  %v1003 = vunpack.c.l.b16 %v321
  %v1004 = vunpack.c.l.b16 %v322
  %v1005 = vunpack.c.l.b16 %v323
  %v1006 = vunpack.c.l.b16 %v324
  %v1007 = vunpack.c.l.b16 %v325
  %v1008 = vunpack.c.l.b16 %v326
  %v1009 = vunpack.c.l.b16 %v327
  %v1010 = vunpack.c.l.b16 %v328
  %v1011 = vpack.c.b16 %v708, %v707
  %v1012 = vpack.c.b16 %v710, %v709
  %v1013 = vpack.c.b16 %v712, %v711
  %v1014 = vpack.c.b16 %v714, %v713
  %v1015 = vpack.c.b16 %v716, %v715
  %v1016 = vpack.c.b16 %v718, %v717
  %v1017 = vpack.c.b16 %v720, %v719
  %v1018 = vpack.c.b16 %v722, %v721
  %v1019 = vpack.c.b16 %v724, %v723
  %v1020 = vpack.c.b16 %v726, %v725
  %v1021 = vpack.c.b16 %v728, %v727
  %v1022 = vpack.c.b16 %v730, %v729
  %v1023 = vpack.c.b16 %v732, %v731
  %v1024 = vpack.c.b16 %v734, %v733
  %v1025 = vpack.c.b16 %v736, %v735
  %v1026 = vpack.c.b16 %v738, %v737
  %v1027 = vpack.c.b16 %v740, %v739
  %v1028 = vpack.c.b16 %v742, %v741
  %v1029 = vpack.c.b16 %v744, %v743
  %v1030 = vpack.c.b16 %v746, %v745
  %v1031 = vpack.c.b16 %v748, %v747
  %v1032 = vpack.c.b16 %v750, %v749
  %v1033 = vpack.c.b16 %v752, %v751
  %v1034 = vpack.c.b16 %v754, %v753
  %v1035 = vpack.c.b16 %v756, %v755
  %v1036 = vpack.c.b16 %v758, %v757
  %v1037 = vpack.c.b16 %v760, %v759
  %v1038 = vpack.c.b16 %v762, %v761
  %v1039 = vpack.c.b16 %v764, %v763
  %v1040 = vpack.c.b16 %v766, %v765
  %v1041 = vpack.c.b16 %v768, %v767
  %v1042 = vpack.c.b16 %v770, %v769
  %v1043 = vpack.c.b16 %v772, %v771
  %v1044 = vpack.c.b16 %v774, %v773
  %v1045 = vpack.c.b16 %v776, %v775
  %v1046 = vpack.c.b16 %v778, %v777
  %v1047 = vpack.c.b16 %v780, %v779
  %v1048 = vpack.c.b16 %v782, %v781
  %v1049 = vpack.c.b16 %v784, %v783
  %v1050 = vpack.c.b16 %v786, %v785
  %v1051 = vpack.c.b16 %v788, %v787
  %v1052 = vpack.c.b16 %v790, %v789
  %v1053 = vpack.c.b16 %v792, %v791
  %v1054 = vpack.c.b16 %v794, %v793
  %v1055 = vpack.c.b16 %v796, %v795
  %v1056 = vpack.c.b16 %v798, %v797
  %v1057 = vpack.c.b16 %v800, %v799
  %v1058 = vpack.c.b16 %v802, %v801
  %v1059 = vpack.c.b16 %v804, %v803
  %v1060 = vpack.c.b16 %v806, %v805
  %v1061 = vpack.c.b16 %v808, %v807
  %v1062 = vpack.c.b16 %v810, %v809
  %v1063 = vpack.c.b16 %v812, %v811
  %v1064 = vpack.c.b16 %v814, %v813
  %v1065 = vpack.c.b16 %v816, %v815
  %v1066 = vpack.c.b16 %v818, %v817
  %v1067 = vpack.c.b16 %v820, %v819
  %v1068 = vpack.c.b16 %v822, %v821
  %v1069 = vpack.c.b16 %v824, %v823
  %v1070 = vpack.c.b16 %v826, %v825
  %v1071 = vpack.c.b16 %v828, %v827
  %v1072 = vpack.c.b16 %v830, %v829
  %v1073 = vpack.c.b16 %v832, %v831
  %v1074 = vpack.c.b16 %v834, %v833
  %v1075 = vpack.c.b16 %v836, %v835
  %v1076 = vpack.c.b16 %v838, %v837
  %v1077 = vpack.c.b16 %v840, %v839
  %v1078 = vpack.c.b16 %v842, %v841
  %v1079 = vpack.c.b16 %v844, %v843
  %v1080 = vpack.c.b16 %v846, %v845
  %v1081 = vpack.c.b16 %v848, %v847
  %v1082 = vpack.c.b16 %v850, %v849
  %v1083 = vpack.c.b16 %v852, %v851
  %v1084 = vpack.c.b16 %v854, %v853
  %v1085 = vpack.c.b16 %v856, %v855
  %v1086 = vpack.c.b16 %v858, %v857
  %v1087 = vpack.c.b16 %v860, %v859
  %v1088 = vpack.c.b16 %v862, %v861
  %v1089 = vpack.c.b16 %v864, %v863
  %v1090 = vpack.c.b16 %v866, %v865
  %v1091 = vpack.c.b16 %v868, %v867
  %v1092 = vpack.c.b16 %v870, %v869
  %v1093 = vpack.c.b16 %v872, %v871
  %v1094 = vpack.c.b16 %v874, %v873
  %v1095 = vpack.c.b16 %v876, %v875
  %v1096 = vpack.c.b16 %v878, %v877
  %v1097 = vpack.c.b16 %v880, %v879
  %v1098 = vpack.c.b16 %v882, %v881
  %v1099 = vpack.c.b16 %v884, %v883
  %v1100 = vpack.c.b16 %v886, %v885
  %v1101 = vpack.c.b16 %v888, %v887
  %v1102 = vpack.c.b16 %v890, %v889
  %v1103 = vpack.c.b16 %v892, %v891
  %v1104 = vpack.c.b16 %v894, %v893
  %v1105 = vpack.c.b16 %v896, %v895
  %v1106 = vpack.c.b16 %v898, %v897
  %v1107 = vpack.c.b16 %v900, %v899
  %v1108 = vpack.c.b16 %v902, %v901
  %v1109 = vpack.c.b16 %v904, %v903
  %v1110 = vpack.c.b16 %v906, %v905
  %v1111 = vpack.c.b16 %v908, %v907
  %v1112 = vpack.c.b16 %v910, %v909
  %v1113 = vpack.c.b16 %v912, %v911
  %v1114 = vpack.c.b16 %v914, %v913
  %v1115 = vpack.c.b16 %v916, %v915
  %v1116 = vpack.c.b16 %v918, %v917
  %v1117 = vpack.c.b16 %v920, %v919
  %v1118 = vpack.c.b16 %v922, %v921
  %v1119 = vpack.c.b16 %v924, %v923
  %v1120 = vpack.c.b16 %v926, %v925
  %v1121 = vpack.c.b16 %v928, %v927
  %v1122 = vpack.c.b16 %v930, %v929
  %v1123 = vpack.c.b16 %v932, %v931
  %v1124 = vpack.c.b16 %v934, %v933
  %v1125 = vpack.c.b16 %v936, %v935
  %v1126 = vpack.c.b16 %v938, %v937
  %v1127 = vpack.c.b16 %v940, %v939
  %v1128 = vpack.c.b16 %v942, %v941
  %v1129 = vpack.c.b16 %v944, %v943
  %v1130 = vpack.c.b16 %v946, %v945
  %v1131 = vpack.c.b16 %v948, %v947
  %v1132 = vpack.c.b16 %v950, %v949
  %v1133 = vpack.c.b16 %v952, %v951
  %v1134 = vpack.c.b16 %v954, %v953
  %v1135 = vpack.c.b16 %v956, %v955
  %v1136 = vpack.c.b16 %v958, %v957
  %v1137 = vpack.c.b16 %v960, %v959
  %v1138 = vpack.c.b16 %v962, %v961
  %v1139 = vpack.c.b16 %v964, %v963
  %v1140 = vpack.c.b16 %v966, %v965
  %v1141 = vpack.c.b16 %v968, %v967
  %v1142 = vpack.c.b16 %v970, %v969
  %v1143 = vpack.c.b16 %v972, %v971
  %v1144 = vpack.c.b16 %v974, %v973
  %v1145 = vpack.c.b16 %v976, %v975
  %v1146 = vpack.c.b16 %v978, %v977
  %v1147 = vpack.c.b16 %v980, %v979
  %v1148 = vpack.c.b16 %v982, %v981
  %v1149 = vpack.c.b16 %v984, %v983
  %v1150 = vpack.c.b16 %v986, %v985
  %v1151 = vpack.c.b16 %v988, %v987
  %v1152 = vpack.c.b16 %v990, %v989
  %v1153 = vpack.c.b16 %v992, %v991
  %v1154 = vpack.c.b16 %v994, %v993
  %v1155 = vpack.c.b16 %v996, %v995
  %v1156 = vpack.c.b16 %v998, %v997
  %v1157 = vpack.c.b16 %v1000, %v999
  %v1158 = vpack.c.b16 %v1002, %v1001
  %v1159 = vpack.c.b16 %v1004, %v1003
  %v1160 = vpack.c.b16 %v1006, %v1005
  %v1161 = vpack.c.b16 %v1008, %v1007
  %v1162 = vpack.c.b16 %v1010, %v1009
  %1315 = vmatprep.subr.bf16.mxu0 0
  %1316 = vmatpush1.bf16.msra.mxu0 %v1018
  %1317 = vmatprep.subr.bf16.mxu0 0
  %1318 = vmatpush1.bf16.msra.mxu0 %v1017
  %1319 = vmatprep.subr.bf16.mxu0 0
  %1320 = vmatpush1.bf16.msra.mxu0 %v1016
  %1321 = vmatprep.subr.bf16.mxu0 0
  %1322 = vmatpush1.bf16.msra.mxu0 %v1015
  %1323 = vmatprep.subr.bf16.mxu0 0
  %1324 = vmatpush1.bf16.msra.mxu0 %v1014
  %1325 = vmatprep.subr.bf16.mxu0 0
  %1326 = vmatpush1.bf16.msra.mxu0 %v1013
  %1327 = vmatprep.subr.bf16.mxu0 0
  %1328 = vmatpush1.bf16.msra.mxu0 %v1012
  %1329 = vmatprep.subr.bf16.mxu0 0
  %1330 = vmatpush1.bf16.msra.mxu0 %v1011
  %1331 = vmatprep.subr.bf16.mxu0 0
  %1332 = vmatpush2.bf16.msra.mxu0 %v1026
  %1333 = vmatprep.subr.bf16.mxu0 0
  %1334 = vmatpush2.bf16.msra.mxu0 %v1025
  %1335 = vmatprep.subr.bf16.mxu0 0
  %1336 = vmatpush2.bf16.msra.mxu0 %v1024
  %1337 = vmatprep.subr.bf16.mxu0 0
  %1338 = vmatpush2.bf16.msra.mxu0 %v1023
  %1339 = vmatprep.subr.bf16.mxu0 0
  %1340 = vmatpush2.bf16.msra.mxu0 %v1022
  %1341 = vmatprep.subr.bf16.mxu0 0
  %1342 = vmatpush2.bf16.msra.mxu0 %v1021
  %1343 = vmatprep.subr.bf16.mxu0 0
  %1344 = vmatpush2.bf16.msra.mxu0 %v1020
  %1345 = vmatprep.subr.bf16.mxu0 0
  %1346 = vmatpush2.bf16.msra.mxu0 %v1019
  %1347 = vmatprep.mubr.bf16.mxu0 %v366
  %1348 = vmatmul.mubr.bf16.gmra.mxu0 %v365
  %v1349 = vpop.f32.mrf.mxu0
  %v1350 = vadd.f32 %v334, %v1349
  %v1351 = vpop.f32.mrf.mxu0
  %v1352 = vpop.f32.mrf.mxu0
  %v1353 = vpop.f32.mrf.mxu0
  %1354 = vdwg.mxu0
  %1355 = vmatprep.subr.bf16.mxu0 0
  %1356 = vmatpush1.bf16.msra.mxu0 %v1034
  %1357 = vmatprep.subr.bf16.mxu0 0
  %1358 = vmatpush1.bf16.msra.mxu0 %v1033
  %1359 = vmatprep.subr.bf16.mxu0 0
  %1360 = vmatpush1.bf16.msra.mxu0 %v1032
  %1361 = vmatprep.subr.bf16.mxu0 0
  %1362 = vmatpush1.bf16.msra.mxu0 %v1031
  %1363 = vmatprep.subr.bf16.mxu0 0
  %1364 = vmatpush1.bf16.msra.mxu0 %v1030
  %1365 = vmatprep.subr.bf16.mxu0 0
  %1366 = vmatpush1.bf16.msra.mxu0 %v1029
  %1367 = vmatprep.subr.bf16.mxu0 0
  %1368 = vmatpush1.bf16.msra.mxu0 %v1028
  %1369 = vmatprep.subr.bf16.mxu0 0
  %1370 = vmatpush1.bf16.msra.mxu0 %v1027
  %1371 = vmatprep.subr.bf16.mxu0 0
  %1372 = vmatpush2.bf16.msra.mxu0 %v1042
  %1373 = vmatprep.subr.bf16.mxu0 0
  %1374 = vmatpush2.bf16.msra.mxu0 %v1041
  %1375 = vmatprep.subr.bf16.mxu0 0
  %1376 = vmatpush2.bf16.msra.mxu0 %v1040
  %1377 = vmatprep.subr.bf16.mxu0 0
  %1378 = vmatpush2.bf16.msra.mxu0 %v1039
  %1379 = vmatprep.subr.bf16.mxu0 0
  %1380 = vmatpush2.bf16.msra.mxu0 %v1038
  %1381 = vmatprep.subr.bf16.mxu0 0
  %1382 = vmatpush2.bf16.msra.mxu0 %v1037
  %1383 = vmatprep.subr.bf16.mxu0 0
  %1384 = vmatpush2.bf16.msra.mxu0 %v1036
  %1385 = vmatprep.subr.bf16.mxu0 0
  %1386 = vmatpush2.bf16.msra.mxu0 %v1035
  %1387 = vmatprep.mubr.bf16.mxu0 %v368
  %1388 = vmatmul.mubr.bf16.gmra.mxu0 %v367
  %v1389 = vpop.f32.mrf.mxu0
  %v1390 = vadd.f32 %v1350, %v1389
  %v1391 = vpop.f32.mrf.mxu0
  %v1392 = vpop.f32.mrf.mxu0
  %v1393 = vpop.f32.mrf.mxu0
  %1394 = vdwg.mxu0
  %1395 = vmatprep.subr.bf16.mxu0 0
  %1396 = vmatpush1.bf16.msra.mxu0 %v1050
  %1397 = vmatprep.subr.bf16.mxu0 0
  %1398 = vmatpush1.bf16.msra.mxu0 %v1049
  %1399 = vmatprep.subr.bf16.mxu0 0
  %1400 = vmatpush1.bf16.msra.mxu0 %v1048
  %1401 = vmatprep.subr.bf16.mxu0 0
  %1402 = vmatpush1.bf16.msra.mxu0 %v1047
  %1403 = vmatprep.subr.bf16.mxu0 0
  %1404 = vmatpush1.bf16.msra.mxu0 %v1046
  %1405 = vmatprep.subr.bf16.mxu0 0
  %1406 = vmatpush1.bf16.msra.mxu0 %v1045
  %1407 = vmatprep.subr.bf16.mxu0 0
  %1408 = vmatpush1.bf16.msra.mxu0 %v1044
  %1409 = vmatprep.subr.bf16.mxu0 0
  %1410 = vmatpush1.bf16.msra.mxu0 %v1043
  %1411 = vmatprep.subr.bf16.mxu0 0
  %1412 = vmatpush2.bf16.msra.mxu0 %v1058
  %1413 = vmatprep.subr.bf16.mxu0 0
  %1414 = vmatpush2.bf16.msra.mxu0 %v1057
  %1415 = vmatprep.subr.bf16.mxu0 0
  %1416 = vmatpush2.bf16.msra.mxu0 %v1056
  %1417 = vmatprep.subr.bf16.mxu0 0
  %1418 = vmatpush2.bf16.msra.mxu0 %v1055
  %1419 = vmatprep.subr.bf16.mxu0 0
  %1420 = vmatpush2.bf16.msra.mxu0 %v1054
  %1421 = vmatprep.subr.bf16.mxu0 0
  %1422 = vmatpush2.bf16.msra.mxu0 %v1053
  %1423 = vmatprep.subr.bf16.mxu0 0
  %1424 = vmatpush2.bf16.msra.mxu0 %v1052
  %1425 = vmatprep.subr.bf16.mxu0 0
  %1426 = vmatpush2.bf16.msra.mxu0 %v1051
  %1427 = vmatprep.mubr.bf16.mxu0 %v370
  %1428 = vmatmul.mubr.bf16.gmra.mxu0 %v369
  %v1429 = vpop.f32.mrf.mxu0
  %v1430 = vadd.f32 %v1390, %v1429
  %v1431 = vpop.f32.mrf.mxu0
  %v1432 = vpop.f32.mrf.mxu0
  %v1433 = vpop.f32.mrf.mxu0
  %1434 = vdwg.mxu0
  %1435 = vmatprep.subr.bf16.mxu0 0
  %1436 = vmatpush1.bf16.msra.mxu0 %v1066
  %1437 = vmatprep.subr.bf16.mxu0 0
  %1438 = vmatpush1.bf16.msra.mxu0 %v1065
  %1439 = vmatprep.subr.bf16.mxu0 0
  %1440 = vmatpush1.bf16.msra.mxu0 %v1064
  %1441 = vmatprep.subr.bf16.mxu0 0
  %1442 = vmatpush1.bf16.msra.mxu0 %v1063
  %1443 = vmatprep.subr.bf16.mxu0 0
  %1444 = vmatpush1.bf16.msra.mxu0 %v1062
  %1445 = vmatprep.subr.bf16.mxu0 0
  %1446 = vmatpush1.bf16.msra.mxu0 %v1061
  %1447 = vmatprep.subr.bf16.mxu0 0
  %1448 = vmatpush1.bf16.msra.mxu0 %v1060
  %1449 = vmatprep.subr.bf16.mxu0 0
  %1450 = vmatpush1.bf16.msra.mxu0 %v1059
  %1451 = vmatprep.subr.bf16.mxu0 0
  %1452 = vmatpush2.bf16.msra.mxu0 %v1074
  %1453 = vmatprep.subr.bf16.mxu0 0
  %1454 = vmatpush2.bf16.msra.mxu0 %v1073
  %1455 = vmatprep.subr.bf16.mxu0 0
  %1456 = vmatpush2.bf16.msra.mxu0 %v1072
  %1457 = vmatprep.subr.bf16.mxu0 0
  %1458 = vmatpush2.bf16.msra.mxu0 %v1071
  %1459 = vmatprep.subr.bf16.mxu0 0
  %1460 = vmatpush2.bf16.msra.mxu0 %v1070
  %1461 = vmatprep.subr.bf16.mxu0 0
  %1462 = vmatpush2.bf16.msra.mxu0 %v1069
  %1463 = vmatprep.subr.bf16.mxu0 0
  %1464 = vmatpush2.bf16.msra.mxu0 %v1068
  %1465 = vmatprep.subr.bf16.mxu0 0
  %1466 = vmatpush2.bf16.msra.mxu0 %v1067
  %1467 = vmatprep.mubr.bf16.mxu0 %v372
  %1468 = vmatmul.mubr.bf16.gmra.mxu0 %v371
  %v1469 = vpop.f32.mrf.mxu0
  %v1470 = vadd.f32 %v1430, %v1469
  %v1471 = vpop.f32.mrf.mxu0
  %v1472 = vpop.f32.mrf.mxu0
  %v1473 = vpop.f32.mrf.mxu0
  %1474 = vdwg.mxu0
  %1475 = vmatprep.subr.bf16.mxu0 0
  %1476 = vmatpush1.bf16.msra.mxu0 %v1082
  %1477 = vmatprep.subr.bf16.mxu0 0
  %1478 = vmatpush1.bf16.msra.mxu0 %v1081
  %1479 = vmatprep.subr.bf16.mxu0 0
  %1480 = vmatpush1.bf16.msra.mxu0 %v1080
  %1481 = vmatprep.subr.bf16.mxu0 0
  %1482 = vmatpush1.bf16.msra.mxu0 %v1079
  %1483 = vmatprep.subr.bf16.mxu0 0
  %1484 = vmatpush1.bf16.msra.mxu0 %v1078
  %1485 = vmatprep.subr.bf16.mxu0 0
  %1486 = vmatpush1.bf16.msra.mxu0 %v1077
  %1487 = vmatprep.subr.bf16.mxu0 0
  %1488 = vmatpush1.bf16.msra.mxu0 %v1076
  %1489 = vmatprep.subr.bf16.mxu0 0
  %1490 = vmatpush1.bf16.msra.mxu0 %v1075
  %1491 = vmatprep.subr.bf16.mxu0 0
  %1492 = vmatpush2.bf16.msra.mxu0 %v1090
  %1493 = vmatprep.subr.bf16.mxu0 0
  %1494 = vmatpush2.bf16.msra.mxu0 %v1089
  %1495 = vmatprep.subr.bf16.mxu0 0
  %1496 = vmatpush2.bf16.msra.mxu0 %v1088
  %1497 = vmatprep.subr.bf16.mxu0 0
  %1498 = vmatpush2.bf16.msra.mxu0 %v1087
  %1499 = vmatprep.subr.bf16.mxu0 0
  %1500 = vmatpush2.bf16.msra.mxu0 %v1086
  %1501 = vmatprep.subr.bf16.mxu0 0
  %1502 = vmatpush2.bf16.msra.mxu0 %v1085
  %1503 = vmatprep.subr.bf16.mxu0 0
  %1504 = vmatpush2.bf16.msra.mxu0 %v1084
  %1505 = vmatprep.subr.bf16.mxu0 0
  %1506 = vmatpush2.bf16.msra.mxu0 %v1083
  %1507 = vmatprep.mubr.bf16.mxu0 %v374
  %1508 = vmatmul.mubr.bf16.gmra.mxu0 %v373
  %v1509 = vpop.f32.mrf.mxu0
  %v1510 = vadd.f32 %v1470, %v1509
  %v1511 = vpop.f32.mrf.mxu0
  %v1512 = vpop.f32.mrf.mxu0
  %v1513 = vpop.f32.mrf.mxu0
  %1514 = vdwg.mxu0
  %1515 = vmatprep.subr.bf16.mxu0 0
  %1516 = vmatpush1.bf16.msra.mxu0 %v1098
  %1517 = vmatprep.subr.bf16.mxu0 0
  %1518 = vmatpush1.bf16.msra.mxu0 %v1097
  %1519 = vmatprep.subr.bf16.mxu0 0
  %1520 = vmatpush1.bf16.msra.mxu0 %v1096
  %1521 = vmatprep.subr.bf16.mxu0 0
  %1522 = vmatpush1.bf16.msra.mxu0 %v1095
  %1523 = vmatprep.subr.bf16.mxu0 0
  %1524 = vmatpush1.bf16.msra.mxu0 %v1094
  %1525 = vmatprep.subr.bf16.mxu0 0
  %1526 = vmatpush1.bf16.msra.mxu0 %v1093
  %1527 = vmatprep.subr.bf16.mxu0 0
  %1528 = vmatpush1.bf16.msra.mxu0 %v1092
  %1529 = vmatprep.subr.bf16.mxu0 0
  %1530 = vmatpush1.bf16.msra.mxu0 %v1091
  %1531 = vmatprep.subr.bf16.mxu0 0
  %1532 = vmatpush2.bf16.msra.mxu0 %v1106
  %1533 = vmatprep.subr.bf16.mxu0 0
  %1534 = vmatpush2.bf16.msra.mxu0 %v1105
  %1535 = vmatprep.subr.bf16.mxu0 0
  %1536 = vmatpush2.bf16.msra.mxu0 %v1104
  %1537 = vmatprep.subr.bf16.mxu0 0
  %1538 = vmatpush2.bf16.msra.mxu0 %v1103
  %1539 = vmatprep.subr.bf16.mxu0 0
  %1540 = vmatpush2.bf16.msra.mxu0 %v1102
  %1541 = vmatprep.subr.bf16.mxu0 0
  %1542 = vmatpush2.bf16.msra.mxu0 %v1101
  %1543 = vmatprep.subr.bf16.mxu0 0
  %1544 = vmatpush2.bf16.msra.mxu0 %v1100
  %1545 = vmatprep.subr.bf16.mxu0 0
  %1546 = vmatpush2.bf16.msra.mxu0 %v1099
  %1547 = vmatprep.mubr.bf16.mxu0 %v376
  %1548 = vmatmul.mubr.bf16.gmra.mxu0 %v375
  %v1549 = vpop.f32.mrf.mxu0
  %v1550 = vadd.f32 %v1510, %v1549
  %v1551 = vpop.f32.mrf.mxu0
  %v1552 = vpop.f32.mrf.mxu0
  %v1553 = vpop.f32.mrf.mxu0
  %1554 = vdwg.mxu0
  %1555 = vmatprep.subr.bf16.mxu0 0
  %1556 = vmatpush1.bf16.msra.mxu0 %v1114
  %1557 = vmatprep.subr.bf16.mxu0 0
  %1558 = vmatpush1.bf16.msra.mxu0 %v1113
  %1559 = vmatprep.subr.bf16.mxu0 0
  %1560 = vmatpush1.bf16.msra.mxu0 %v1112
  %1561 = vmatprep.subr.bf16.mxu0 0
  %1562 = vmatpush1.bf16.msra.mxu0 %v1111
  %1563 = vmatprep.subr.bf16.mxu0 0
  %1564 = vmatpush1.bf16.msra.mxu0 %v1110
  %1565 = vmatprep.subr.bf16.mxu0 0
  %1566 = vmatpush1.bf16.msra.mxu0 %v1109
  %1567 = vmatprep.subr.bf16.mxu0 0
  %1568 = vmatpush1.bf16.msra.mxu0 %v1108
  %1569 = vmatprep.subr.bf16.mxu0 0
  %1570 = vmatpush1.bf16.msra.mxu0 %v1107
  %1571 = vmatprep.subr.bf16.mxu0 0
  %1572 = vmatpush2.bf16.msra.mxu0 %v1122
  %1573 = vmatprep.subr.bf16.mxu0 0
  %1574 = vmatpush2.bf16.msra.mxu0 %v1121
  %1575 = vmatprep.subr.bf16.mxu0 0
  %1576 = vmatpush2.bf16.msra.mxu0 %v1120
  %1577 = vmatprep.subr.bf16.mxu0 0
  %1578 = vmatpush2.bf16.msra.mxu0 %v1119
  %1579 = vmatprep.subr.bf16.mxu0 0
  %1580 = vmatpush2.bf16.msra.mxu0 %v1118
  %1581 = vmatprep.subr.bf16.mxu0 0
  %1582 = vmatpush2.bf16.msra.mxu0 %v1117
  %1583 = vmatprep.subr.bf16.mxu0 0
  %1584 = vmatpush2.bf16.msra.mxu0 %v1116
  %1585 = vmatprep.subr.bf16.mxu0 0
  %1586 = vmatpush2.bf16.msra.mxu0 %v1115
  %1587 = vmatprep.mubr.bf16.mxu0 %v378
  %1588 = vmatmul.mubr.bf16.gmra.mxu0 %v377
  %v1589 = vpop.f32.mrf.mxu0
  %v1590 = vadd.f32 %v1550, %v1589
  %v1591 = vpop.f32.mrf.mxu0
  %v1592 = vpop.f32.mrf.mxu0
  %v1593 = vpop.f32.mrf.mxu0
  %1594 = vdwg.mxu0
  %1595 = vmatprep.subr.bf16.mxu0 0
  %1596 = vmatpush1.bf16.msra.mxu0 %v1130
  %1597 = vmatprep.subr.bf16.mxu0 0
  %1598 = vmatpush1.bf16.msra.mxu0 %v1129
  %1599 = vmatprep.subr.bf16.mxu0 0
  %1600 = vmatpush1.bf16.msra.mxu0 %v1128
  %1601 = vmatprep.subr.bf16.mxu0 0
  %1602 = vmatpush1.bf16.msra.mxu0 %v1127
  %1603 = vmatprep.subr.bf16.mxu0 0
  %1604 = vmatpush1.bf16.msra.mxu0 %v1126
  %1605 = vmatprep.subr.bf16.mxu0 0
  %1606 = vmatpush1.bf16.msra.mxu0 %v1125
  %1607 = vmatprep.subr.bf16.mxu0 0
  %1608 = vmatpush1.bf16.msra.mxu0 %v1124
  %1609 = vmatprep.subr.bf16.mxu0 0
  %1610 = vmatpush1.bf16.msra.mxu0 %v1123
  %1611 = vmatprep.subr.bf16.mxu0 0
  %1612 = vmatpush2.bf16.msra.mxu0 %v1138
  %1613 = vmatprep.subr.bf16.mxu0 0
  %1614 = vmatpush2.bf16.msra.mxu0 %v1137
  %1615 = vmatprep.subr.bf16.mxu0 0
  %1616 = vmatpush2.bf16.msra.mxu0 %v1136
  %1617 = vmatprep.subr.bf16.mxu0 0
  %1618 = vmatpush2.bf16.msra.mxu0 %v1135
  %1619 = vmatprep.subr.bf16.mxu0 0
  %1620 = vmatpush2.bf16.msra.mxu0 %v1134
  %1621 = vmatprep.subr.bf16.mxu0 0
  %1622 = vmatpush2.bf16.msra.mxu0 %v1133
  %1623 = vmatprep.subr.bf16.mxu0 0
  %1624 = vmatpush2.bf16.msra.mxu0 %v1132
  %1625 = vmatprep.subr.bf16.mxu0 0
  %1626 = vmatpush2.bf16.msra.mxu0 %v1131
  %1627 = vmatprep.mubr.bf16.mxu0 %v380
  %1628 = vmatmul.mubr.bf16.gmra.mxu0 %v379
  %v1629 = vpop.f32.mrf.mxu0
  %v1630 = vadd.f32 %v1590, %v1629
  %v1631 = vpop.f32.mrf.mxu0
  %v1632 = vpop.f32.mrf.mxu0
  %v1633 = vpop.f32.mrf.mxu0
  %1634 = vdwg.mxu0
  %1635 = vmatprep.subr.bf16.mxu0 0
  %1636 = vmatpush1.bf16.msra.mxu0 %v1146
  %1637 = vmatprep.subr.bf16.mxu0 0
  %1638 = vmatpush1.bf16.msra.mxu0 %v1145
  %1639 = vmatprep.subr.bf16.mxu0 0
  %1640 = vmatpush1.bf16.msra.mxu0 %v1144
  %1641 = vmatprep.subr.bf16.mxu0 0
  %1642 = vmatpush1.bf16.msra.mxu0 %v1143
  %1643 = vmatprep.subr.bf16.mxu0 0
  %1644 = vmatpush1.bf16.msra.mxu0 %v1142
  %1645 = vmatprep.subr.bf16.mxu0 0
  %1646 = vmatpush1.bf16.msra.mxu0 %v1141
  %1647 = vmatprep.subr.bf16.mxu0 0
  %1648 = vmatpush1.bf16.msra.mxu0 %v1140
  %1649 = vmatprep.subr.bf16.mxu0 0
  %1650 = vmatpush1.bf16.msra.mxu0 %v1139
  %1651 = vmatprep.subr.bf16.mxu0 0
  %1652 = vmatpush2.bf16.msra.mxu0 %v1154
  %1653 = vmatprep.subr.bf16.mxu0 0
  %1654 = vmatpush2.bf16.msra.mxu0 %v1153
  %1655 = vmatprep.subr.bf16.mxu0 0
  %1656 = vmatpush2.bf16.msra.mxu0 %v1152
  %1657 = vmatprep.subr.bf16.mxu0 0
  %1658 = vmatpush2.bf16.msra.mxu0 %v1151
  %1659 = vmatprep.subr.bf16.mxu0 0
  %1660 = vmatpush2.bf16.msra.mxu0 %v1150
  %1661 = vmatprep.subr.bf16.mxu0 0
  %1662 = vmatpush2.bf16.msra.mxu0 %v1149
  %1663 = vmatprep.subr.bf16.mxu0 0
  %1664 = vmatpush2.bf16.msra.mxu0 %v1148
  %1665 = vmatprep.subr.bf16.mxu0 0
  %1666 = vmatpush2.bf16.msra.mxu0 %v1147
  %1667 = vmatprep.mubr.bf16.mxu0 %v382
  %1668 = vmatmul.mubr.bf16.gmra.mxu0 %v381
  %v1669 = vpop.f32.mrf.mxu0
  %v1670 = vadd.f32 %v1630, %v1669
  %v1671 = vpop.f32.mrf.mxu0
  %v1672 = vpop.f32.mrf.mxu0
  %v1673 = vpop.f32.mrf.mxu0
  %1674 = vdwg.mxu0
  %1675 = vmatprep.subr.bf16.mxu0 0
  %1676 = vmatpush1.bf16.msra.mxu0 %v1162
  %1677 = vmatprep.subr.bf16.mxu0 0
  %1678 = vmatpush1.bf16.msra.mxu0 %v1161
  %1679 = vmatprep.subr.bf16.mxu0 0
  %1680 = vmatpush1.bf16.msra.mxu0 %v1160
  %1681 = vmatprep.subr.bf16.mxu0 0
  %1682 = vmatpush1.bf16.msra.mxu0 %v1159
  %1683 = vmatprep.subr.bf16.mxu0 0
  %1684 = vmatpush1.bf16.msra.mxu0 %v1158
  %1685 = vmatprep.subr.bf16.mxu0 0
  %1686 = vmatpush1.bf16.msra.mxu0 %v1157
  %1687 = vmatprep.subr.bf16.mxu0 0
  %1688 = vmatpush1.bf16.msra.mxu0 %v1156
  %1689 = vmatprep.subr.bf16.mxu0 0
  %1690 = vmatpush1.bf16.msra.mxu0 %v1155
  %1691 = vmatprep.subr.bf16.mxu0 0
  %1692 = vmatpush2.bf16.msra.mxu0 0
  %1693 = vmatprep.subr.bf16.mxu0 0
  %1694 = vmatpush2.bf16.msra.mxu0 0
  %1695 = vmatprep.subr.bf16.mxu0 0
  %1696 = vmatpush2.bf16.msra.mxu0 0
  %1697 = vmatprep.subr.bf16.mxu0 0
  %1698 = vmatpush2.bf16.msra.mxu0 0
  %1699 = vmatprep.subr.bf16.mxu0 0
  %1700 = vmatpush2.bf16.msra.mxu0 0
  %1701 = vmatprep.subr.bf16.mxu0 0
  %1702 = vmatpush2.bf16.msra.mxu0 0
  %1703 = vmatprep.subr.bf16.mxu0 0
  %1704 = vmatpush2.bf16.msra.mxu0 0
  %1705 = vmatprep.subr.bf16.mxu0 0
  %1706 = vmatpush2.bf16.msra.mxu0 0
  %1707 = vmatprep.mubr.bf16.mxu0 0
  %1708 = vmatmul.mubr.bf16.gmra.mxu0 %v383
  %v1709 = vpop.f32.mrf.mxu0
  %v1710 = vadd.f32 %v1670, %v1709
  %v1711 = vpop.f32.mrf.mxu0
  %v1712 = vpop.f32.mrf.mxu0
  %v1713 = vpop.f32.mrf.mxu0
  %1714 = vdwg.mxu0
  %v1715 = vmax.f32 %v1710, 0.0
  %1716 = vst [vmem:[%s3] sm:$0xff] %v1715
  // Predicated region
  $region14: #{_lambda_.9} parent=0 // pred_check
    _
  $region15: #{_lambda_.9} parent=0 // pred_check_branch
    %1718 = sbr.rel (0) target = $region17
  $region16: #{_lambda_.9} parent=0 // pred_region
    _
  $region17: #{_lambda_.9} parent=0 // pred_fallthru
    _
  // Predicated region
  $region18: #{_lambda_.9} parent=0 // pred_check
    _
  $region19: #{_lambda_.9} parent=0 // pred_check_branch
    %1720 = sbr.rel (0) target = $region21
  $region20: #{_lambda_.9} parent=0 // pred_region
    _
  $region21: #{_lambda_.9} parent=0 // pred_fallthru
    _

</llo_original>
